<compile_context>
chip_gen: v7x
topology: tpu7x:2x2x1
jax: 0.10.0
libtpu: 0.0.40
codegen_flags: <defaults>
</compile_context>

<pallas_src>
import jax
import jax.numpy as jnp
from jax import lax
from jax.experimental import pallas as pl
from jax.experimental.pallas import tpu as pltpu

jax.config.update("jax_default_matmul_precision", "highest")

_HIDDEN = 128
_LANE = 128
_SUBLANE = 8
_MAX_TILE_M = 512          # rows per grid step (multiple of 8)


def _round_up(x, m):
    return ((x + m - 1) // m) * m


def _ngram_kernel(ids_ref, m1_ref, b1_ref, w2_ref, b2_ref, out_ref):
    # ids: (tile_m, C) int32            -- token ids for this tile of contexts
    # m1 : (C*V_pad, H) f32             -- fused emb_table @ W1 per context slot
    # b1 : (1, H), w2: (H, V_pad), b2: (1, V_pad)  (b2[V:] = -1e30 vocab mask)
    # out: (tile_m, V_pad) f32
    tile_m, n_ctx = ids_ref.shape
    v_pad = m1_ref.shape[0] // n_ctx
    hidden = b1_ref.shape[-1]

    ids = ids_ref[...]
    vocab_iota = lax.broadcasted_iota(jnp.int32, (tile_m, v_pad), 1)

    # Fused embedding-gather + Linear1: one-hot(ids[:, c]) @ M[c] exactly
    # selects rows emb_table[id] @ W1_c.  n_ctx is tiny and static.
    acc = jnp.zeros((tile_m, hidden), jnp.float32)
    for c in range(n_ctx):
        one_hot = (vocab_iota == ids[:, c:c + 1]).astype(jnp.float32)
        acc = acc + jnp.dot(one_hot, m1_ref[pl.ds(c * v_pad, v_pad), :],
                            preferred_element_type=jnp.float32)

    h = jnp.maximum(acc + b1_ref[...], 0.0)                       # ReLU
    # Linear2; padded vocab columns get exactly -1e30 via the baked-in bias.
    logits = jnp.dot(h, w2_ref[...],
                     preferred_element_type=jnp.float32) + b2_ref[...]

    # Numerically stable log_softmax along the vocab axis.
    m = jnp.max(logits, axis=-1, keepdims=True)
    shifted = logits - m
    lse = jnp.log(jnp.sum(jnp.exp(shifted), axis=-1, keepdims=True))
    out_ref[...] = (shifted - lse).astype(out_ref.dtype)


def prepare_params(emb_table, w1, b1, w2, b2):
    """Call-invariant weight fusion / padding.  Build ONCE and reuse."""
    emb_table = jnp.asarray(emb_table, jnp.float32)
    V, E = emb_table.shape
    K, H = w1.shape
    C = K // E
    assert C * E == K, "context_size * embedding_dim must equal w1 rows"
    V_out = w2.shape[1]
    assert V_out == V
    V_pad = _round_up(V, _LANE)                       # 97 -> 128 (lane-dense)

    emb_p = jnp.zeros((V_pad, E), jnp.float32).at[:V].set(emb_table)
    w1_f = jnp.asarray(w1, jnp.float32).reshape(C, E, H)
    # M[c, v, :] = emb_table[v] @ W1[c*E:(c+1)*E, :]   (exact row-gather target)
    m1 = jnp.einsum("ve,ceh->cvh", emb_p, w1_f,
                    precision=lax.Precision.HIGHEST).reshape(C * V_pad, H)

    b1_p = jnp.asarray(b1, jnp.float32).reshape(1, H)
    w2_p = jnp.zeros((H, V_pad), jnp.float32).at[:, :V].set(
        jnp.asarray(w2, jnp.float32))
    # Vocab mask baked into the bias: padded w2 columns are 0, so padded
    # logits are exactly -1e30 and vanish in the softmax normalizer.
    b2_p = jnp.full((1, V_pad), -1e30, jnp.float32).at[0, :V].set(
        jnp.asarray(b2, jnp.float32))

    return {"m1": m1, "b1": b1_p, "w2": w2_p, "b2": b2_p,
            "n_ctx": C, "vocab": V, "v_pad": V_pad, "hidden": H}


def ngram_apply(params, inputs):
    """inputs: (C,) or (B, C) int32 token ids -> (B, V) log-probs (B=1 for (C,))."""
    inputs = jnp.asarray(inputs, jnp.int32)
    if inputs.ndim == 1:
        inputs = inputs[None, :]                      # (1, C) -> batch of one
    B, C = inputs.shape
    assert C == params["n_ctx"]
    H, V, V_pad = params["hidden"], params["vocab"], params["v_pad"]

    tile_m = min(_MAX_TILE_M, _round_up(B, _SUBLANE))
    B_pad = _round_up(B, tile_m)
    ids = inputs if B_pad == B else (
        jnp.zeros((B_pad, C), jnp.int32).at[:B].set(inputs))

    grid = (B_pad // tile_m,)
    cost = pl.CostEstimate(
        flops=2 * B_pad * (C * V_pad * H + H * V_pad),
        transcendentals=B_pad * (V_pad + 1),
        bytes_accessed=4 * (B_pad * C + C * V_pad * H + H
                            + H * V_pad + V_pad + B_pad * V_pad),
    )

    out = pl.pallas_call(
        _ngram_kernel,
        out_shape=jax.ShapeDtypeStruct((B_pad, V_pad), jnp.float32),
        grid=grid,
        in_specs=[
            pl.BlockSpec((tile_m, C), lambda i: (i, 0)),        # ids stream
            pl.BlockSpec((C * V_pad, H), lambda i: (0, 0)),     # VMEM-resident
            pl.BlockSpec((1, H), lambda i: (0, 0)),
            pl.BlockSpec((H, V_pad), lambda i: (0, 0)),
            pl.BlockSpec((1, V_pad), lambda i: (0, 0)),
        ],
        out_specs=pl.BlockSpec((tile_m, V_pad), lambda i: (i, 0)),
        compiler_params=pltpu.CompilerParams(
            # Shards across the 2 TCs on v7x only when the grid has >= 2
            # steps (i.e. B > tile_m); small batches keep a single step.
            dimension_semantics=("parallel",)),
        cost_estimate=cost,
    )(ids, params["m1"], params["b1"], params["w2"], params["b2"])

    return out[:B, :V]


def ngram_forward(inputs, emb_table, w1, b1, w2, b2):
    """Convenience wrapper matching the module: returns (log_probs, embeddings).
    Prefer prepare_params() once + ngram_apply() per call in real use."""
    params = prepare_params(emb_table, w1, b1, w2, b2)
    return ngram_apply(params, inputs), emb_table


def _reference(inputs, emb_table, w1, b1, w2, b2):
    inputs = jnp.asarray(inputs, jnp.int32)
    if inputs.ndim == 1:
        inputs = inputs[None, :]
    B = inputs.shape[0]
    embeds = emb_table[inputs].reshape(B, -1)
    h = jnp.maximum(embeds @ w1 + b1, 0.0)
    logits = h @ w2 + b2
    return jax.nn.log_softmax(logits, axis=-1)


if __name__ == "__main__":
    # Small shapes consistent with the module's __init__.
    vocab_size, embedding_dim, context_size = 97, 10, 2
    hidden = _HIDDEN
    batch = 64

    key = jax.random.PRNGKey(0)
    k_emb, k_w1, k_b1, k_w2, k_b2, k_in = jax.random.split(key, 6)

    emb_table = jax.random.normal(k_emb, (vocab_size, embedding_dim), jnp.float32)
    w1 = jax.random.normal(k_w1, (context_size * embedding_dim, hidden), jnp.float32) * 0.1
    b1 = jax.random.normal(k_b1, (hidden,), jnp.float32) * 0.1
    w2 = jax.random.normal(k_w2, (hidden, vocab_size), jnp.float32) * 0.1
    b2 = jax.random.normal(k_b2, (vocab_size,), jnp.float32) * 0.1

    # Hoisted, call-invariant parameter prep (done once).
    params = prepare_params(emb_table, w1, b1, w2, b2)

    # Batched contexts: (B, C) token ids -> (B, V) log-probs in one launch.
    inputs_batched = jax.random.randint(
        k_in, (batch, context_size), 0, vocab_size, jnp.int32)

    log_probs = ngram_apply(params, inputs_batched)
    jax.block_until_ready(log_probs)

    ref = _reference(inputs_batched, emb_table, w1, b1, w2, b2)
    assert log_probs.shape == (batch, vocab_size)
    assert jnp.allclose(log_probs, ref, atol=5e-5, rtol=5e-5), "batched mismatch vs reference"
    assert jnp.allclose(jnp.sum(jnp.exp(log_probs), axis=1), 1.0, atol=1e-5)

    # Single-context path matches the PyTorch module's forward(inputs) -> (1, V).
    lp1, emb_out = ngram_forward(inputs_batched[0], emb_table, w1, b1, w2, b2)
    jax.block_until_ready(lp1)
    assert lp1.shape == (1, vocab_size)
    assert emb_out.shape == (vocab_size, embedding_dim)
    assert jnp.allclose(lp1, ref[0:1], atol=5e-5, rtol=5e-5), "single-context mismatch"

    print("KERNEL_OK")
</pallas_src>

<mosaic_0001>
module attributes {stable_mosaic.version = 11 : i64} {
  func.func @_ngram_kernel(%arg0: i32, %arg1: memref<64x2xi32, #tpu.memory_space<vmem>>, %arg2: memref<256x128xf32, #tpu.memory_space<vmem>>, %arg3: memref<1x128xf32, #tpu.memory_space<vmem>>, %arg4: memref<128x128xf32, #tpu.memory_space<vmem>>, %arg5: memref<1x128xf32, #tpu.memory_space<vmem>>, %arg6: memref<64x128xf32, #tpu.memory_space<vmem>>) attributes {dimension_semantics = [#tpu.dimension_semantics<parallel>], iteration_bounds = array<i64: 1>, scalar_prefetch = 0 : i64, scratch_operands = 0 : i64, tpu.core_type = #tpu.core_type<tc>, window_params = [{transform_indices = @transform_0, window_bounds = array<i64: 64, 2>}, {pipeline_mode = #tpu.pipeline_mode<synchronous>, transform_indices = @transform_1, window_bounds = array<i64: 256, 128>}, {pipeline_mode = #tpu.pipeline_mode<synchronous>, transform_indices = @transform_2, window_bounds = array<i64: 1, 128>}, {pipeline_mode = #tpu.pipeline_mode<synchronous>, transform_indices = @transform_3, window_bounds = array<i64: 128, 128>}, {pipeline_mode = #tpu.pipeline_mode<synchronous>, transform_indices = @transform_4, window_bounds = array<i64: 1, 128>}, {transform_indices = @transform_5, window_bounds = array<i64: 64, 128>}]} {
    %c0 = arith.constant 0 : index
    %c0_0 = arith.constant 0 : index
    %0 = vector.load %arg1[%c0, %c0_0] : memref<64x2xi32, #tpu.memory_space<vmem>>, vector<64x2xi32>
    %1 = tpu.iota {dimensions = array<i32: 1>} : vector<64x128xi32>
    %cst = arith.constant 0.000000e+00 : f32
    %2 = vector.broadcast %cst : f32 to vector<64x128xf32>
    %3 = vector.extract_strided_slice %0 {offsets = [0, 0], sizes = [64, 1], strides = [1, 1]} : vector<64x2xi32> to vector<64x1xi32>
    %4 = vector.broadcast %3 : vector<64x1xi32> to vector<64x128xi32>
    %5 = arith.cmpi eq, %1, %4 : vector<64x128xi32>
    %6 = arith.extui %5 : vector<64x128xi1> to vector<64x128xi32>
    %7 = arith.sitofp %6 : vector<64x128xi32> to vector<64x128xf32>
    %c0_1 = arith.constant 0 : index
    %c0_2 = arith.constant 0 : index
    %8 = vector.load %arg2[%c0_1, %c0_2] : memref<256x128xf32, #tpu.memory_space<vmem>>, vector<128x128xf32>
    %cst_3 = arith.constant dense<0.000000e+00> : vector<64x128xf32>
    %9 = tpu.matmul %7, %8, %cst_3 {dimension_numbers = #tpu.dot_dimension_numbers<[1], [0], [0], [1], [0, 0, 1, 1], [], []>, precision = #tpu.contract_precision<fp32>} : vector<64x128xf32>, vector<128x128xf32>, vector<64x128xf32> -> vector<64x128xf32>
    %10 = arith.addf %2, %9 : vector<64x128xf32>
    %11 = vector.extract_strided_slice %0 {offsets = [0, 1], sizes = [64, 1], strides = [1, 1]} : vector<64x2xi32> to vector<64x1xi32>
    %12 = vector.broadcast %11 : vector<64x1xi32> to vector<64x128xi32>
    %13 = arith.cmpi eq, %1, %12 : vector<64x128xi32>
    %14 = arith.extui %13 : vector<64x128xi1> to vector<64x128xi32>
    %15 = arith.sitofp %14 : vector<64x128xi32> to vector<64x128xf32>
    %c128 = arith.constant 128 : index
    %c0_4 = arith.constant 0 : index
    %16 = vector.load %arg2[%c128, %c0_4] : memref<256x128xf32, #tpu.memory_space<vmem>>, vector<128x128xf32>
    %cst_5 = arith.constant dense<0.000000e+00> : vector<64x128xf32>
    %17 = tpu.matmul %15, %16, %cst_5 {dimension_numbers = #tpu.dot_dimension_numbers<[1], [0], [0], [1], [0, 0, 1, 1], [], []>, precision = #tpu.contract_precision<fp32>} : vector<64x128xf32>, vector<128x128xf32>, vector<64x128xf32> -> vector<64x128xf32>
    %18 = arith.addf %10, %17 : vector<64x128xf32>
    %c0_6 = arith.constant 0 : index
    %c0_7 = arith.constant 0 : index
    %19 = vector.load %arg3[%c0_6, %c0_7] : memref<1x128xf32, #tpu.memory_space<vmem>>, vector<1x128xf32>
    %20 = vector.broadcast %19 : vector<1x128xf32> to vector<64x128xf32>
    %21 = arith.addf %18, %20 : vector<64x128xf32>
    %cst_8 = arith.constant 0.000000e+00 : f32
    %22 = vector.broadcast %cst_8 : f32 to vector<64x128xf32>
    %23 = arith.maximumf %21, %22 : vector<64x128xf32>
    %c0_9 = arith.constant 0 : index
    %c0_10 = arith.constant 0 : index
    %24 = vector.load %arg4[%c0_9, %c0_10] : memref<128x128xf32, #tpu.memory_space<vmem>>, vector<128x128xf32>
    %cst_11 = arith.constant dense<0.000000e+00> : vector<64x128xf32>
    %25 = tpu.matmul %23, %24, %cst_11 {dimension_numbers = #tpu.dot_dimension_numbers<[1], [0], [0], [1], [0, 0, 1, 1], [], []>, precision = #tpu.contract_precision<fp32>} : vector<64x128xf32>, vector<128x128xf32>, vector<64x128xf32> -> vector<64x128xf32>
    %c0_12 = arith.constant 0 : index
    %c0_13 = arith.constant 0 : index
    %26 = vector.load %arg5[%c0_12, %c0_13] : memref<1x128xf32, #tpu.memory_space<vmem>>, vector<1x128xf32>
    %27 = vector.broadcast %26 : vector<1x128xf32> to vector<64x128xf32>
    %28 = arith.addf %25, %27 : vector<64x128xf32>
    %cst_14 = arith.constant dense<0xFF800000> : vector<64xf32>
    %29 = vector.multi_reduction <maximumf>, %28, %cst_14 [1] : vector<64x128xf32> to vector<64xf32>
    %30 = vector.shape_cast %29 : vector<64xf32> to vector<64x1xf32>
    %31 = vector.broadcast %30 : vector<64x1xf32> to vector<64x128xf32>
    %32 = arith.subf %28, %31 : vector<64x128xf32>
    %33 = math.exp %32 : vector<64x128xf32>
    %cst_15 = arith.constant dense<0.000000e+00> : vector<64xf32>
    %34 = vector.multi_reduction <add>, %33, %cst_15 [1] : vector<64x128xf32> to vector<64xf32>
    %35 = vector.shape_cast %34 : vector<64xf32> to vector<64x1xf32>
    %36 = math.log %35 : vector<64x1xf32>
    %37 = vector.broadcast %36 : vector<64x1xf32> to vector<64x128xf32>
    %38 = arith.subf %32, %37 : vector<64x128xf32>
    %c0_16 = arith.constant 0 : index
    %c0_17 = arith.constant 0 : index
    %39 = vector.load %arg6[%c0_16, %c0_17] : memref<64x128xf32, #tpu.memory_space<vmem>>, vector<64x128xf32>
    tpu.vector_store %arg6[%c0_16, %c0_17], %38 {strides = array<i32>} : memref<64x128xf32, #tpu.memory_space<vmem>>, vector<64x128xf32>,
    return
  }
  func.func @transform_0(%arg0: i32) -> (i32, i32) {
    %c0_i32 = arith.constant 0 : i32
    %c0_i32_0 = arith.constant 0 : i32
    return %arg0, %c0_i32 : i32, i32
  }
  func.func @transform_1(%arg0: i32) -> (i32, i32) {
    %c0_i32 = arith.constant 0 : i32
    %c0_i32_0 = arith.constant 0 : i32
    %c0_i32_1 = arith.constant 0 : i32
    return %c0_i32, %c0_i32_0 : i32, i32
  }
  func.func @transform_2(%arg0: i32) -> (i32, i32) {
    %c0_i32 = arith.constant 0 : i32
    %c0_i32_0 = arith.constant 0 : i32
    %c0_i32_1 = arith.constant 0 : i32
    return %c0_i32, %c0_i32_0 : i32, i32
  }
  func.func @transform_3(%arg0: i32) -> (i32, i32) {
    %c0_i32 = arith.constant 0 : i32
    %c0_i32_0 = arith.constant 0 : i32
    %c0_i32_1 = arith.constant 0 : i32
    return %c0_i32, %c0_i32_0 : i32, i32
  }
  func.func @transform_4(%arg0: i32) -> (i32, i32) {
    %c0_i32 = arith.constant 0 : i32
    %c0_i32_0 = arith.constant 0 : i32
    %c0_i32_1 = arith.constant 0 : i32
    return %c0_i32, %c0_i32_0 : i32, i32
  }
  func.func @transform_5(%arg0: i32) -> (i32, i32) {
    %c0_i32 = arith.constant 0 : i32
    %c0_i32_0 = arith.constant 0 : i32
    return %arg0, %c0_i32 : i32, i32
  }
}

</mosaic_0001>

<llo_original>
// kernel: tpu_custom_call.1
$region0: #{tpu_custom_call.1}
  #allocation0 [shape = 'u32[]', space=smem, size = 0x4, offset = 0x4, fixed_abs, tag = 'smem constant byte address 0x4 - core index']
  #allocation1 [shape = 'u32[144,128]{1,0:T(1,128)}', space=vmem, size = 0x12000, scoped, tag = 'internal scratch']
  %s0 = inlined_call_operand.vmem [shape: s32[64,2], index: 0, kind: input, shape index: {}]
  %s1 = inlined_call_operand.hbm [shape: f32[256,128], index: 1, kind: input, shape index: {}]
  %s2 = inlined_call_operand.vmem [shape: f32[1,128], index: 2, kind: input, shape index: {}]
  %s3 = inlined_call_operand.hbm [shape: f32[128,128], index: 3, kind: input, shape index: {}]
  %s4 = inlined_call_operand.vmem [shape: f32[1,128], index: 4, kind: input, shape index: {}]
  %s5 = inlined_call_operand.hbm [shape: f32[64,128], index: 5, kind: output, shape index: {}]
  %s6 = sld [smem:[#allocation0]]
  $region38: #{tpu_custom_call.1} parent=0
    _
  %s8 = ssub.s32 1, %s6
  %s9 = scalar_select 0, %s8, %s6
  $region1: #{tpu_custom_call.1} parent=0
    #allocation2 [shape = 'u8[131072]{0}', space=vmem, size = 0x20000, scoped, tag = 'input window, operand 1, single buffered']
    #allocation3 [shape = 's32[1]{0}', space=sflag, size = 0x4, scoped, tag = 'scoped memory for tpu_custom_call.1']
    #allocation4 [shape = 's32[1]{0}', space=sflag, size = 0x4, scoped, tag = 'scoped memory for tpu_custom_call.1']
    #allocation5 [shape = 'u8[65536]{0}', space=vmem, size = 0x10000, scoped, tag = 'input window, operand 3, single buffered']
    #allocation6 [shape = 's32[1]{0}', space=sflag, size = 0x4, scoped, tag = 'scoped memory for tpu_custom_call.1']
    #allocation7 [shape = 'u8[32768]{0}', space=vmem, size = 0x8000, scoped, tag = 'output window, operand 0, single buffered']
    %10 = vsyncpa [#allocation3], 0
    %11 = vsyncpa [#allocation6], 0
    %12 = vsyncpa [#allocation4], 0
    // Predicated region
    $region2: #{tpu_custom_call.1} parent=1 // pred_check
      _
    $region3: #{tpu_custom_call.1} parent=1 // pred_check_branch
      %14 = sbr.rel (0) target = $region5
    $region4: #{tpu_custom_call.1} parent=1 // pred_region
      _
    $region5: #{tpu_custom_call.1} parent=1 // pred_fallthru
      _
    // Predicated region
    $region6: #{tpu_custom_call.1} parent=1 // pred_check
      _
    $region7: #{tpu_custom_call.1} parent=1 // pred_check_branch
      %16 = sbr.rel (0) target = $region9
    $region8: #{tpu_custom_call.1} parent=1 // pred_region
      %s18 = ssub.s32 4096, 4096
      %19 = vsyncadd [#allocation3], %s18
      %s20 = sshll.u32 [#allocation2], 4
      %s21 = int_to_ptr.vmem [resolvable:$true] %s20
      %26 = dma.hbm_to_vmem [thread:$0]  %s1, 4096, %s21, [#allocation3], 128, 128, 8
    $region9: #{tpu_custom_call.1} parent=1 // pred_fallthru
      _
    // Predicated region
    $region10: #{tpu_custom_call.1} parent=1 // pred_check
      _
    $region11: #{tpu_custom_call.1} parent=1 // pred_check_branch
      %28 = sbr.rel (0) target = $region13
    $region12: #{tpu_custom_call.1} parent=1 // pred_region
      _
    $region13: #{tpu_custom_call.1} parent=1 // pred_fallthru
      _
    // Predicated region
    $region14: #{tpu_custom_call.1} parent=1 // pred_check
      _
    $region15: #{tpu_custom_call.1} parent=1 // pred_check_branch
      %30 = sbr.rel (0) target = $region17
    $region16: #{tpu_custom_call.1} parent=1 // pred_region
      %s32 = ssub.s32 2048, 2048
      %33 = vsyncadd [#allocation6], %s32
      %s34 = sshll.u32 [#allocation5], 4
      %s35 = int_to_ptr.vmem [resolvable:$true] %s34
      %40 = dma.hbm_to_vmem [thread:$0]  %s3, 2048, %s35, [#allocation6], 128, 128, 8
    $region17: #{tpu_custom_call.1} parent=1 // pred_fallthru
      _
    // Predicated region
    $region18: #{tpu_custom_call.1} parent=1 // pred_check
      _
    $region19: #{tpu_custom_call.1} parent=1 // pred_check_branch
      %42 = sbr.rel (0) target = $region21
    $region20: #{tpu_custom_call.1} parent=1 // pred_region
      _
    $region21: #{tpu_custom_call.1} parent=1 // pred_fallthru
      _
    // Predicated region
    $region22: #{tpu_custom_call.1} parent=1 // pred_check
      _
    $region23: #{tpu_custom_call.1} parent=1 // pred_check_branch
      %44 = sbr.rel (0) target = $region25
    $region24: #{tpu_custom_call.1} parent=1 // pred_region
      %45 = dma.done [#allocation3], 4096
    $region25: #{tpu_custom_call.1} parent=1 // pred_fallthru
      _
    // Predicated region
    $region26: #{tpu_custom_call.1} parent=1 // pred_check
      _
    $region27: #{tpu_custom_call.1} parent=1 // pred_check_branch
      %47 = sbr.rel (0) target = $region29
    $region28: #{tpu_custom_call.1} parent=1 // pred_region
      %48 = dma.done [#allocation6], 2048
    $region29: #{tpu_custom_call.1} parent=1 // pred_fallthru
      _
    %v49 = vld [vmem:[%s0] sm:$0xff]
    %v50 = vld [vmem:[%s0 + $0x8] sm:$0xff]
    %v51 = vld [vmem:[%s0 + $0x10] sm:$0xff]
    %v52 = vld [vmem:[%s0 + $0x18] sm:$0xff]
    %v53 = vld [vmem:[%s0 + $0x20] sm:$0xff]
    %v54 = vld [vmem:[%s0 + $0x28] sm:$0xff]
    %v55 = vld [vmem:[%s0 + $0x30] sm:$0xff]
    %v56 = vld [vmem:[%s0 + $0x38] sm:$0xff]
    %v57 = vlaneseq
    %v58 = vand.u32 %v57, 127
    %59 = vset.pattern.permute.xlu0 0
    %60 = vperm.xlu0 %59, %v49
    %v61 = vpop.permute.xlu0 %60
    %62 = vset.pattern.permute.xlu0 0
    %63 = vperm.xlu0 %62, %v50
    %v64 = vpop.permute.xlu0 %63
    %65 = vset.pattern.permute.xlu0 0
    %66 = vperm.xlu0 %65, %v51
    %v67 = vpop.permute.xlu0 %66
    %68 = vset.pattern.permute.xlu0 0
    %69 = vperm.xlu0 %68, %v52
    %v70 = vpop.permute.xlu0 %69
    %71 = vset.pattern.permute.xlu0 0
    %72 = vperm.xlu0 %71, %v53
    %v73 = vpop.permute.xlu0 %72
    %74 = vset.pattern.permute.xlu0 0
    %75 = vperm.xlu0 %74, %v54
    %v76 = vpop.permute.xlu0 %75
    %77 = vset.pattern.permute.xlu0 0
    %78 = vperm.xlu0 %77, %v55
    %v79 = vpop.permute.xlu0 %78
    %80 = vset.pattern.permute.xlu0 0
    %81 = vperm.xlu0 %80, %v56
    %v82 = vpop.permute.xlu0 %81
    %vm83 = vcmp.eq.s32.totalorder %v58, %v61
    %vm84 = vcmp.eq.s32.totalorder %v58, %v64
    %vm85 = vcmp.eq.s32.totalorder %v58, %v67
    %vm86 = vcmp.eq.s32.totalorder %v58, %v70
    %vm87 = vcmp.eq.s32.totalorder %v58, %v73
    %vm88 = vcmp.eq.s32.totalorder %v58, %v76
    %vm89 = vcmp.eq.s32.totalorder %v58, %v79
    %vm90 = vcmp.eq.s32.totalorder %v58, %v82
    %v91 = vsel %vm83, 1, 0
    %v92 = vsel %vm84, 1, 0
    %v93 = vsel %vm85, 1, 0
    %v94 = vsel %vm86, 1, 0
    %v95 = vsel %vm87, 1, 0
    %v96 = vsel %vm88, 1, 0
    %v97 = vsel %vm89, 1, 0
    %v98 = vsel %vm90, 1, 0
    %v99 = vcvt.s32.f32 %v91
    %v100 = vcvt.s32.f32 %v92
    %v101 = vcvt.s32.f32 %v93
    %v102 = vcvt.s32.f32 %v94
    %v103 = vcvt.s32.f32 %v95
    %v104 = vcvt.s32.f32 %v96
    %v105 = vcvt.s32.f32 %v97
    %v106 = vcvt.s32.f32 %v98
    %v107 = vld [vmem:[#allocation2] sm:$0xff]
    %v108 = vld [vmem:[#allocation2 + $0x8] sm:$0xff]
    %v109 = vld [vmem:[#allocation2 + $0x10] sm:$0xff]
    %v110 = vld [vmem:[#allocation2 + $0x18] sm:$0xff]
    %v111 = vld [vmem:[#allocation2 + $0x20] sm:$0xff]
    %v112 = vld [vmem:[#allocation2 + $0x28] sm:$0xff]
    %v113 = vld [vmem:[#allocation2 + $0x30] sm:$0xff]
    %v114 = vld [vmem:[#allocation2 + $0x38] sm:$0xff]
    %v115 = vld [vmem:[#allocation2 + $0x40] sm:$0xff]
    %v116 = vld [vmem:[#allocation2 + $0x48] sm:$0xff]
    %v117 = vld [vmem:[#allocation2 + $0x50] sm:$0xff]
    %v118 = vld [vmem:[#allocation2 + $0x58] sm:$0xff]
    %v119 = vld [vmem:[#allocation2 + $0x60] sm:$0xff]
    %v120 = vld [vmem:[#allocation2 + $0x68] sm:$0xff]
    %v121 = vld [vmem:[#allocation2 + $0x70] sm:$0xff]
    %v122 = vld [vmem:[#allocation2 + $0x78] sm:$0xff]
    %123 = vset.pattern.permute.xlu0 1
    %124 = vperm.xlu0 %123, %v49
    %v125 = vpop.permute.xlu0 %124
    %126 = vset.pattern.permute.xlu0 1
    %127 = vperm.xlu0 %126, %v50
    %v128 = vpop.permute.xlu0 %127
    %129 = vset.pattern.permute.xlu0 1
    %130 = vperm.xlu0 %129, %v51
    %v131 = vpop.permute.xlu0 %130
    %132 = vset.pattern.permute.xlu0 1
    %133 = vperm.xlu0 %132, %v52
    %v134 = vpop.permute.xlu0 %133
    %135 = vset.pattern.permute.xlu0 1
    %136 = vperm.xlu0 %135, %v53
    %v137 = vpop.permute.xlu0 %136
    %138 = vset.pattern.permute.xlu0 1
    %139 = vperm.xlu0 %138, %v54
    %v140 = vpop.permute.xlu0 %139
    %141 = vset.pattern.permute.xlu0 1
    %142 = vperm.xlu0 %141, %v55
    %v143 = vpop.permute.xlu0 %142
    %144 = vset.pattern.permute.xlu0 1
    %145 = vperm.xlu0 %144, %v56
    %v146 = vpop.permute.xlu0 %145
    %vm147 = vcmp.eq.s32.totalorder %v58, %v125
    %vm148 = vcmp.eq.s32.totalorder %v58, %v128
    %vm149 = vcmp.eq.s32.totalorder %v58, %v131
    %vm150 = vcmp.eq.s32.totalorder %v58, %v134
    %vm151 = vcmp.eq.s32.totalorder %v58, %v137
    %vm152 = vcmp.eq.s32.totalorder %v58, %v140
    %vm153 = vcmp.eq.s32.totalorder %v58, %v143
    %vm154 = vcmp.eq.s32.totalorder %v58, %v146
    %v155 = vsel %vm147, 1, 0
    %v156 = vsel %vm148, 1, 0
    %v157 = vsel %vm149, 1, 0
    %v158 = vsel %vm150, 1, 0
    %v159 = vsel %vm151, 1, 0
    %v160 = vsel %vm152, 1, 0
    %v161 = vsel %vm153, 1, 0
    %v162 = vsel %vm154, 1, 0
    %v163 = vcvt.s32.f32 %v155
    %v164 = vcvt.s32.f32 %v156
    %v165 = vcvt.s32.f32 %v157
    %v166 = vcvt.s32.f32 %v158
    %v167 = vcvt.s32.f32 %v159
    %v168 = vcvt.s32.f32 %v160
    %v169 = vcvt.s32.f32 %v161
    %v170 = vcvt.s32.f32 %v162
    %v171 = vld [vmem:[#allocation2 + $0x80] sm:$0xff]
    %v172 = vld [vmem:[#allocation2 + $0x88] sm:$0xff]
    %v173 = vld [vmem:[#allocation2 + $0x90] sm:$0xff]
    %v174 = vld [vmem:[#allocation2 + $0x98] sm:$0xff]
    %v175 = vld [vmem:[#allocation2 + $0xa0] sm:$0xff]
    %v176 = vld [vmem:[#allocation2 + $0xa8] sm:$0xff]
    %v177 = vld [vmem:[#allocation2 + $0xb0] sm:$0xff]
    %v178 = vld [vmem:[#allocation2 + $0xb8] sm:$0xff]
    %v179 = vld [vmem:[#allocation2 + $0xc0] sm:$0xff]
    %v180 = vld [vmem:[#allocation2 + $0xc8] sm:$0xff]
    %v181 = vld [vmem:[#allocation2 + $0xd0] sm:$0xff]
    %v182 = vld [vmem:[#allocation2 + $0xd8] sm:$0xff]
    %v183 = vld [vmem:[#allocation2 + $0xe0] sm:$0xff]
    %v184 = vld [vmem:[#allocation2 + $0xe8] sm:$0xff]
    %v185 = vld [vmem:[#allocation2 + $0xf0] sm:$0xff]
    %v186 = vld [vmem:[#allocation2 + $0xf8] sm:$0xff]
    %187 = vmatprep.subr.mxu0 0.0
    %v188 = vand.u32 %v171, 4294901760
    %189 = vmatpush1.msra.mxu0 %v188
    %190 = vmatprep.subr.mxu0 0.0
    %v191 = vand.u32 %v172, 4294901760
    %192 = vmatpush1.msra.mxu0 %v191
    %193 = vmatprep.subr.mxu0 0.0
    %v194 = vand.u32 %v173, 4294901760
    %195 = vmatpush1.msra.mxu0 %v194
    %196 = vmatprep.subr.mxu0 0.0
    %v197 = vand.u32 %v174, 4294901760
    %198 = vmatpush1.msra.mxu0 %v197
    %199 = vmatprep.subr.mxu0 0.0
    %v200 = vand.u32 %v175, 4294901760
    %201 = vmatpush1.msra.mxu0 %v200
    %202 = vmatprep.subr.mxu0 0.0
    %v203 = vand.u32 %v176, 4294901760
    %204 = vmatpush1.msra.mxu0 %v203
    %205 = vmatprep.subr.mxu0 0.0
    %v206 = vand.u32 %v177, 4294901760
    %207 = vmatpush1.msra.mxu0 %v206
    %208 = vmatprep.subr.mxu0 0.0
    %v209 = vand.u32 %v178, 4294901760
    %210 = vmatpush1.msra.mxu0 %v209
    %211 = vmatprep.subr.mxu0 0.0
    %v212 = vand.u32 %v179, 4294901760
    %213 = vmatpush1.msra.mxu0 %v212
    %214 = vmatprep.subr.mxu0 0.0
    %v215 = vand.u32 %v180, 4294901760
    %216 = vmatpush1.msra.mxu0 %v215
    %217 = vmatprep.subr.mxu0 0.0
    %v218 = vand.u32 %v181, 4294901760
    %219 = vmatpush1.msra.mxu0 %v218
    %220 = vmatprep.subr.mxu0 0.0
    %v221 = vand.u32 %v182, 4294901760
    %222 = vmatpush1.msra.mxu0 %v221
    %223 = vmatprep.subr.mxu0 0.0
    %v224 = vand.u32 %v183, 4294901760
    %225 = vmatpush1.msra.mxu0 %v224
    %226 = vmatprep.subr.mxu0 0.0
    %v227 = vand.u32 %v184, 4294901760
    %228 = vmatpush1.msra.mxu0 %v227
    %229 = vmatprep.subr.mxu0 0.0
    %v230 = vand.u32 %v185, 4294901760
    %231 = vmatpush1.msra.mxu0 %v230
    %232 = vmatprep.subr.mxu0 0.0
    %v233 = vand.u32 %v186, 4294901760
    %234 = vmatpush1.msra.mxu0 %v233
    %235 = vmatprep.subr.mxu0 0.0
    %236 = vmatpush1.msra.mxu0 0.0
    %237 = vmatprep.subr.mxu0 0.0
    %238 = vmatpush1.msra.mxu0 0.0
    %239 = vmatprep.subr.mxu0 0.0
    %240 = vmatpush1.msra.mxu0 0.0
    %241 = vmatprep.subr.mxu0 0.0
    %242 = vmatpush1.msra.mxu0 0.0
    %243 = vmatprep.subr.mxu0 0.0
    %244 = vmatpush1.msra.mxu0 0.0
    %245 = vmatprep.subr.mxu0 0.0
    %246 = vmatpush1.msra.mxu0 0.0
    %247 = vmatprep.subr.mxu0 0.0
    %248 = vmatpush1.msra.mxu0 0.0
    %249 = vmatprep.subr.mxu0 0.0
    %250 = vmatpush1.msra.mxu0 0.0
    %251 = vmatprep.subr.mxu0 0.0
    %252 = vmatpush1.msra.mxu0 0.0
    %253 = vmatprep.subr.mxu0 0.0
    %254 = vmatpush1.msra.mxu0 0.0
    %255 = vmatprep.subr.mxu0 0.0
    %256 = vmatpush1.msra.mxu0 0.0
    %257 = vmatprep.subr.mxu0 0.0
    %258 = vmatpush1.msra.mxu0 0.0
    %259 = vmatprep.subr.mxu0 0.0
    %260 = vmatpush1.msra.mxu0 0.0
    %261 = vmatprep.subr.mxu0 0.0
    %262 = vmatpush1.msra.mxu0 0.0
    %263 = vmatprep.subr.mxu0 0.0
    %264 = vmatpush1.msra.mxu0 0.0
    %265 = vmatprep.subr.mxu0 0.0
    %266 = vmatpush1.msra.mxu0 0.0
    %267 = vmatprep.mubr.f32.mxu0 0.0
    %v268 = vand.u32 %v163, 4294901760
    %v269 = vsub.f32 %v163, %v268
    %v270 = vand.u32 %v269, 4294901760
    %v271 = vsub.f32 %v269, %v270
    %v272 = vand.u32 %v271, 4294901760
    %273 = vmatmul.mubr.f32.gmra.mrb[0].mxu0 %v272
    %v274 = vpop.f32.mrb[0].mxu0
    %v275 = vadd.f32 0.0, %v274
    %v276 = vpop.f32.mrb[0].mxu0
    %277 = vmatprep.mubr.f32.mxu0 0.0
    %v278 = vand.u32 %v164, 4294901760
    %v279 = vsub.f32 %v164, %v278
    %v280 = vand.u32 %v279, 4294901760
    %v281 = vsub.f32 %v279, %v280
    %v282 = vand.u32 %v281, 4294901760
    %283 = vmatmul.mubr.f32.gmra.mrb[0].mxu0 %v282
    %v284 = vpop.f32.mrb[0].mxu0
    %v285 = vadd.f32 0.0, %v284
    %v286 = vpop.f32.mrb[0].mxu0
    %287 = vmatprep.mubr.f32.mxu0 0.0
    %v288 = vand.u32 %v165, 4294901760
    %v289 = vsub.f32 %v165, %v288
    %v290 = vand.u32 %v289, 4294901760
    %v291 = vsub.f32 %v289, %v290
    %v292 = vand.u32 %v291, 4294901760
    %293 = vmatmul.mubr.f32.gmra.mrb[0].mxu0 %v292
    %v294 = vpop.f32.mrb[0].mxu0
    %v295 = vadd.f32 0.0, %v294
    %v296 = vpop.f32.mrb[0].mxu0
    %297 = vmatprep.mubr.f32.mxu0 0.0
    %v298 = vand.u32 %v166, 4294901760
    %v299 = vsub.f32 %v166, %v298
    %v300 = vand.u32 %v299, 4294901760
    %v301 = vsub.f32 %v299, %v300
    %v302 = vand.u32 %v301, 4294901760
    %303 = vmatmul.mubr.f32.gmra.mrb[0].mxu0 %v302
    %v304 = vpop.f32.mrb[0].mxu0
    %v305 = vadd.f32 0.0, %v304
    %v306 = vpop.f32.mrb[0].mxu0
    %307 = vmatprep.mubr.f32.mxu0 0.0
    %v308 = vand.u32 %v167, 4294901760
    %v309 = vsub.f32 %v167, %v308
    %v310 = vand.u32 %v309, 4294901760
    %v311 = vsub.f32 %v309, %v310
    %v312 = vand.u32 %v311, 4294901760
    %313 = vmatmul.mubr.f32.gmra.mrb[0].mxu0 %v312
    %v314 = vpop.f32.mrb[0].mxu0
    %v315 = vadd.f32 0.0, %v314
    %v316 = vpop.f32.mrb[0].mxu0
    %317 = vmatprep.mubr.f32.mxu0 0.0
    %v318 = vand.u32 %v168, 4294901760
    %v319 = vsub.f32 %v168, %v318
    %v320 = vand.u32 %v319, 4294901760
    %v321 = vsub.f32 %v319, %v320
    %v322 = vand.u32 %v321, 4294901760
    %323 = vmatmul.mubr.f32.gmra.mrb[0].mxu0 %v322
    %v324 = vpop.f32.mrb[0].mxu0
    %v325 = vadd.f32 0.0, %v324
    %v326 = vpop.f32.mrb[0].mxu0
    %327 = vmatprep.mubr.f32.mxu0 0.0
    %v328 = vand.u32 %v169, 4294901760
    %v329 = vsub.f32 %v169, %v328
    %v330 = vand.u32 %v329, 4294901760
    %v331 = vsub.f32 %v329, %v330
    %v332 = vand.u32 %v331, 4294901760
    %333 = vmatmul.mubr.f32.gmra.mrb[0].mxu0 %v332
    %v334 = vpop.f32.mrb[0].mxu0
    %v335 = vadd.f32 0.0, %v334
    %v336 = vpop.f32.mrb[0].mxu0
    %337 = vmatprep.mubr.f32.mxu0 0.0
    %v338 = vand.u32 %v170, 4294901760
    %v339 = vsub.f32 %v170, %v338
    %v340 = vand.u32 %v339, 4294901760
    %v341 = vsub.f32 %v339, %v340
    %v342 = vand.u32 %v341, 4294901760
    %343 = vmatmul.mubr.f32.gmra.mrb[0].mxu0 %v342
    %v344 = vpop.f32.mrb[0].mxu0
    %v345 = vadd.f32 0.0, %v344
    %v346 = vpop.f32.mrb[0].mxu0
    %347 = vdwg.mxu0
    %348 = vmatprep.subr.mxu0 0.0
    %v349 = vand.u32 %v171, 4294901760
    %v350 = vsub.f32 %v171, %v349
    %v351 = vand.u32 %v350, 4294901760
    %v352 = vsub.f32 %v350, %v351
    %v353 = vand.u32 %v352, 4294901760
    %354 = vmatpush1.msra.mxu0 %v353
    %355 = vmatprep.subr.mxu0 0.0
    %v356 = vand.u32 %v172, 4294901760
    %v357 = vsub.f32 %v172, %v356
    %v358 = vand.u32 %v357, 4294901760
    %v359 = vsub.f32 %v357, %v358
    %v360 = vand.u32 %v359, 4294901760
    %361 = vmatpush1.msra.mxu0 %v360
    %362 = vmatprep.subr.mxu0 0.0
    %v363 = vand.u32 %v173, 4294901760
    %v364 = vsub.f32 %v173, %v363
    %v365 = vand.u32 %v364, 4294901760
    %v366 = vsub.f32 %v364, %v365
    %v367 = vand.u32 %v366, 4294901760
    %368 = vmatpush1.msra.mxu0 %v367
    %369 = vmatprep.subr.mxu0 0.0
    %v370 = vand.u32 %v174, 4294901760
    %v371 = vsub.f32 %v174, %v370
    %v372 = vand.u32 %v371, 4294901760
    %v373 = vsub.f32 %v371, %v372
    %v374 = vand.u32 %v373, 4294901760
    %375 = vmatpush1.msra.mxu0 %v374
    %376 = vmatprep.subr.mxu0 0.0
    %v377 = vand.u32 %v175, 4294901760
    %v378 = vsub.f32 %v175, %v377
    %v379 = vand.u32 %v378, 4294901760
    %v380 = vsub.f32 %v378, %v379
    %v381 = vand.u32 %v380, 4294901760
    %382 = vmatpush1.msra.mxu0 %v381
    %383 = vmatprep.subr.mxu0 0.0
    %v384 = vand.u32 %v176, 4294901760
    %v385 = vsub.f32 %v176, %v384
    %v386 = vand.u32 %v385, 4294901760
    %v387 = vsub.f32 %v385, %v386
    %v388 = vand.u32 %v387, 4294901760
    %389 = vmatpush1.msra.mxu0 %v388
    %390 = vmatprep.subr.mxu0 0.0
    %v391 = vand.u32 %v177, 4294901760
    %v392 = vsub.f32 %v177, %v391
    %v393 = vand.u32 %v392, 4294901760
    %v394 = vsub.f32 %v392, %v393
    %v395 = vand.u32 %v394, 4294901760
    %396 = vmatpush1.msra.mxu0 %v395
    %397 = vmatprep.subr.mxu0 0.0
    %v398 = vand.u32 %v178, 4294901760
    %v399 = vsub.f32 %v178, %v398
    %v400 = vand.u32 %v399, 4294901760
    %v401 = vsub.f32 %v399, %v400
    %v402 = vand.u32 %v401, 4294901760
    %403 = vmatpush1.msra.mxu0 %v402
    %404 = vmatprep.subr.mxu0 0.0
    %v405 = vand.u32 %v179, 4294901760
    %v406 = vsub.f32 %v179, %v405
    %v407 = vand.u32 %v406, 4294901760
    %v408 = vsub.f32 %v406, %v407
    %v409 = vand.u32 %v408, 4294901760
    %410 = vmatpush1.msra.mxu0 %v409
    %411 = vmatprep.subr.mxu0 0.0
    %v412 = vand.u32 %v180, 4294901760
    %v413 = vsub.f32 %v180, %v412
    %v414 = vand.u32 %v413, 4294901760
    %v415 = vsub.f32 %v413, %v414
    %v416 = vand.u32 %v415, 4294901760
    %417 = vmatpush1.msra.mxu0 %v416
    %418 = vmatprep.subr.mxu0 0.0
    %v419 = vand.u32 %v181, 4294901760
    %v420 = vsub.f32 %v181, %v419
    %v421 = vand.u32 %v420, 4294901760
    %v422 = vsub.f32 %v420, %v421
    %v423 = vand.u32 %v422, 4294901760
    %424 = vmatpush1.msra.mxu0 %v423
    %425 = vmatprep.subr.mxu0 0.0
    %v426 = vand.u32 %v182, 4294901760
    %v427 = vsub.f32 %v182, %v426
    %v428 = vand.u32 %v427, 4294901760
    %v429 = vsub.f32 %v427, %v428
    %v430 = vand.u32 %v429, 4294901760
    %431 = vmatpush1.msra.mxu0 %v430
    %432 = vmatprep.subr.mxu0 0.0
    %v433 = vand.u32 %v183, 4294901760
    %v434 = vsub.f32 %v183, %v433
    %v435 = vand.u32 %v434, 4294901760
    %v436 = vsub.f32 %v434, %v435
    %v437 = vand.u32 %v436, 4294901760
    %438 = vmatpush1.msra.mxu0 %v437
    %439 = vmatprep.subr.mxu0 0.0
    %v440 = vand.u32 %v184, 4294901760
    %v441 = vsub.f32 %v184, %v440
    %v442 = vand.u32 %v441, 4294901760
    %v443 = vsub.f32 %v441, %v442
    %v444 = vand.u32 %v443, 4294901760
    %445 = vmatpush1.msra.mxu0 %v444
    %446 = vmatprep.subr.mxu0 0.0
    %v447 = vand.u32 %v185, 4294901760
    %v448 = vsub.f32 %v185, %v447
    %v449 = vand.u32 %v448, 4294901760
    %v450 = vsub.f32 %v448, %v449
    %v451 = vand.u32 %v450, 4294901760
    %452 = vmatpush1.msra.mxu0 %v451
    %453 = vmatprep.subr.mxu0 0.0
    %v454 = vand.u32 %v186, 4294901760
    %v455 = vsub.f32 %v186, %v454
    %v456 = vand.u32 %v455, 4294901760
    %v457 = vsub.f32 %v455, %v456
    %v458 = vand.u32 %v457, 4294901760
    %459 = vmatpush1.msra.mxu0 %v458
    %460 = vmatprep.subr.mxu0 0.0
    %461 = vmatpush1.msra.mxu0 0.0
    %462 = vmatprep.subr.mxu0 0.0
    %463 = vmatpush1.msra.mxu0 0.0
    %464 = vmatprep.subr.mxu0 0.0
    %465 = vmatpush1.msra.mxu0 0.0
    %466 = vmatprep.subr.mxu0 0.0
    %467 = vmatpush1.msra.mxu0 0.0
    %468 = vmatprep.subr.mxu0 0.0
    %469 = vmatpush1.msra.mxu0 0.0
    %470 = vmatprep.subr.mxu0 0.0
    %471 = vmatpush1.msra.mxu0 0.0
    %472 = vmatprep.subr.mxu0 0.0
    %473 = vmatpush1.msra.mxu0 0.0
    %474 = vmatprep.subr.mxu0 0.0
    %475 = vmatpush1.msra.mxu0 0.0
    %476 = vmatprep.subr.mxu0 0.0
    %477 = vmatpush1.msra.mxu0 0.0
    %478 = vmatprep.subr.mxu0 0.0
    %479 = vmatpush1.msra.mxu0 0.0
    %480 = vmatprep.subr.mxu0 0.0
    %481 = vmatpush1.msra.mxu0 0.0
    %482 = vmatprep.subr.mxu0 0.0
    %483 = vmatpush1.msra.mxu0 0.0
    %484 = vmatprep.subr.mxu0 0.0
    %485 = vmatpush1.msra.mxu0 0.0
    %486 = vmatprep.subr.mxu0 0.0
    %487 = vmatpush1.msra.mxu0 0.0
    %488 = vmatprep.subr.mxu0 0.0
    %489 = vmatpush1.msra.mxu0 0.0
    %490 = vmatprep.subr.mxu0 0.0
    %491 = vmatpush1.msra.mxu0 0.0
    %492 = vmatprep.mubr.f32.mxu0 0.0
    %v493 = vand.u32 %v163, 4294901760
    %494 = vmatmul.mubr.f32.gmra.mrb[0].mxu0 %v493
    %v495 = vpop.f32.mrb[0].mxu0
    %v496 = vadd.f32 %v275, %v495
    %v497 = vpop.f32.mrb[0].mxu0
    %498 = vmatprep.mubr.f32.mxu0 0.0
    %v499 = vand.u32 %v164, 4294901760
    %500 = vmatmul.mubr.f32.gmra.mrb[0].mxu0 %v499
    %v501 = vpop.f32.mrb[0].mxu0
    %v502 = vadd.f32 %v285, %v501
    %v503 = vpop.f32.mrb[0].mxu0
    %504 = vmatprep.mubr.f32.mxu0 0.0
    %v505 = vand.u32 %v165, 4294901760
    %506 = vmatmul.mubr.f32.gmra.mrb[0].mxu0 %v505
    %v507 = vpop.f32.mrb[0].mxu0
    %v508 = vadd.f32 %v295, %v507
    %v509 = vpop.f32.mrb[0].mxu0
    %510 = vmatprep.mubr.f32.mxu0 0.0
    %v511 = vand.u32 %v166, 4294901760
    %512 = vmatmul.mubr.f32.gmra.mrb[0].mxu0 %v511
    %v513 = vpop.f32.mrb[0].mxu0
    %v514 = vadd.f32 %v305, %v513
    %v515 = vpop.f32.mrb[0].mxu0
    %516 = vmatprep.mubr.f32.mxu0 0.0
    %v517 = vand.u32 %v167, 4294901760
    %518 = vmatmul.mubr.f32.gmra.mrb[0].mxu0 %v517
    %v519 = vpop.f32.mrb[0].mxu0
    %v520 = vadd.f32 %v315, %v519
    %v521 = vpop.f32.mrb[0].mxu0
    %522 = vmatprep.mubr.f32.mxu0 0.0
    %v523 = vand.u32 %v168, 4294901760
    %524 = vmatmul.mubr.f32.gmra.mrb[0].mxu0 %v523
    %v525 = vpop.f32.mrb[0].mxu0
    %v526 = vadd.f32 %v325, %v525
    %v527 = vpop.f32.mrb[0].mxu0
    %528 = vmatprep.mubr.f32.mxu0 0.0
    %v529 = vand.u32 %v169, 4294901760
    %530 = vmatmul.mubr.f32.gmra.mrb[0].mxu0 %v529
    %v531 = vpop.f32.mrb[0].mxu0
    %v532 = vadd.f32 %v335, %v531
    %v533 = vpop.f32.mrb[0].mxu0
    %534 = vmatprep.mubr.f32.mxu0 0.0
    %v535 = vand.u32 %v170, 4294901760
    %536 = vmatmul.mubr.f32.gmra.mrb[0].mxu0 %v535
    %v537 = vpop.f32.mrb[0].mxu0
    %v538 = vadd.f32 %v345, %v537
    %v539 = vpop.f32.mrb[0].mxu0
    %540 = vdwg.mxu0
    %541 = vmatprep.subr.mxu0 0.0
    %v542 = vand.u32 %v171, 4294901760
    %v543 = vsub.f32 %v171, %v542
    %544 = vmatpush1.msra.mxu0 %v543
    %545 = vmatprep.subr.mxu0 0.0
    %v546 = vand.u32 %v172, 4294901760
    %v547 = vsub.f32 %v172, %v546
    %548 = vmatpush1.msra.mxu0 %v547
    %549 = vmatprep.subr.mxu0 0.0
    %v550 = vand.u32 %v173, 4294901760
    %v551 = vsub.f32 %v173, %v550
    %552 = vmatpush1.msra.mxu0 %v551
    %553 = vmatprep.subr.mxu0 0.0
    %v554 = vand.u32 %v174, 4294901760
    %v555 = vsub.f32 %v174, %v554
    %556 = vmatpush1.msra.mxu0 %v555
    %557 = vmatprep.subr.mxu0 0.0
    %v558 = vand.u32 %v175, 4294901760
    %v559 = vsub.f32 %v175, %v558
    %560 = vmatpush1.msra.mxu0 %v559
    %561 = vmatprep.subr.mxu0 0.0
    %v562 = vand.u32 %v176, 4294901760
    %v563 = vsub.f32 %v176, %v562
    %564 = vmatpush1.msra.mxu0 %v563
    %565 = vmatprep.subr.mxu0 0.0
    %v566 = vand.u32 %v177, 4294901760
    %v567 = vsub.f32 %v177, %v566
    %568 = vmatpush1.msra.mxu0 %v567
    %569 = vmatprep.subr.mxu0 0.0
    %v570 = vand.u32 %v178, 4294901760
    %v571 = vsub.f32 %v178, %v570
    %572 = vmatpush1.msra.mxu0 %v571
    %573 = vmatprep.subr.mxu0 0.0
    %v574 = vand.u32 %v179, 4294901760
    %v575 = vsub.f32 %v179, %v574
    %576 = vmatpush1.msra.mxu0 %v575
    %577 = vmatprep.subr.mxu0 0.0
    %v578 = vand.u32 %v180, 4294901760
    %v579 = vsub.f32 %v180, %v578
    %580 = vmatpush1.msra.mxu0 %v579
    %581 = vmatprep.subr.mxu0 0.0
    %v582 = vand.u32 %v181, 4294901760
    %v583 = vsub.f32 %v181, %v582
    %584 = vmatpush1.msra.mxu0 %v583
    %585 = vmatprep.subr.mxu0 0.0
    %v586 = vand.u32 %v182, 4294901760
    %v587 = vsub.f32 %v182, %v586
    %588 = vmatpush1.msra.mxu0 %v587
    %589 = vmatprep.subr.mxu0 0.0
    %v590 = vand.u32 %v183, 4294901760
    %v591 = vsub.f32 %v183, %v590
    %592 = vmatpush1.msra.mxu0 %v591
    %593 = vmatprep.subr.mxu0 0.0
    %v594 = vand.u32 %v184, 4294901760
    %v595 = vsub.f32 %v184, %v594
    %596 = vmatpush1.msra.mxu0 %v595
    %597 = vmatprep.subr.mxu0 0.0
    %v598 = vand.u32 %v185, 4294901760
    %v599 = vsub.f32 %v185, %v598
    %600 = vmatpush1.msra.mxu0 %v599
    %601 = vmatprep.subr.mxu0 0.0
    %v602 = vand.u32 %v186, 4294901760
    %v603 = vsub.f32 %v186, %v602
    %604 = vmatpush1.msra.mxu0 %v603
    %605 = vmatprep.subr.mxu0 0.0
    %606 = vmatpush1.msra.mxu0 0.0
    %607 = vmatprep.subr.mxu0 0.0
    %608 = vmatpush1.msra.mxu0 0.0
    %609 = vmatprep.subr.mxu0 0.0
    %610 = vmatpush1.msra.mxu0 0.0
    %611 = vmatprep.subr.mxu0 0.0
    %612 = vmatpush1.msra.mxu0 0.0
    %613 = vmatprep.subr.mxu0 0.0
    %614 = vmatpush1.msra.mxu0 0.0
    %615 = vmatprep.subr.mxu0 0.0
    %616 = vmatpush1.msra.mxu0 0.0
    %617 = vmatprep.subr.mxu0 0.0
    %618 = vmatpush1.msra.mxu0 0.0
    %619 = vmatprep.subr.mxu0 0.0
    %620 = vmatpush1.msra.mxu0 0.0
    %621 = vmatprep.subr.mxu0 0.0
    %622 = vmatpush1.msra.mxu0 0.0
    %623 = vmatprep.subr.mxu0 0.0
    %624 = vmatpush1.msra.mxu0 0.0
    %625 = vmatprep.subr.mxu0 0.0
    %626 = vmatpush1.msra.mxu0 0.0
    %627 = vmatprep.subr.mxu0 0.0
    %628 = vmatpush1.msra.mxu0 0.0
    %629 = vmatprep.subr.mxu0 0.0
    %630 = vmatpush1.msra.mxu0 0.0
    %631 = vmatprep.subr.mxu0 0.0
    %632 = vmatpush1.msra.mxu0 0.0
    %633 = vmatprep.subr.mxu0 0.0
    %634 = vmatpush1.msra.mxu0 0.0
    %635 = vmatprep.subr.mxu0 0.0
    %636 = vmatpush1.msra.mxu0 0.0
    %637 = vmatprep.mubr.f32.mxu0 0.0
    %v638 = vand.u32 %v163, 4294901760
    %v639 = vsub.f32 %v163, %v638
    %640 = vmatmul.mubr.f32.gmra.mrb[0].mxu0 %v639
    %v641 = vpop.f32.mrb[0].mxu0
    %v642 = vadd.f32 %v496, %v641
    %v643 = vpop.f32.mrb[0].mxu0
    %644 = vmatprep.mubr.f32.mxu0 0.0
    %v645 = vand.u32 %v164, 4294901760
    %v646 = vsub.f32 %v164, %v645
    %647 = vmatmul.mubr.f32.gmra.mrb[0].mxu0 %v646
    %v648 = vpop.f32.mrb[0].mxu0
    %v649 = vadd.f32 %v502, %v648
    %v650 = vpop.f32.mrb[0].mxu0
    %651 = vmatprep.mubr.f32.mxu0 0.0
    %v652 = vand.u32 %v165, 4294901760
    %v653 = vsub.f32 %v165, %v652
    %654 = vmatmul.mubr.f32.gmra.mrb[0].mxu0 %v653
    %v655 = vpop.f32.mrb[0].mxu0
    %v656 = vadd.f32 %v508, %v655
    %v657 = vpop.f32.mrb[0].mxu0
    %658 = vmatprep.mubr.f32.mxu0 0.0
    %v659 = vand.u32 %v166, 4294901760
    %v660 = vsub.f32 %v166, %v659
    %661 = vmatmul.mubr.f32.gmra.mrb[0].mxu0 %v660
    %v662 = vpop.f32.mrb[0].mxu0
    %v663 = vadd.f32 %v514, %v662
    %v664 = vpop.f32.mrb[0].mxu0
    %665 = vmatprep.mubr.f32.mxu0 0.0
    %v666 = vand.u32 %v167, 4294901760
    %v667 = vsub.f32 %v167, %v666
    %668 = vmatmul.mubr.f32.gmra.mrb[0].mxu0 %v667
    %v669 = vpop.f32.mrb[0].mxu0
    %v670 = vadd.f32 %v520, %v669
    %v671 = vpop.f32.mrb[0].mxu0
    %672 = vmatprep.mubr.f32.mxu0 0.0
    %v673 = vand.u32 %v168, 4294901760
    %v674 = vsub.f32 %v168, %v673
    %675 = vmatmul.mubr.f32.gmra.mrb[0].mxu0 %v674
    %v676 = vpop.f32.mrb[0].mxu0
    %v677 = vadd.f32 %v526, %v676
    %v678 = vpop.f32.mrb[0].mxu0
    %679 = vmatprep.mubr.f32.mxu0 0.0
    %v680 = vand.u32 %v169, 4294901760
    %v681 = vsub.f32 %v169, %v680
    %682 = vmatmul.mubr.f32.gmra.mrb[0].mxu0 %v681
    %v683 = vpop.f32.mrb[0].mxu0
    %v684 = vadd.f32 %v532, %v683
    %v685 = vpop.f32.mrb[0].mxu0
    %686 = vmatprep.mubr.f32.mxu0 0.0
    %v687 = vand.u32 %v170, 4294901760
    %v688 = vsub.f32 %v170, %v687
    %689 = vmatmul.mubr.f32.gmra.mrb[0].mxu0 %v688
    %v690 = vpop.f32.mrb[0].mxu0
    %v691 = vadd.f32 %v538, %v690
    %v692 = vpop.f32.mrb[0].mxu0
    %693 = vdwg.mxu0
    %694 = vmatprep.subr.mxu0 0.0
    %v695 = vand.u32 %v171, 4294901760
    %696 = vmatpush1.msra.mxu0 %v695
    %697 = vmatprep.subr.mxu0 0.0
    %v698 = vand.u32 %v172, 4294901760
    %699 = vmatpush1.msra.mxu0 %v698
    %700 = vmatprep.subr.mxu0 0.0
    %v701 = vand.u32 %v173, 4294901760
    %702 = vmatpush1.msra.mxu0 %v701
    %703 = vmatprep.subr.mxu0 0.0
    %v704 = vand.u32 %v174, 4294901760
    %705 = vmatpush1.msra.mxu0 %v704
    %706 = vmatprep.subr.mxu0 0.0
    %v707 = vand.u32 %v175, 4294901760
    %708 = vmatpush1.msra.mxu0 %v707
    %709 = vmatprep.subr.mxu0 0.0
    %v710 = vand.u32 %v176, 4294901760
    %711 = vmatpush1.msra.mxu0 %v710
    %712 = vmatprep.subr.mxu0 0.0
    %v713 = vand.u32 %v177, 4294901760
    %714 = vmatpush1.msra.mxu0 %v713
    %715 = vmatprep.subr.mxu0 0.0
    %v716 = vand.u32 %v178, 4294901760
    %717 = vmatpush1.msra.mxu0 %v716
    %718 = vmatprep.subr.mxu0 0.0
    %v719 = vand.u32 %v179, 4294901760
    %720 = vmatpush1.msra.mxu0 %v719
    %721 = vmatprep.subr.mxu0 0.0
    %v722 = vand.u32 %v180, 4294901760
    %723 = vmatpush1.msra.mxu0 %v722
    %724 = vmatprep.subr.mxu0 0.0
    %v725 = vand.u32 %v181, 4294901760
    %726 = vmatpush1.msra.mxu0 %v725
    %727 = vmatprep.subr.mxu0 0.0
    %v728 = vand.u32 %v182, 4294901760
    %729 = vmatpush1.msra.mxu0 %v728
    %730 = vmatprep.subr.mxu0 0.0
    %v731 = vand.u32 %v183, 4294901760
    %732 = vmatpush1.msra.mxu0 %v731
    %733 = vmatprep.subr.mxu0 0.0
    %v734 = vand.u32 %v184, 4294901760
    %735 = vmatpush1.msra.mxu0 %v734
    %736 = vmatprep.subr.mxu0 0.0
    %v737 = vand.u32 %v185, 4294901760
    %738 = vmatpush1.msra.mxu0 %v737
    %739 = vmatprep.subr.mxu0 0.0
    %v740 = vand.u32 %v186, 4294901760
    %741 = vmatpush1.msra.mxu0 %v740
    %742 = vmatprep.subr.mxu0 0.0
    %743 = vmatpush1.msra.mxu0 0.0
    %744 = vmatprep.subr.mxu0 0.0
    %745 = vmatpush1.msra.mxu0 0.0
    %746 = vmatprep.subr.mxu0 0.0
    %747 = vmatpush1.msra.mxu0 0.0
    %748 = vmatprep.subr.mxu0 0.0
    %749 = vmatpush1.msra.mxu0 0.0
    %750 = vmatprep.subr.mxu0 0.0
    %751 = vmatpush1.msra.mxu0 0.0
    %752 = vmatprep.subr.mxu0 0.0
    %753 = vmatpush1.msra.mxu0 0.0
    %754 = vmatprep.subr.mxu0 0.0
    %755 = vmatpush1.msra.mxu0 0.0
    %756 = vmatprep.subr.mxu0 0.0
    %757 = vmatpush1.msra.mxu0 0.0
    %758 = vmatprep.subr.mxu0 0.0
    %759 = vmatpush1.msra.mxu0 0.0
    %760 = vmatprep.subr.mxu0 0.0
    %761 = vmatpush1.msra.mxu0 0.0
    %762 = vmatprep.subr.mxu0 0.0
    %763 = vmatpush1.msra.mxu0 0.0
    %764 = vmatprep.subr.mxu0 0.0
    %765 = vmatpush1.msra.mxu0 0.0
    %766 = vmatprep.subr.mxu0 0.0
    %767 = vmatpush1.msra.mxu0 0.0
    %768 = vmatprep.subr.mxu0 0.0
    %769 = vmatpush1.msra.mxu0 0.0
    %770 = vmatprep.subr.mxu0 0.0
    %771 = vmatpush1.msra.mxu0 0.0
    %772 = vmatprep.subr.mxu0 0.0
    %773 = vmatpush1.msra.mxu0 0.0
    %774 = vmatprep.mubr.f32.mxu0 0.0
    %v775 = vand.u32 %v163, 4294901760
    %v776 = vsub.f32 %v163, %v775
    %v777 = vand.u32 %v776, 4294901760
    %778 = vmatmul.mubr.f32.gmra.mrb[0].mxu0 %v777
    %v779 = vpop.f32.mrb[0].mxu0
    %v780 = vadd.f32 %v642, %v779
    %v781 = vpop.f32.mrb[0].mxu0
    %782 = vmatprep.mubr.f32.mxu0 0.0
    %v783 = vand.u32 %v164, 4294901760
    %v784 = vsub.f32 %v164, %v783
    %v785 = vand.u32 %v784, 4294901760
    %786 = vmatmul.mubr.f32.gmra.mrb[0].mxu0 %v785
    %v787 = vpop.f32.mrb[0].mxu0
    %v788 = vadd.f32 %v649, %v787
    %v789 = vpop.f32.mrb[0].mxu0
    %790 = vmatprep.mubr.f32.mxu0 0.0
    %v791 = vand.u32 %v165, 4294901760
    %v792 = vsub.f32 %v165, %v791
    %v793 = vand.u32 %v792, 4294901760
    %794 = vmatmul.mubr.f32.gmra.mrb[0].mxu0 %v793
    %v795 = vpop.f32.mrb[0].mxu0
    %v796 = vadd.f32 %v656, %v795
    %v797 = vpop.f32.mrb[0].mxu0
    %798 = vmatprep.mubr.f32.mxu0 0.0
    %v799 = vand.u32 %v166, 4294901760
    %v800 = vsub.f32 %v166, %v799
    %v801 = vand.u32 %v800, 4294901760
    %802 = vmatmul.mubr.f32.gmra.mrb[0].mxu0 %v801
    %v803 = vpop.f32.mrb[0].mxu0
    %v804 = vadd.f32 %v663, %v803
    %v805 = vpop.f32.mrb[0].mxu0
    %806 = vmatprep.mubr.f32.mxu0 0.0
    %v807 = vand.u32 %v167, 4294901760
    %v808 = vsub.f32 %v167, %v807
    %v809 = vand.u32 %v808, 4294901760
    %810 = vmatmul.mubr.f32.gmra.mrb[0].mxu0 %v809
    %v811 = vpop.f32.mrb[0].mxu0
    %v812 = vadd.f32 %v670, %v811
    %v813 = vpop.f32.mrb[0].mxu0
    %814 = vmatprep.mubr.f32.mxu0 0.0
    %v815 = vand.u32 %v168, 4294901760
    %v816 = vsub.f32 %v168, %v815
    %v817 = vand.u32 %v816, 4294901760
    %818 = vmatmul.mubr.f32.gmra.mrb[0].mxu0 %v817
    %v819 = vpop.f32.mrb[0].mxu0
    %v820 = vadd.f32 %v677, %v819
    %v821 = vpop.f32.mrb[0].mxu0
    %822 = vmatprep.mubr.f32.mxu0 0.0
    %v823 = vand.u32 %v169, 4294901760
    %v824 = vsub.f32 %v169, %v823
    %v825 = vand.u32 %v824, 4294901760
    %826 = vmatmul.mubr.f32.gmra.mrb[0].mxu0 %v825
    %v827 = vpop.f32.mrb[0].mxu0
    %v828 = vadd.f32 %v684, %v827
    %v829 = vpop.f32.mrb[0].mxu0
    %830 = vmatprep.mubr.f32.mxu0 0.0
    %v831 = vand.u32 %v170, 4294901760
    %v832 = vsub.f32 %v170, %v831
    %v833 = vand.u32 %v832, 4294901760
    %834 = vmatmul.mubr.f32.gmra.mrb[0].mxu0 %v833
    %v835 = vpop.f32.mrb[0].mxu0
    %v836 = vadd.f32 %v691, %v835
    %v837 = vpop.f32.mrb[0].mxu0
    %838 = vdwg.mxu0
    %839 = vmatprep.subr.mxu0 0.0
    %v840 = vand.u32 %v171, 4294901760
    %v841 = vsub.f32 %v171, %v840
    %v842 = vand.u32 %v841, 4294901760
    %843 = vmatpush1.msra.mxu0 %v842
    %844 = vmatprep.subr.mxu0 0.0
    %v845 = vand.u32 %v172, 4294901760
    %v846 = vsub.f32 %v172, %v845
    %v847 = vand.u32 %v846, 4294901760
    %848 = vmatpush1.msra.mxu0 %v847
    %849 = vmatprep.subr.mxu0 0.0
    %v850 = vand.u32 %v173, 4294901760
    %v851 = vsub.f32 %v173, %v850
    %v852 = vand.u32 %v851, 4294901760
    %853 = vmatpush1.msra.mxu0 %v852
    %854 = vmatprep.subr.mxu0 0.0
    %v855 = vand.u32 %v174, 4294901760
    %v856 = vsub.f32 %v174, %v855
    %v857 = vand.u32 %v856, 4294901760
    %858 = vmatpush1.msra.mxu0 %v857
    %859 = vmatprep.subr.mxu0 0.0
    %v860 = vand.u32 %v175, 4294901760
    %v861 = vsub.f32 %v175, %v860
    %v862 = vand.u32 %v861, 4294901760
    %863 = vmatpush1.msra.mxu0 %v862
    %864 = vmatprep.subr.mxu0 0.0
    %v865 = vand.u32 %v176, 4294901760
    %v866 = vsub.f32 %v176, %v865
    %v867 = vand.u32 %v866, 4294901760
    %868 = vmatpush1.msra.mxu0 %v867
    %869 = vmatprep.subr.mxu0 0.0
    %v870 = vand.u32 %v177, 4294901760
    %v871 = vsub.f32 %v177, %v870
    %v872 = vand.u32 %v871, 4294901760
    %873 = vmatpush1.msra.mxu0 %v872
    %874 = vmatprep.subr.mxu0 0.0
    %v875 = vand.u32 %v178, 4294901760
    %v876 = vsub.f32 %v178, %v875
    %v877 = vand.u32 %v876, 4294901760
    %878 = vmatpush1.msra.mxu0 %v877
    %879 = vmatprep.subr.mxu0 0.0
    %v880 = vand.u32 %v179, 4294901760
    %v881 = vsub.f32 %v179, %v880
    %v882 = vand.u32 %v881, 4294901760
    %883 = vmatpush1.msra.mxu0 %v882
    %884 = vmatprep.subr.mxu0 0.0
    %v885 = vand.u32 %v180, 4294901760
    %v886 = vsub.f32 %v180, %v885
    %v887 = vand.u32 %v886, 4294901760
    %888 = vmatpush1.msra.mxu0 %v887
    %889 = vmatprep.subr.mxu0 0.0
    %v890 = vand.u32 %v181, 4294901760
    %v891 = vsub.f32 %v181, %v890
    %v892 = vand.u32 %v891, 4294901760
    %893 = vmatpush1.msra.mxu0 %v892
    %894 = vmatprep.subr.mxu0 0.0
    %v895 = vand.u32 %v182, 4294901760
    %v896 = vsub.f32 %v182, %v895
    %v897 = vand.u32 %v896, 4294901760
    %898 = vmatpush1.msra.mxu0 %v897
    %899 = vmatprep.subr.mxu0 0.0
    %v900 = vand.u32 %v183, 4294901760
    %v901 = vsub.f32 %v183, %v900
    %v902 = vand.u32 %v901, 4294901760
    %903 = vmatpush1.msra.mxu0 %v902
    %904 = vmatprep.subr.mxu0 0.0
    %v905 = vand.u32 %v184, 4294901760
    %v906 = vsub.f32 %v184, %v905
    %v907 = vand.u32 %v906, 4294901760
    %908 = vmatpush1.msra.mxu0 %v907
    %909 = vmatprep.subr.mxu0 0.0
    %v910 = vand.u32 %v185, 4294901760
    %v911 = vsub.f32 %v185, %v910
    %v912 = vand.u32 %v911, 4294901760
    %913 = vmatpush1.msra.mxu0 %v912
    %914 = vmatprep.subr.mxu0 0.0
    %v915 = vand.u32 %v186, 4294901760
    %v916 = vsub.f32 %v186, %v915
    %v917 = vand.u32 %v916, 4294901760
    %918 = vmatpush1.msra.mxu0 %v917
    %919 = vmatprep.subr.mxu0 0.0
    %920 = vmatpush1.msra.mxu0 0.0
    %921 = vmatprep.subr.mxu0 0.0
    %922 = vmatpush1.msra.mxu0 0.0
    %923 = vmatprep.subr.mxu0 0.0
    %924 = vmatpush1.msra.mxu0 0.0
    %925 = vmatprep.subr.mxu0 0.0
    %926 = vmatpush1.msra.mxu0 0.0
    %927 = vmatprep.subr.mxu0 0.0
    %928 = vmatpush1.msra.mxu0 0.0
    %929 = vmatprep.subr.mxu0 0.0
    %930 = vmatpush1.msra.mxu0 0.0
    %931 = vmatprep.subr.mxu0 0.0
    %932 = vmatpush1.msra.mxu0 0.0
    %933 = vmatprep.subr.mxu0 0.0
    %934 = vmatpush1.msra.mxu0 0.0
    %935 = vmatprep.subr.mxu0 0.0
    %936 = vmatpush1.msra.mxu0 0.0
    %937 = vmatprep.subr.mxu0 0.0
    %938 = vmatpush1.msra.mxu0 0.0
    %939 = vmatprep.subr.mxu0 0.0
    %940 = vmatpush1.msra.mxu0 0.0
    %941 = vmatprep.subr.mxu0 0.0
    %942 = vmatpush1.msra.mxu0 0.0
    %943 = vmatprep.subr.mxu0 0.0
    %944 = vmatpush1.msra.mxu0 0.0
    %945 = vmatprep.subr.mxu0 0.0
    %946 = vmatpush1.msra.mxu0 0.0
    %947 = vmatprep.subr.mxu0 0.0
    %948 = vmatpush1.msra.mxu0 0.0
    %949 = vmatprep.subr.mxu0 0.0
    %950 = vmatpush1.msra.mxu0 0.0
    %951 = vmatprep.mubr.f32.mxu0 0.0
    %v952 = vand.u32 %v163, 4294901760
    %953 = vmatmul.mubr.f32.gmra.mrb[0].mxu0 %v952
    %v954 = vpop.f32.mrb[0].mxu0
    %v955 = vadd.f32 %v780, %v954
    %v956 = vpop.f32.mrb[0].mxu0
    %957 = vmatprep.mubr.f32.mxu0 0.0
    %v958 = vand.u32 %v164, 4294901760
    %959 = vmatmul.mubr.f32.gmra.mrb[0].mxu0 %v958
    %v960 = vpop.f32.mrb[0].mxu0
    %v961 = vadd.f32 %v788, %v960
    %v962 = vpop.f32.mrb[0].mxu0
    %963 = vmatprep.mubr.f32.mxu0 0.0
    %v964 = vand.u32 %v165, 4294901760
    %965 = vmatmul.mubr.f32.gmra.mrb[0].mxu0 %v964
    %v966 = vpop.f32.mrb[0].mxu0
    %v967 = vadd.f32 %v796, %v966
    %v968 = vpop.f32.mrb[0].mxu0
    %969 = vmatprep.mubr.f32.mxu0 0.0
    %v970 = vand.u32 %v166, 4294901760
    %971 = vmatmul.mubr.f32.gmra.mrb[0].mxu0 %v970
    %v972 = vpop.f32.mrb[0].mxu0
    %v973 = vadd.f32 %v804, %v972
    %v974 = vpop.f32.mrb[0].mxu0
    %975 = vmatprep.mubr.f32.mxu0 0.0
    %v976 = vand.u32 %v167, 4294901760
    %977 = vmatmul.mubr.f32.gmra.mrb[0].mxu0 %v976
    %v978 = vpop.f32.mrb[0].mxu0
    %v979 = vadd.f32 %v812, %v978
    %v980 = vpop.f32.mrb[0].mxu0
    %981 = vmatprep.mubr.f32.mxu0 0.0
    %v982 = vand.u32 %v168, 4294901760
    %983 = vmatmul.mubr.f32.gmra.mrb[0].mxu0 %v982
    %v984 = vpop.f32.mrb[0].mxu0
    %v985 = vadd.f32 %v820, %v984
    %v986 = vpop.f32.mrb[0].mxu0
    %987 = vmatprep.mubr.f32.mxu0 0.0
    %v988 = vand.u32 %v169, 4294901760
    %989 = vmatmul.mubr.f32.gmra.mrb[0].mxu0 %v988
    %v990 = vpop.f32.mrb[0].mxu0
    %v991 = vadd.f32 %v828, %v990
    %v992 = vpop.f32.mrb[0].mxu0
    %993 = vmatprep.mubr.f32.mxu0 0.0
    %v994 = vand.u32 %v170, 4294901760
    %995 = vmatmul.mubr.f32.gmra.mrb[0].mxu0 %v994
    %v996 = vpop.f32.mrb[0].mxu0
    %v997 = vadd.f32 %v836, %v996
    %v998 = vpop.f32.mrb[0].mxu0
    %999 = vdwg.mxu0
    %1000 = vmatprep.subr.mxu0 0.0
    %v1001 = vand.u32 %v171, 4294901760
    %1002 = vmatpush1.msra.mxu0 %v1001
    %1003 = vmatprep.subr.mxu0 0.0
    %v1004 = vand.u32 %v172, 4294901760
    %1005 = vmatpush1.msra.mxu0 %v1004
    %1006 = vmatprep.subr.mxu0 0.0
    %v1007 = vand.u32 %v173, 4294901760
    %1008 = vmatpush1.msra.mxu0 %v1007
    %1009 = vmatprep.subr.mxu0 0.0
    %v1010 = vand.u32 %v174, 4294901760
    %1011 = vmatpush1.msra.mxu0 %v1010
    %1012 = vmatprep.subr.mxu0 0.0
    %v1013 = vand.u32 %v175, 4294901760
    %1014 = vmatpush1.msra.mxu0 %v1013
    %1015 = vmatprep.subr.mxu0 0.0
    %v1016 = vand.u32 %v176, 4294901760
    %1017 = vmatpush1.msra.mxu0 %v1016
    %1018 = vmatprep.subr.mxu0 0.0
    %v1019 = vand.u32 %v177, 4294901760
    %1020 = vmatpush1.msra.mxu0 %v1019
    %1021 = vmatprep.subr.mxu0 0.0
    %v1022 = vand.u32 %v178, 4294901760
    %1023 = vmatpush1.msra.mxu0 %v1022
    %1024 = vmatprep.subr.mxu0 0.0
    %v1025 = vand.u32 %v179, 4294901760
    %1026 = vmatpush1.msra.mxu0 %v1025
    %1027 = vmatprep.subr.mxu0 0.0
    %v1028 = vand.u32 %v180, 4294901760
    %1029 = vmatpush1.msra.mxu0 %v1028
    %1030 = vmatprep.subr.mxu0 0.0
    %v1031 = vand.u32 %v181, 4294901760
    %1032 = vmatpush1.msra.mxu0 %v1031
    %1033 = vmatprep.subr.mxu0 0.0
    %v1034 = vand.u32 %v182, 4294901760
    %1035 = vmatpush1.msra.mxu0 %v1034
    %1036 = vmatprep.subr.mxu0 0.0
    %v1037 = vand.u32 %v183, 4294901760
    %1038 = vmatpush1.msra.mxu0 %v1037
    %1039 = vmatprep.subr.mxu0 0.0
    %v1040 = vand.u32 %v184, 4294901760
    %1041 = vmatpush1.msra.mxu0 %v1040
    %1042 = vmatprep.subr.mxu0 0.0
    %v1043 = vand.u32 %v185, 4294901760
    %1044 = vmatpush1.msra.mxu0 %v1043
    %1045 = vmatprep.subr.mxu0 0.0
    %v1046 = vand.u32 %v186, 4294901760
    %1047 = vmatpush1.msra.mxu0 %v1046
    %1048 = vmatprep.subr.mxu0 0.0
    %1049 = vmatpush1.msra.mxu0 0.0
    %1050 = vmatprep.subr.mxu0 0.0
    %1051 = vmatpush1.msra.mxu0 0.0
    %1052 = vmatprep.subr.mxu0 0.0
    %1053 = vmatpush1.msra.mxu0 0.0
    %1054 = vmatprep.subr.mxu0 0.0
    %1055 = vmatpush1.msra.mxu0 0.0
    %1056 = vmatprep.subr.mxu0 0.0
    %1057 = vmatpush1.msra.mxu0 0.0
    %1058 = vmatprep.subr.mxu0 0.0
    %1059 = vmatpush1.msra.mxu0 0.0
    %1060 = vmatprep.subr.mxu0 0.0
    %1061 = vmatpush1.msra.mxu0 0.0
    %1062 = vmatprep.subr.mxu0 0.0
    %1063 = vmatpush1.msra.mxu0 0.0
    %1064 = vmatprep.subr.mxu0 0.0
    %1065 = vmatpush1.msra.mxu0 0.0
    %1066 = vmatprep.subr.mxu0 0.0
    %1067 = vmatpush1.msra.mxu0 0.0
    %1068 = vmatprep.subr.mxu0 0.0
    %1069 = vmatpush1.msra.mxu0 0.0
    %1070 = vmatprep.subr.mxu0 0.0
    %1071 = vmatpush1.msra.mxu0 0.0
    %1072 = vmatprep.subr.mxu0 0.0
    %1073 = vmatpush1.msra.mxu0 0.0
    %1074 = vmatprep.subr.mxu0 0.0
    %1075 = vmatpush1.msra.mxu0 0.0
    %1076 = vmatprep.subr.mxu0 0.0
    %1077 = vmatpush1.msra.mxu0 0.0
    %1078 = vmatprep.subr.mxu0 0.0
    %1079 = vmatpush1.msra.mxu0 0.0
    %1080 = vmatprep.mubr.f32.mxu0 0.0
    %v1081 = vand.u32 %v163, 4294901760
    %1082 = vmatmul.mubr.f32.gmra.mrb[0].mxu0 %v1081
    %v1083 = vpop.f32.mrb[0].mxu0
    %v1084 = vadd.f32 %v955, %v1083
    %v1085 = vpop.f32.mrb[0].mxu0
    %1086 = vmatprep.mubr.f32.mxu0 0.0
    %v1087 = vand.u32 %v164, 4294901760
    %1088 = vmatmul.mubr.f32.gmra.mrb[0].mxu0 %v1087
    %v1089 = vpop.f32.mrb[0].mxu0
    %v1090 = vadd.f32 %v961, %v1089
    %v1091 = vpop.f32.mrb[0].mxu0
    %1092 = vmatprep.mubr.f32.mxu0 0.0
    %v1093 = vand.u32 %v165, 4294901760
    %1094 = vmatmul.mubr.f32.gmra.mrb[0].mxu0 %v1093
    %v1095 = vpop.f32.mrb[0].mxu0
    %v1096 = vadd.f32 %v967, %v1095
    %v1097 = vpop.f32.mrb[0].mxu0
    %1098 = vmatprep.mubr.f32.mxu0 0.0
    %v1099 = vand.u32 %v166, 4294901760
    %1100 = vmatmul.mubr.f32.gmra.mrb[0].mxu0 %v1099
    %v1101 = vpop.f32.mrb[0].mxu0
    %v1102 = vadd.f32 %v973, %v1101
    %v1103 = vpop.f32.mrb[0].mxu0
    %1104 = vmatprep.mubr.f32.mxu0 0.0
    %v1105 = vand.u32 %v167, 4294901760
    %1106 = vmatmul.mubr.f32.gmra.mrb[0].mxu0 %v1105
    %v1107 = vpop.f32.mrb[0].mxu0
    %v1108 = vadd.f32 %v979, %v1107
    %v1109 = vpop.f32.mrb[0].mxu0
    %1110 = vmatprep.mubr.f32.mxu0 0.0
    %v1111 = vand.u32 %v168, 4294901760
    %1112 = vmatmul.mubr.f32.gmra.mrb[0].mxu0 %v1111
    %v1113 = vpop.f32.mrb[0].mxu0
    %v1114 = vadd.f32 %v985, %v1113
    %v1115 = vpop.f32.mrb[0].mxu0
    %1116 = vmatprep.mubr.f32.mxu0 0.0
    %v1117 = vand.u32 %v169, 4294901760
    %1118 = vmatmul.mubr.f32.gmra.mrb[0].mxu0 %v1117
    %v1119 = vpop.f32.mrb[0].mxu0
    %v1120 = vadd.f32 %v991, %v1119
    %v1121 = vpop.f32.mrb[0].mxu0
    %1122 = vmatprep.mubr.f32.mxu0 0.0
    %v1123 = vand.u32 %v170, 4294901760
    %1124 = vmatmul.mubr.f32.gmra.mrb[0].mxu0 %v1123
    %v1125 = vpop.f32.mrb[0].mxu0
    %v1126 = vadd.f32 %v997, %v1125
    %v1127 = vpop.f32.mrb[0].mxu0
    %1128 = vdwg.mxu0
    %1129 = vmatprep.subr.mxu0 0.0
    %v1130 = vand.u32 %v107, 4294901760
    %1131 = vmatpush1.msra.mxu0 %v1130
    %1132 = vmatprep.subr.mxu0 0.0
    %v1133 = vand.u32 %v108, 4294901760
    %1134 = vmatpush1.msra.mxu0 %v1133
    %1135 = vmatprep.subr.mxu0 0.0
    %v1136 = vand.u32 %v109, 4294901760
    %1137 = vmatpush1.msra.mxu0 %v1136
    %1138 = vmatprep.subr.mxu0 0.0
    %v1139 = vand.u32 %v110, 4294901760
    %1140 = vmatpush1.msra.mxu0 %v1139
    %1141 = vmatprep.subr.mxu0 0.0
    %v1142 = vand.u32 %v111, 4294901760
    %1143 = vmatpush1.msra.mxu0 %v1142
    %1144 = vmatprep.subr.mxu0 0.0
    %v1145 = vand.u32 %v112, 4294901760
    %1146 = vmatpush1.msra.mxu0 %v1145
    %1147 = vmatprep.subr.mxu0 0.0
    %v1148 = vand.u32 %v113, 4294901760
    %1149 = vmatpush1.msra.mxu0 %v1148
    %1150 = vmatprep.subr.mxu0 0.0
    %v1151 = vand.u32 %v114, 4294901760
    %1152 = vmatpush1.msra.mxu0 %v1151
    %1153 = vmatprep.subr.mxu0 0.0
    %v1154 = vand.u32 %v115, 4294901760
    %1155 = vmatpush1.msra.mxu0 %v1154
    %1156 = vmatprep.subr.mxu0 0.0
    %v1157 = vand.u32 %v116, 4294901760
    %1158 = vmatpush1.msra.mxu0 %v1157
    %1159 = vmatprep.subr.mxu0 0.0
    %v1160 = vand.u32 %v117, 4294901760
    %1161 = vmatpush1.msra.mxu0 %v1160
    %1162 = vmatprep.subr.mxu0 0.0
    %v1163 = vand.u32 %v118, 4294901760
    %1164 = vmatpush1.msra.mxu0 %v1163
    %1165 = vmatprep.subr.mxu0 0.0
    %v1166 = vand.u32 %v119, 4294901760
    %1167 = vmatpush1.msra.mxu0 %v1166
    %1168 = vmatprep.subr.mxu0 0.0
    %v1169 = vand.u32 %v120, 4294901760
    %1170 = vmatpush1.msra.mxu0 %v1169
    %1171 = vmatprep.subr.mxu0 0.0
    %v1172 = vand.u32 %v121, 4294901760
    %1173 = vmatpush1.msra.mxu0 %v1172
    %1174 = vmatprep.subr.mxu0 0.0
    %v1175 = vand.u32 %v122, 4294901760
    %1176 = vmatpush1.msra.mxu0 %v1175
    %1177 = vmatprep.subr.mxu0 0.0
    %1178 = vmatpush1.msra.mxu0 0.0
    %1179 = vmatprep.subr.mxu0 0.0
    %1180 = vmatpush1.msra.mxu0 0.0
    %1181 = vmatprep.subr.mxu0 0.0
    %1182 = vmatpush1.msra.mxu0 0.0
    %1183 = vmatprep.subr.mxu0 0.0
    %1184 = vmatpush1.msra.mxu0 0.0
    %1185 = vmatprep.subr.mxu0 0.0
    %1186 = vmatpush1.msra.mxu0 0.0
    %1187 = vmatprep.subr.mxu0 0.0
    %1188 = vmatpush1.msra.mxu0 0.0
    %1189 = vmatprep.subr.mxu0 0.0
    %1190 = vmatpush1.msra.mxu0 0.0
    %1191 = vmatprep.subr.mxu0 0.0
    %1192 = vmatpush1.msra.mxu0 0.0
    %1193 = vmatprep.subr.mxu0 0.0
    %1194 = vmatpush1.msra.mxu0 0.0
    %1195 = vmatprep.subr.mxu0 0.0
    %1196 = vmatpush1.msra.mxu0 0.0
    %1197 = vmatprep.subr.mxu0 0.0
    %1198 = vmatpush1.msra.mxu0 0.0
    %1199 = vmatprep.subr.mxu0 0.0
    %1200 = vmatpush1.msra.mxu0 0.0
    %1201 = vmatprep.subr.mxu0 0.0
    %1202 = vmatpush1.msra.mxu0 0.0
    %1203 = vmatprep.subr.mxu0 0.0
    %1204 = vmatpush1.msra.mxu0 0.0
    %1205 = vmatprep.subr.mxu0 0.0
    %1206 = vmatpush1.msra.mxu0 0.0
    %1207 = vmatprep.subr.mxu0 0.0
    %1208 = vmatpush1.msra.mxu0 0.0
    %1209 = vmatprep.mubr.f32.mxu0 0.0
    %v1210 = vand.u32 %v99, 4294901760
    %v1211 = vsub.f32 %v99, %v1210
    %v1212 = vand.u32 %v1211, 4294901760
    %v1213 = vsub.f32 %v1211, %v1212
    %v1214 = vand.u32 %v1213, 4294901760
    %1215 = vmatmul.mubr.f32.gmra.mrb[0].mxu0 %v1214
    %v1216 = vpop.f32.mrb[0].mxu0
    %v1217 = vadd.f32 %v1084, %v1216
    %v1218 = vpop.f32.mrb[0].mxu0
    %1219 = vmatprep.mubr.f32.mxu0 0.0
    %v1220 = vand.u32 %v100, 4294901760
    %v1221 = vsub.f32 %v100, %v1220
    %v1222 = vand.u32 %v1221, 4294901760
    %v1223 = vsub.f32 %v1221, %v1222
    %v1224 = vand.u32 %v1223, 4294901760
    %1225 = vmatmul.mubr.f32.gmra.mrb[0].mxu0 %v1224
    %v1226 = vpop.f32.mrb[0].mxu0
    %v1227 = vadd.f32 %v1090, %v1226
    %v1228 = vpop.f32.mrb[0].mxu0
    %1229 = vmatprep.mubr.f32.mxu0 0.0
    %v1230 = vand.u32 %v101, 4294901760
    %v1231 = vsub.f32 %v101, %v1230
    %v1232 = vand.u32 %v1231, 4294901760
    %v1233 = vsub.f32 %v1231, %v1232
    %v1234 = vand.u32 %v1233, 4294901760
    %1235 = vmatmul.mubr.f32.gmra.mrb[0].mxu0 %v1234
    %v1236 = vpop.f32.mrb[0].mxu0
    %v1237 = vadd.f32 %v1096, %v1236
    %v1238 = vpop.f32.mrb[0].mxu0
    %1239 = vmatprep.mubr.f32.mxu0 0.0
    %v1240 = vand.u32 %v102, 4294901760
    %v1241 = vsub.f32 %v102, %v1240
    %v1242 = vand.u32 %v1241, 4294901760
    %v1243 = vsub.f32 %v1241, %v1242
    %v1244 = vand.u32 %v1243, 4294901760
    %1245 = vmatmul.mubr.f32.gmra.mrb[0].mxu0 %v1244
    %v1246 = vpop.f32.mrb[0].mxu0
    %v1247 = vadd.f32 %v1102, %v1246
    %v1248 = vpop.f32.mrb[0].mxu0
    %1249 = vmatprep.mubr.f32.mxu0 0.0
    %v1250 = vand.u32 %v103, 4294901760
    %v1251 = vsub.f32 %v103, %v1250
    %v1252 = vand.u32 %v1251, 4294901760
    %v1253 = vsub.f32 %v1251, %v1252
    %v1254 = vand.u32 %v1253, 4294901760
    %1255 = vmatmul.mubr.f32.gmra.mrb[0].mxu0 %v1254
    %v1256 = vpop.f32.mrb[0].mxu0
    %v1257 = vadd.f32 %v1108, %v1256
    %v1258 = vpop.f32.mrb[0].mxu0
    %1259 = vmatprep.mubr.f32.mxu0 0.0
    %v1260 = vand.u32 %v104, 4294901760
    %v1261 = vsub.f32 %v104, %v1260
    %v1262 = vand.u32 %v1261, 4294901760
    %v1263 = vsub.f32 %v1261, %v1262
    %v1264 = vand.u32 %v1263, 4294901760
    %1265 = vmatmul.mubr.f32.gmra.mrb[0].mxu0 %v1264
    %v1266 = vpop.f32.mrb[0].mxu0
    %v1267 = vadd.f32 %v1114, %v1266
    %v1268 = vpop.f32.mrb[0].mxu0
    %1269 = vmatprep.mubr.f32.mxu0 0.0
    %v1270 = vand.u32 %v105, 4294901760
    %v1271 = vsub.f32 %v105, %v1270
    %v1272 = vand.u32 %v1271, 4294901760
    %v1273 = vsub.f32 %v1271, %v1272
    %v1274 = vand.u32 %v1273, 4294901760
    %1275 = vmatmul.mubr.f32.gmra.mrb[0].mxu0 %v1274
    %v1276 = vpop.f32.mrb[0].mxu0
    %v1277 = vadd.f32 %v1120, %v1276
    %v1278 = vpop.f32.mrb[0].mxu0
    %1279 = vmatprep.mubr.f32.mxu0 0.0
    %v1280 = vand.u32 %v106, 4294901760
    %v1281 = vsub.f32 %v106, %v1280
    %v1282 = vand.u32 %v1281, 4294901760
    %v1283 = vsub.f32 %v1281, %v1282
    %v1284 = vand.u32 %v1283, 4294901760
    %1285 = vmatmul.mubr.f32.gmra.mrb[0].mxu0 %v1284
    %v1286 = vpop.f32.mrb[0].mxu0
    %v1287 = vadd.f32 %v1126, %v1286
    %v1288 = vpop.f32.mrb[0].mxu0
    %1289 = vdwg.mxu0
    %1290 = vmatprep.subr.mxu0 0.0
    %v1291 = vand.u32 %v107, 4294901760
    %v1292 = vsub.f32 %v107, %v1291
    %v1293 = vand.u32 %v1292, 4294901760
    %v1294 = vsub.f32 %v1292, %v1293
    %v1295 = vand.u32 %v1294, 4294901760
    %1296 = vmatpush1.msra.mxu0 %v1295
    %1297 = vmatprep.subr.mxu0 0.0
    %v1298 = vand.u32 %v108, 4294901760
    %v1299 = vsub.f32 %v108, %v1298
    %v1300 = vand.u32 %v1299, 4294901760
    %v1301 = vsub.f32 %v1299, %v1300
    %v1302 = vand.u32 %v1301, 4294901760
    %1303 = vmatpush1.msra.mxu0 %v1302
    %1304 = vmatprep.subr.mxu0 0.0
    %v1305 = vand.u32 %v109, 4294901760
    %v1306 = vsub.f32 %v109, %v1305
    %v1307 = vand.u32 %v1306, 4294901760
    %v1308 = vsub.f32 %v1306, %v1307
    %v1309 = vand.u32 %v1308, 4294901760
    %1310 = vmatpush1.msra.mxu0 %v1309
    %1311 = vmatprep.subr.mxu0 0.0
    %v1312 = vand.u32 %v110, 4294901760
    %v1313 = vsub.f32 %v110, %v1312
    %v1314 = vand.u32 %v1313, 4294901760
    %v1315 = vsub.f32 %v1313, %v1314
    %v1316 = vand.u32 %v1315, 4294901760
    %1317 = vmatpush1.msra.mxu0 %v1316
    %1318 = vmatprep.subr.mxu0 0.0
    %v1319 = vand.u32 %v111, 4294901760
    %v1320 = vsub.f32 %v111, %v1319
    %v1321 = vand.u32 %v1320, 4294901760
    %v1322 = vsub.f32 %v1320, %v1321
    %v1323 = vand.u32 %v1322, 4294901760
    %1324 = vmatpush1.msra.mxu0 %v1323
    %1325 = vmatprep.subr.mxu0 0.0
    %v1326 = vand.u32 %v112, 4294901760
    %v1327 = vsub.f32 %v112, %v1326
    %v1328 = vand.u32 %v1327, 4294901760
    %v1329 = vsub.f32 %v1327, %v1328
    %v1330 = vand.u32 %v1329, 4294901760
    %1331 = vmatpush1.msra.mxu0 %v1330
    %1332 = vmatprep.subr.mxu0 0.0
    %v1333 = vand.u32 %v113, 4294901760
    %v1334 = vsub.f32 %v113, %v1333
    %v1335 = vand.u32 %v1334, 4294901760
    %v1336 = vsub.f32 %v1334, %v1335
    %v1337 = vand.u32 %v1336, 4294901760
    %1338 = vmatpush1.msra.mxu0 %v1337
    %1339 = vmatprep.subr.mxu0 0.0
    %v1340 = vand.u32 %v114, 4294901760
    %v1341 = vsub.f32 %v114, %v1340
    %v1342 = vand.u32 %v1341, 4294901760
    %v1343 = vsub.f32 %v1341, %v1342
    %v1344 = vand.u32 %v1343, 4294901760
    %1345 = vmatpush1.msra.mxu0 %v1344
    %1346 = vmatprep.subr.mxu0 0.0
    %v1347 = vand.u32 %v115, 4294901760
    %v1348 = vsub.f32 %v115, %v1347
    %v1349 = vand.u32 %v1348, 4294901760
    %v1350 = vsub.f32 %v1348, %v1349
    %v1351 = vand.u32 %v1350, 4294901760
    %1352 = vmatpush1.msra.mxu0 %v1351
    %1353 = vmatprep.subr.mxu0 0.0
    %v1354 = vand.u32 %v116, 4294901760
    %v1355 = vsub.f32 %v116, %v1354
    %v1356 = vand.u32 %v1355, 4294901760
    %v1357 = vsub.f32 %v1355, %v1356
    %v1358 = vand.u32 %v1357, 4294901760
    %1359 = vmatpush1.msra.mxu0 %v1358
    %1360 = vmatprep.subr.mxu0 0.0
    %v1361 = vand.u32 %v117, 4294901760
    %v1362 = vsub.f32 %v117, %v1361
    %v1363 = vand.u32 %v1362, 4294901760
    %v1364 = vsub.f32 %v1362, %v1363
    %v1365 = vand.u32 %v1364, 4294901760
    %1366 = vmatpush1.msra.mxu0 %v1365
    %1367 = vmatprep.subr.mxu0 0.0
    %v1368 = vand.u32 %v118, 4294901760
    %v1369 = vsub.f32 %v118, %v1368
    %v1370 = vand.u32 %v1369, 4294901760
    %v1371 = vsub.f32 %v1369, %v1370
    %v1372 = vand.u32 %v1371, 4294901760
    %1373 = vmatpush1.msra.mxu0 %v1372
    %1374 = vmatprep.subr.mxu0 0.0
    %v1375 = vand.u32 %v119, 4294901760
    %v1376 = vsub.f32 %v119, %v1375
    %v1377 = vand.u32 %v1376, 4294901760
    %v1378 = vsub.f32 %v1376, %v1377
    %v1379 = vand.u32 %v1378, 4294901760
    %1380 = vmatpush1.msra.mxu0 %v1379
    %1381 = vmatprep.subr.mxu0 0.0
    %v1382 = vand.u32 %v120, 4294901760
    %v1383 = vsub.f32 %v120, %v1382
    %v1384 = vand.u32 %v1383, 4294901760
    %v1385 = vsub.f32 %v1383, %v1384
    %v1386 = vand.u32 %v1385, 4294901760
    %1387 = vmatpush1.msra.mxu0 %v1386
    %1388 = vmatprep.subr.mxu0 0.0
    %v1389 = vand.u32 %v121, 4294901760
    %v1390 = vsub.f32 %v121, %v1389
    %v1391 = vand.u32 %v1390, 4294901760
    %v1392 = vsub.f32 %v1390, %v1391
    %v1393 = vand.u32 %v1392, 4294901760
    %1394 = vmatpush1.msra.mxu0 %v1393
    %1395 = vmatprep.subr.mxu0 0.0
    %v1396 = vand.u32 %v122, 4294901760
    %v1397 = vsub.f32 %v122, %v1396
    %v1398 = vand.u32 %v1397, 4294901760
    %v1399 = vsub.f32 %v1397, %v1398
    %v1400 = vand.u32 %v1399, 4294901760
    %1401 = vmatpush1.msra.mxu0 %v1400
    %1402 = vmatprep.subr.mxu0 0.0
    %1403 = vmatpush1.msra.mxu0 0.0
    %1404 = vmatprep.subr.mxu0 0.0
    %1405 = vmatpush1.msra.mxu0 0.0
    %1406 = vmatprep.subr.mxu0 0.0
    %1407 = vmatpush1.msra.mxu0 0.0
    %1408 = vmatprep.subr.mxu0 0.0
    %1409 = vmatpush1.msra.mxu0 0.0
    %1410 = vmatprep.subr.mxu0 0.0
    %1411 = vmatpush1.msra.mxu0 0.0
    %1412 = vmatprep.subr.mxu0 0.0
    %1413 = vmatpush1.msra.mxu0 0.0
    %1414 = vmatprep.subr.mxu0 0.0
    %1415 = vmatpush1.msra.mxu0 0.0
    %1416 = vmatprep.subr.mxu0 0.0
    %1417 = vmatpush1.msra.mxu0 0.0
    %1418 = vmatprep.subr.mxu0 0.0
    %1419 = vmatpush1.msra.mxu0 0.0
    %1420 = vmatprep.subr.mxu0 0.0
    %1421 = vmatpush1.msra.mxu0 0.0
    %1422 = vmatprep.subr.mxu0 0.0
    %1423 = vmatpush1.msra.mxu0 0.0
    %1424 = vmatprep.subr.mxu0 0.0
    %1425 = vmatpush1.msra.mxu0 0.0
    %1426 = vmatprep.subr.mxu0 0.0
    %1427 = vmatpush1.msra.mxu0 0.0
    %1428 = vmatprep.subr.mxu0 0.0
    %1429 = vmatpush1.msra.mxu0 0.0
    %1430 = vmatprep.subr.mxu0 0.0
    %1431 = vmatpush1.msra.mxu0 0.0
    %1432 = vmatprep.subr.mxu0 0.0
    %1433 = vmatpush1.msra.mxu0 0.0
    %1434 = vmatprep.mubr.f32.mxu0 0.0
    %v1435 = vand.u32 %v99, 4294901760
    %1436 = vmatmul.mubr.f32.gmra.mrb[0].mxu0 %v1435
    %v1437 = vpop.f32.mrb[0].mxu0
    %v1438 = vadd.f32 %v1217, %v1437
    %v1439 = vpop.f32.mrb[0].mxu0
    %1440 = vmatprep.mubr.f32.mxu0 0.0
    %v1441 = vand.u32 %v100, 4294901760
    %1442 = vmatmul.mubr.f32.gmra.mrb[0].mxu0 %v1441
    %v1443 = vpop.f32.mrb[0].mxu0
    %v1444 = vadd.f32 %v1227, %v1443
    %v1445 = vpop.f32.mrb[0].mxu0
    %1446 = vmatprep.mubr.f32.mxu0 0.0
    %v1447 = vand.u32 %v101, 4294901760
    %1448 = vmatmul.mubr.f32.gmra.mrb[0].mxu0 %v1447
    %v1449 = vpop.f32.mrb[0].mxu0
    %v1450 = vadd.f32 %v1237, %v1449
    %v1451 = vpop.f32.mrb[0].mxu0
    %1452 = vmatprep.mubr.f32.mxu0 0.0
    %v1453 = vand.u32 %v102, 4294901760
    %1454 = vmatmul.mubr.f32.gmra.mrb[0].mxu0 %v1453
    %v1455 = vpop.f32.mrb[0].mxu0
    %v1456 = vadd.f32 %v1247, %v1455
    %v1457 = vpop.f32.mrb[0].mxu0
    %1458 = vmatprep.mubr.f32.mxu0 0.0
    %v1459 = vand.u32 %v103, 4294901760
    %1460 = vmatmul.mubr.f32.gmra.mrb[0].mxu0 %v1459
    %v1461 = vpop.f32.mrb[0].mxu0
    %v1462 = vadd.f32 %v1257, %v1461
    %v1463 = vpop.f32.mrb[0].mxu0
    %1464 = vmatprep.mubr.f32.mxu0 0.0
    %v1465 = vand.u32 %v104, 4294901760
    %1466 = vmatmul.mubr.f32.gmra.mrb[0].mxu0 %v1465
    %v1467 = vpop.f32.mrb[0].mxu0
    %v1468 = vadd.f32 %v1267, %v1467
    %v1469 = vpop.f32.mrb[0].mxu0
    %1470 = vmatprep.mubr.f32.mxu0 0.0
    %v1471 = vand.u32 %v105, 4294901760
    %1472 = vmatmul.mubr.f32.gmra.mrb[0].mxu0 %v1471
    %v1473 = vpop.f32.mrb[0].mxu0
    %v1474 = vadd.f32 %v1277, %v1473
    %v1475 = vpop.f32.mrb[0].mxu0
    %1476 = vmatprep.mubr.f32.mxu0 0.0
    %v1477 = vand.u32 %v106, 4294901760
    %1478 = vmatmul.mubr.f32.gmra.mrb[0].mxu0 %v1477
    %v1479 = vpop.f32.mrb[0].mxu0
    %v1480 = vadd.f32 %v1287, %v1479
    %v1481 = vpop.f32.mrb[0].mxu0
    %1482 = vdwg.mxu0
    %1483 = vmatprep.subr.mxu0 0.0
    %v1484 = vand.u32 %v107, 4294901760
    %v1485 = vsub.f32 %v107, %v1484
    %1486 = vmatpush1.msra.mxu0 %v1485
    %1487 = vmatprep.subr.mxu0 0.0
    %v1488 = vand.u32 %v108, 4294901760
    %v1489 = vsub.f32 %v108, %v1488
    %1490 = vmatpush1.msra.mxu0 %v1489
    %1491 = vmatprep.subr.mxu0 0.0
    %v1492 = vand.u32 %v109, 4294901760
    %v1493 = vsub.f32 %v109, %v1492
    %1494 = vmatpush1.msra.mxu0 %v1493
    %1495 = vmatprep.subr.mxu0 0.0
    %v1496 = vand.u32 %v110, 4294901760
    %v1497 = vsub.f32 %v110, %v1496
    %1498 = vmatpush1.msra.mxu0 %v1497
    %1499 = vmatprep.subr.mxu0 0.0
    %v1500 = vand.u32 %v111, 4294901760
    %v1501 = vsub.f32 %v111, %v1500
    %1502 = vmatpush1.msra.mxu0 %v1501
    %1503 = vmatprep.subr.mxu0 0.0
    %v1504 = vand.u32 %v112, 4294901760
    %v1505 = vsub.f32 %v112, %v1504
    %1506 = vmatpush1.msra.mxu0 %v1505
    %1507 = vmatprep.subr.mxu0 0.0
    %v1508 = vand.u32 %v113, 4294901760
    %v1509 = vsub.f32 %v113, %v1508
    %1510 = vmatpush1.msra.mxu0 %v1509
    %1511 = vmatprep.subr.mxu0 0.0
    %v1512 = vand.u32 %v114, 4294901760
    %v1513 = vsub.f32 %v114, %v1512
    %1514 = vmatpush1.msra.mxu0 %v1513
    %1515 = vmatprep.subr.mxu0 0.0
    %v1516 = vand.u32 %v115, 4294901760
    %v1517 = vsub.f32 %v115, %v1516
    %1518 = vmatpush1.msra.mxu0 %v1517
    %1519 = vmatprep.subr.mxu0 0.0
    %v1520 = vand.u32 %v116, 4294901760
    %v1521 = vsub.f32 %v116, %v1520
    %1522 = vmatpush1.msra.mxu0 %v1521
    %1523 = vmatprep.subr.mxu0 0.0
    %v1524 = vand.u32 %v117, 4294901760
    %v1525 = vsub.f32 %v117, %v1524
    %1526 = vmatpush1.msra.mxu0 %v1525
    %1527 = vmatprep.subr.mxu0 0.0
    %v1528 = vand.u32 %v118, 4294901760
    %v1529 = vsub.f32 %v118, %v1528
    %1530 = vmatpush1.msra.mxu0 %v1529
    %1531 = vmatprep.subr.mxu0 0.0
    %v1532 = vand.u32 %v119, 4294901760
    %v1533 = vsub.f32 %v119, %v1532
    %1534 = vmatpush1.msra.mxu0 %v1533
    %1535 = vmatprep.subr.mxu0 0.0
    %v1536 = vand.u32 %v120, 4294901760
    %v1537 = vsub.f32 %v120, %v1536
    %1538 = vmatpush1.msra.mxu0 %v1537
    %1539 = vmatprep.subr.mxu0 0.0
    %v1540 = vand.u32 %v121, 4294901760
    %v1541 = vsub.f32 %v121, %v1540
    %1542 = vmatpush1.msra.mxu0 %v1541
    %1543 = vmatprep.subr.mxu0 0.0
    %v1544 = vand.u32 %v122, 4294901760
    %v1545 = vsub.f32 %v122, %v1544
    %1546 = vmatpush1.msra.mxu0 %v1545
    %1547 = vmatprep.subr.mxu0 0.0
    %1548 = vmatpush1.msra.mxu0 0.0
    %1549 = vmatprep.subr.mxu0 0.0
    %1550 = vmatpush1.msra.mxu0 0.0
    %1551 = vmatprep.subr.mxu0 0.0
    %1552 = vmatpush1.msra.mxu0 0.0
    %1553 = vmatprep.subr.mxu0 0.0
    %1554 = vmatpush1.msra.mxu0 0.0
    %1555 = vmatprep.subr.mxu0 0.0
    %1556 = vmatpush1.msra.mxu0 0.0
    %1557 = vmatprep.subr.mxu0 0.0
    %1558 = vmatpush1.msra.mxu0 0.0
    %1559 = vmatprep.subr.mxu0 0.0
    %1560 = vmatpush1.msra.mxu0 0.0
    %1561 = vmatprep.subr.mxu0 0.0
    %1562 = vmatpush1.msra.mxu0 0.0
    %1563 = vmatprep.subr.mxu0 0.0
    %1564 = vmatpush1.msra.mxu0 0.0
    %1565 = vmatprep.subr.mxu0 0.0
    %1566 = vmatpush1.msra.mxu0 0.0
    %1567 = vmatprep.subr.mxu0 0.0
    %1568 = vmatpush1.msra.mxu0 0.0
    %1569 = vmatprep.subr.mxu0 0.0
    %1570 = vmatpush1.msra.mxu0 0.0
    %1571 = vmatprep.subr.mxu0 0.0
    %1572 = vmatpush1.msra.mxu0 0.0
    %1573 = vmatprep.subr.mxu0 0.0
    %1574 = vmatpush1.msra.mxu0 0.0
    %1575 = vmatprep.subr.mxu0 0.0
    %1576 = vmatpush1.msra.mxu0 0.0
    %1577 = vmatprep.subr.mxu0 0.0
    %1578 = vmatpush1.msra.mxu0 0.0
    %1579 = vmatprep.mubr.f32.mxu0 0.0
    %v1580 = vand.u32 %v99, 4294901760
    %v1581 = vsub.f32 %v99, %v1580
    %1582 = vmatmul.mubr.f32.gmra.mrb[0].mxu0 %v1581
    %v1583 = vpop.f32.mrb[0].mxu0
    %v1584 = vadd.f32 %v1438, %v1583
    %v1585 = vpop.f32.mrb[0].mxu0
    %1586 = vmatprep.mubr.f32.mxu0 0.0
    %v1587 = vand.u32 %v100, 4294901760
    %v1588 = vsub.f32 %v100, %v1587
    %1589 = vmatmul.mubr.f32.gmra.mrb[0].mxu0 %v1588
    %v1590 = vpop.f32.mrb[0].mxu0
    %v1591 = vadd.f32 %v1444, %v1590
    %v1592 = vpop.f32.mrb[0].mxu0
    %1593 = vmatprep.mubr.f32.mxu0 0.0
    %v1594 = vand.u32 %v101, 4294901760
    %v1595 = vsub.f32 %v101, %v1594
    %1596 = vmatmul.mubr.f32.gmra.mrb[0].mxu0 %v1595
    %v1597 = vpop.f32.mrb[0].mxu0
    %v1598 = vadd.f32 %v1450, %v1597
    %v1599 = vpop.f32.mrb[0].mxu0
    %1600 = vmatprep.mubr.f32.mxu0 0.0
    %v1601 = vand.u32 %v102, 4294901760
    %v1602 = vsub.f32 %v102, %v1601
    %1603 = vmatmul.mubr.f32.gmra.mrb[0].mxu0 %v1602
    %v1604 = vpop.f32.mrb[0].mxu0
    %v1605 = vadd.f32 %v1456, %v1604
    %v1606 = vpop.f32.mrb[0].mxu0
    %1607 = vmatprep.mubr.f32.mxu0 0.0
    %v1608 = vand.u32 %v103, 4294901760
    %v1609 = vsub.f32 %v103, %v1608
    %1610 = vmatmul.mubr.f32.gmra.mrb[0].mxu0 %v1609
    %v1611 = vpop.f32.mrb[0].mxu0
    %v1612 = vadd.f32 %v1462, %v1611
    %v1613 = vpop.f32.mrb[0].mxu0
    %1614 = vmatprep.mubr.f32.mxu0 0.0
    %v1615 = vand.u32 %v104, 4294901760
    %v1616 = vsub.f32 %v104, %v1615
    %1617 = vmatmul.mubr.f32.gmra.mrb[0].mxu0 %v1616
    %v1618 = vpop.f32.mrb[0].mxu0
    %v1619 = vadd.f32 %v1468, %v1618
    %v1620 = vpop.f32.mrb[0].mxu0
    %1621 = vmatprep.mubr.f32.mxu0 0.0
    %v1622 = vand.u32 %v105, 4294901760
    %v1623 = vsub.f32 %v105, %v1622
    %1624 = vmatmul.mubr.f32.gmra.mrb[0].mxu0 %v1623
    %v1625 = vpop.f32.mrb[0].mxu0
    %v1626 = vadd.f32 %v1474, %v1625
    %v1627 = vpop.f32.mrb[0].mxu0
    %1628 = vmatprep.mubr.f32.mxu0 0.0
    %v1629 = vand.u32 %v106, 4294901760
    %v1630 = vsub.f32 %v106, %v1629
    %1631 = vmatmul.mubr.f32.gmra.mrb[0].mxu0 %v1630
    %v1632 = vpop.f32.mrb[0].mxu0
    %v1633 = vadd.f32 %v1480, %v1632
    %v1634 = vpop.f32.mrb[0].mxu0
    %1635 = vdwg.mxu0
    %1636 = vmatprep.subr.mxu0 0.0
    %v1637 = vand.u32 %v107, 4294901760
    %1638 = vmatpush1.msra.mxu0 %v1637
    %1639 = vmatprep.subr.mxu0 0.0
    %v1640 = vand.u32 %v108, 4294901760
    %1641 = vmatpush1.msra.mxu0 %v1640
    %1642 = vmatprep.subr.mxu0 0.0
    %v1643 = vand.u32 %v109, 4294901760
    %1644 = vmatpush1.msra.mxu0 %v1643
    %1645 = vmatprep.subr.mxu0 0.0
    %v1646 = vand.u32 %v110, 4294901760
    %1647 = vmatpush1.msra.mxu0 %v1646
    %1648 = vmatprep.subr.mxu0 0.0
    %v1649 = vand.u32 %v111, 4294901760
    %1650 = vmatpush1.msra.mxu0 %v1649
    %1651 = vmatprep.subr.mxu0 0.0
    %v1652 = vand.u32 %v112, 4294901760
    %1653 = vmatpush1.msra.mxu0 %v1652
    %1654 = vmatprep.subr.mxu0 0.0
    %v1655 = vand.u32 %v113, 4294901760
    %1656 = vmatpush1.msra.mxu0 %v1655
    %1657 = vmatprep.subr.mxu0 0.0
    %v1658 = vand.u32 %v114, 4294901760
    %1659 = vmatpush1.msra.mxu0 %v1658
    %1660 = vmatprep.subr.mxu0 0.0
    %v1661 = vand.u32 %v115, 4294901760
    %1662 = vmatpush1.msra.mxu0 %v1661
    %1663 = vmatprep.subr.mxu0 0.0
    %v1664 = vand.u32 %v116, 4294901760
    %1665 = vmatpush1.msra.mxu0 %v1664
    %1666 = vmatprep.subr.mxu0 0.0
    %v1667 = vand.u32 %v117, 4294901760
    %1668 = vmatpush1.msra.mxu0 %v1667
    %1669 = vmatprep.subr.mxu0 0.0
    %v1670 = vand.u32 %v118, 4294901760
    %1671 = vmatpush1.msra.mxu0 %v1670
    %1672 = vmatprep.subr.mxu0 0.0
    %v1673 = vand.u32 %v119, 4294901760
    %1674 = vmatpush1.msra.mxu0 %v1673
    %1675 = vmatprep.subr.mxu0 0.0
    %v1676 = vand.u32 %v120, 4294901760
    %1677 = vmatpush1.msra.mxu0 %v1676
    %1678 = vmatprep.subr.mxu0 0.0
    %v1679 = vand.u32 %v121, 4294901760
    %1680 = vmatpush1.msra.mxu0 %v1679
    %1681 = vmatprep.subr.mxu0 0.0
    %v1682 = vand.u32 %v122, 4294901760
    %1683 = vmatpush1.msra.mxu0 %v1682
    %1684 = vmatprep.subr.mxu0 0.0
    %1685 = vmatpush1.msra.mxu0 0.0
    %1686 = vmatprep.subr.mxu0 0.0
    %1687 = vmatpush1.msra.mxu0 0.0
    %1688 = vmatprep.subr.mxu0 0.0
    %1689 = vmatpush1.msra.mxu0 0.0
    %1690 = vmatprep.subr.mxu0 0.0
    %1691 = vmatpush1.msra.mxu0 0.0
    %1692 = vmatprep.subr.mxu0 0.0
    %1693 = vmatpush1.msra.mxu0 0.0
    %1694 = vmatprep.subr.mxu0 0.0
    %1695 = vmatpush1.msra.mxu0 0.0
    %1696 = vmatprep.subr.mxu0 0.0
    %1697 = vmatpush1.msra.mxu0 0.0
    %1698 = vmatprep.subr.mxu0 0.0
    %1699 = vmatpush1.msra.mxu0 0.0
    %1700 = vmatprep.subr.mxu0 0.0
    %1701 = vmatpush1.msra.mxu0 0.0
    %1702 = vmatprep.subr.mxu0 0.0
    %1703 = vmatpush1.msra.mxu0 0.0
    %1704 = vmatprep.subr.mxu0 0.0
    %1705 = vmatpush1.msra.mxu0 0.0
    %1706 = vmatprep.subr.mxu0 0.0
    %1707 = vmatpush1.msra.mxu0 0.0
    %1708 = vmatprep.subr.mxu0 0.0
    %1709 = vmatpush1.msra.mxu0 0.0
    %1710 = vmatprep.subr.mxu0 0.0
    %1711 = vmatpush1.msra.mxu0 0.0
    %1712 = vmatprep.subr.mxu0 0.0
    %1713 = vmatpush1.msra.mxu0 0.0
    %1714 = vmatprep.subr.mxu0 0.0
    %1715 = vmatpush1.msra.mxu0 0.0
    %1716 = vmatprep.mubr.f32.mxu0 0.0
    %v1717 = vand.u32 %v99, 4294901760
    %v1718 = vsub.f32 %v99, %v1717
    %v1719 = vand.u32 %v1718, 4294901760
    %1720 = vmatmul.mubr.f32.gmra.mrb[0].mxu0 %v1719
    %v1721 = vpop.f32.mrb[0].mxu0
    %v1722 = vadd.f32 %v1584, %v1721
    %v1723 = vpop.f32.mrb[0].mxu0
    %1724 = vmatprep.mubr.f32.mxu0 0.0
    %v1725 = vand.u32 %v100, 4294901760
    %v1726 = vsub.f32 %v100, %v1725
    %v1727 = vand.u32 %v1726, 4294901760
    %1728 = vmatmul.mubr.f32.gmra.mrb[0].mxu0 %v1727
    %v1729 = vpop.f32.mrb[0].mxu0
    %v1730 = vadd.f32 %v1591, %v1729
    %v1731 = vpop.f32.mrb[0].mxu0
    %1732 = vmatprep.mubr.f32.mxu0 0.0
    %v1733 = vand.u32 %v101, 4294901760
    %v1734 = vsub.f32 %v101, %v1733
    %v1735 = vand.u32 %v1734, 4294901760
    %1736 = vmatmul.mubr.f32.gmra.mrb[0].mxu0 %v1735
    %v1737 = vpop.f32.mrb[0].mxu0
    %v1738 = vadd.f32 %v1598, %v1737
    %v1739 = vpop.f32.mrb[0].mxu0
    %1740 = vmatprep.mubr.f32.mxu0 0.0
    %v1741 = vand.u32 %v102, 4294901760
    %v1742 = vsub.f32 %v102, %v1741
    %v1743 = vand.u32 %v1742, 4294901760
    %1744 = vmatmul.mubr.f32.gmra.mrb[0].mxu0 %v1743
    %v1745 = vpop.f32.mrb[0].mxu0
    %v1746 = vadd.f32 %v1605, %v1745
    %v1747 = vpop.f32.mrb[0].mxu0
    %1748 = vmatprep.mubr.f32.mxu0 0.0
    %v1749 = vand.u32 %v103, 4294901760
    %v1750 = vsub.f32 %v103, %v1749
    %v1751 = vand.u32 %v1750, 4294901760
    %1752 = vmatmul.mubr.f32.gmra.mrb[0].mxu0 %v1751
    %v1753 = vpop.f32.mrb[0].mxu0
    %v1754 = vadd.f32 %v1612, %v1753
    %v1755 = vpop.f32.mrb[0].mxu0
    %1756 = vmatprep.mubr.f32.mxu0 0.0
    %v1757 = vand.u32 %v104, 4294901760
    %v1758 = vsub.f32 %v104, %v1757
    %v1759 = vand.u32 %v1758, 4294901760
    %1760 = vmatmul.mubr.f32.gmra.mrb[0].mxu0 %v1759
    %v1761 = vpop.f32.mrb[0].mxu0
    %v1762 = vadd.f32 %v1619, %v1761
    %v1763 = vpop.f32.mrb[0].mxu0
    %1764 = vmatprep.mubr.f32.mxu0 0.0
    %v1765 = vand.u32 %v105, 4294901760
    %v1766 = vsub.f32 %v105, %v1765
    %v1767 = vand.u32 %v1766, 4294901760
    %1768 = vmatmul.mubr.f32.gmra.mrb[0].mxu0 %v1767
    %v1769 = vpop.f32.mrb[0].mxu0
    %v1770 = vadd.f32 %v1626, %v1769
    %v1771 = vpop.f32.mrb[0].mxu0
    %1772 = vmatprep.mubr.f32.mxu0 0.0
    %v1773 = vand.u32 %v106, 4294901760
    %v1774 = vsub.f32 %v106, %v1773
    %v1775 = vand.u32 %v1774, 4294901760
    %1776 = vmatmul.mubr.f32.gmra.mrb[0].mxu0 %v1775
    %v1777 = vpop.f32.mrb[0].mxu0
    %v1778 = vadd.f32 %v1633, %v1777
    %v1779 = vpop.f32.mrb[0].mxu0
    %1780 = vdwg.mxu0
    %1781 = vmatprep.subr.mxu0 0.0
    %v1782 = vand.u32 %v107, 4294901760
    %v1783 = vsub.f32 %v107, %v1782
    %v1784 = vand.u32 %v1783, 4294901760
    %1785 = vmatpush1.msra.mxu0 %v1784
    %1786 = vmatprep.subr.mxu0 0.0
    %v1787 = vand.u32 %v108, 4294901760
    %v1788 = vsub.f32 %v108, %v1787
    %v1789 = vand.u32 %v1788, 4294901760
    %1790 = vmatpush1.msra.mxu0 %v1789
    %1791 = vmatprep.subr.mxu0 0.0
    %v1792 = vand.u32 %v109, 4294901760
    %v1793 = vsub.f32 %v109, %v1792
    %v1794 = vand.u32 %v1793, 4294901760
    %1795 = vmatpush1.msra.mxu0 %v1794
    %1796 = vmatprep.subr.mxu0 0.0
    %v1797 = vand.u32 %v110, 4294901760
    %v1798 = vsub.f32 %v110, %v1797
    %v1799 = vand.u32 %v1798, 4294901760
    %1800 = vmatpush1.msra.mxu0 %v1799
    %1801 = vmatprep.subr.mxu0 0.0
    %v1802 = vand.u32 %v111, 4294901760
    %v1803 = vsub.f32 %v111, %v1802
    %v1804 = vand.u32 %v1803, 4294901760
    %1805 = vmatpush1.msra.mxu0 %v1804
    %1806 = vmatprep.subr.mxu0 0.0
    %v1807 = vand.u32 %v112, 4294901760
    %v1808 = vsub.f32 %v112, %v1807
    %v1809 = vand.u32 %v1808, 4294901760
    %1810 = vmatpush1.msra.mxu0 %v1809
    %1811 = vmatprep.subr.mxu0 0.0
    %v1812 = vand.u32 %v113, 4294901760
    %v1813 = vsub.f32 %v113, %v1812
    %v1814 = vand.u32 %v1813, 4294901760
    %1815 = vmatpush1.msra.mxu0 %v1814
    %1816 = vmatprep.subr.mxu0 0.0
    %v1817 = vand.u32 %v114, 4294901760
    %v1818 = vsub.f32 %v114, %v1817
    %v1819 = vand.u32 %v1818, 4294901760
    %1820 = vmatpush1.msra.mxu0 %v1819
    %1821 = vmatprep.subr.mxu0 0.0
    %v1822 = vand.u32 %v115, 4294901760
    %v1823 = vsub.f32 %v115, %v1822
    %v1824 = vand.u32 %v1823, 4294901760
    %1825 = vmatpush1.msra.mxu0 %v1824
    %1826 = vmatprep.subr.mxu0 0.0
    %v1827 = vand.u32 %v116, 4294901760
    %v1828 = vsub.f32 %v116, %v1827
    %v1829 = vand.u32 %v1828, 4294901760
    %1830 = vmatpush1.msra.mxu0 %v1829
    %1831 = vmatprep.subr.mxu0 0.0
    %v1832 = vand.u32 %v117, 4294901760
    %v1833 = vsub.f32 %v117, %v1832
    %v1834 = vand.u32 %v1833, 4294901760
    %1835 = vmatpush1.msra.mxu0 %v1834
    %1836 = vmatprep.subr.mxu0 0.0
    %v1837 = vand.u32 %v118, 4294901760
    %v1838 = vsub.f32 %v118, %v1837
    %v1839 = vand.u32 %v1838, 4294901760
    %1840 = vmatpush1.msra.mxu0 %v1839
    %1841 = vmatprep.subr.mxu0 0.0
    %v1842 = vand.u32 %v119, 4294901760
    %v1843 = vsub.f32 %v119, %v1842
    %v1844 = vand.u32 %v1843, 4294901760
    %1845 = vmatpush1.msra.mxu0 %v1844
    %1846 = vmatprep.subr.mxu0 0.0
    %v1847 = vand.u32 %v120, 4294901760
    %v1848 = vsub.f32 %v120, %v1847
    %v1849 = vand.u32 %v1848, 4294901760
    %1850 = vmatpush1.msra.mxu0 %v1849
    %1851 = vmatprep.subr.mxu0 0.0
    %v1852 = vand.u32 %v121, 4294901760
    %v1853 = vsub.f32 %v121, %v1852
    %v1854 = vand.u32 %v1853, 4294901760
    %1855 = vmatpush1.msra.mxu0 %v1854
    %1856 = vmatprep.subr.mxu0 0.0
    %v1857 = vand.u32 %v122, 4294901760
    %v1858 = vsub.f32 %v122, %v1857
    %v1859 = vand.u32 %v1858, 4294901760
    %1860 = vmatpush1.msra.mxu0 %v1859
    %1861 = vmatprep.subr.mxu0 0.0
    %1862 = vmatpush1.msra.mxu0 0.0
    %1863 = vmatprep.subr.mxu0 0.0
    %1864 = vmatpush1.msra.mxu0 0.0
    %1865 = vmatprep.subr.mxu0 0.0
    %1866 = vmatpush1.msra.mxu0 0.0
    %1867 = vmatprep.subr.mxu0 0.0
    %1868 = vmatpush1.msra.mxu0 0.0
    %1869 = vmatprep.subr.mxu0 0.0
    %1870 = vmatpush1.msra.mxu0 0.0
    %1871 = vmatprep.subr.mxu0 0.0
    %1872 = vmatpush1.msra.mxu0 0.0
    %1873 = vmatprep.subr.mxu0 0.0
    %1874 = vmatpush1.msra.mxu0 0.0
    %1875 = vmatprep.subr.mxu0 0.0
    %1876 = vmatpush1.msra.mxu0 0.0
    %1877 = vmatprep.subr.mxu0 0.0
    %1878 = vmatpush1.msra.mxu0 0.0
    %1879 = vmatprep.subr.mxu0 0.0
    %1880 = vmatpush1.msra.mxu0 0.0
    %1881 = vmatprep.subr.mxu0 0.0
    %1882 = vmatpush1.msra.mxu0 0.0
    %1883 = vmatprep.subr.mxu0 0.0
    %1884 = vmatpush1.msra.mxu0 0.0
    %1885 = vmatprep.subr.mxu0 0.0
    %1886 = vmatpush1.msra.mxu0 0.0
    %1887 = vmatprep.subr.mxu0 0.0
    %1888 = vmatpush1.msra.mxu0 0.0
    %1889 = vmatprep.subr.mxu0 0.0
    %1890 = vmatpush1.msra.mxu0 0.0
    %1891 = vmatprep.subr.mxu0 0.0
    %1892 = vmatpush1.msra.mxu0 0.0
    %1893 = vmatprep.mubr.f32.mxu0 0.0
    %v1894 = vand.u32 %v99, 4294901760
    %1895 = vmatmul.mubr.f32.gmra.mrb[0].mxu0 %v1894
    %v1896 = vpop.f32.mrb[0].mxu0
    %v1897 = vadd.f32 %v1722, %v1896
    %v1898 = vpop.f32.mrb[0].mxu0
    %1899 = vmatprep.mubr.f32.mxu0 0.0
    %v1900 = vand.u32 %v100, 4294901760
    %1901 = vmatmul.mubr.f32.gmra.mrb[0].mxu0 %v1900
    %v1902 = vpop.f32.mrb[0].mxu0
    %v1903 = vadd.f32 %v1730, %v1902
    %v1904 = vpop.f32.mrb[0].mxu0
    %1905 = vmatprep.mubr.f32.mxu0 0.0
    %v1906 = vand.u32 %v101, 4294901760
    %1907 = vmatmul.mubr.f32.gmra.mrb[0].mxu0 %v1906
    %v1908 = vpop.f32.mrb[0].mxu0
    %v1909 = vadd.f32 %v1738, %v1908
    %v1910 = vpop.f32.mrb[0].mxu0
    %1911 = vmatprep.mubr.f32.mxu0 0.0
    %v1912 = vand.u32 %v102, 4294901760
    %1913 = vmatmul.mubr.f32.gmra.mrb[0].mxu0 %v1912
    %v1914 = vpop.f32.mrb[0].mxu0
    %v1915 = vadd.f32 %v1746, %v1914
    %v1916 = vpop.f32.mrb[0].mxu0
    %1917 = vmatprep.mubr.f32.mxu0 0.0
    %v1918 = vand.u32 %v103, 4294901760
    %1919 = vmatmul.mubr.f32.gmra.mrb[0].mxu0 %v1918
    %v1920 = vpop.f32.mrb[0].mxu0
    %v1921 = vadd.f32 %v1754, %v1920
    %v1922 = vpop.f32.mrb[0].mxu0
    %1923 = vmatprep.mubr.f32.mxu0 0.0
    %v1924 = vand.u32 %v104, 4294901760
    %1925 = vmatmul.mubr.f32.gmra.mrb[0].mxu0 %v1924
    %v1926 = vpop.f32.mrb[0].mxu0
    %v1927 = vadd.f32 %v1762, %v1926
    %v1928 = vpop.f32.mrb[0].mxu0
    %1929 = vmatprep.mubr.f32.mxu0 0.0
    %v1930 = vand.u32 %v105, 4294901760
    %1931 = vmatmul.mubr.f32.gmra.mrb[0].mxu0 %v1930
    %v1932 = vpop.f32.mrb[0].mxu0
    %v1933 = vadd.f32 %v1770, %v1932
    %v1934 = vpop.f32.mrb[0].mxu0
    %1935 = vmatprep.mubr.f32.mxu0 0.0
    %v1936 = vand.u32 %v106, 4294901760
    %1937 = vmatmul.mubr.f32.gmra.mrb[0].mxu0 %v1936
    %v1938 = vpop.f32.mrb[0].mxu0
    %v1939 = vadd.f32 %v1778, %v1938
    %v1940 = vpop.f32.mrb[0].mxu0
    %1941 = vdwg.mxu0
    %1942 = vmatprep.subr.mxu0 0.0
    %v1943 = vand.u32 %v107, 4294901760
    %1944 = vmatpush1.msra.mxu0 %v1943
    %1945 = vmatprep.subr.mxu0 0.0
    %v1946 = vand.u32 %v108, 4294901760
    %1947 = vmatpush1.msra.mxu0 %v1946
    %1948 = vmatprep.subr.mxu0 0.0
    %v1949 = vand.u32 %v109, 4294901760
    %1950 = vmatpush1.msra.mxu0 %v1949
    %1951 = vmatprep.subr.mxu0 0.0
    %v1952 = vand.u32 %v110, 4294901760
    %1953 = vmatpush1.msra.mxu0 %v1952
    %1954 = vmatprep.subr.mxu0 0.0
    %v1955 = vand.u32 %v111, 4294901760
    %1956 = vmatpush1.msra.mxu0 %v1955
    %1957 = vmatprep.subr.mxu0 0.0
    %v1958 = vand.u32 %v112, 4294901760
    %1959 = vmatpush1.msra.mxu0 %v1958
    %1960 = vmatprep.subr.mxu0 0.0
    %v1961 = vand.u32 %v113, 4294901760
    %1962 = vmatpush1.msra.mxu0 %v1961
    %1963 = vmatprep.subr.mxu0 0.0
    %v1964 = vand.u32 %v114, 4294901760
    %1965 = vmatpush1.msra.mxu0 %v1964
    %1966 = vmatprep.subr.mxu0 0.0
    %v1967 = vand.u32 %v115, 4294901760
    %1968 = vmatpush1.msra.mxu0 %v1967
    %1969 = vmatprep.subr.mxu0 0.0
    %v1970 = vand.u32 %v116, 4294901760
    %1971 = vmatpush1.msra.mxu0 %v1970
    %1972 = vmatprep.subr.mxu0 0.0
    %v1973 = vand.u32 %v117, 4294901760
    %1974 = vmatpush1.msra.mxu0 %v1973
    %1975 = vmatprep.subr.mxu0 0.0
    %v1976 = vand.u32 %v118, 4294901760
    %1977 = vmatpush1.msra.mxu0 %v1976
    %1978 = vmatprep.subr.mxu0 0.0
    %v1979 = vand.u32 %v119, 4294901760
    %1980 = vmatpush1.msra.mxu0 %v1979
    %1981 = vmatprep.subr.mxu0 0.0
    %v1982 = vand.u32 %v120, 4294901760
    %1983 = vmatpush1.msra.mxu0 %v1982
    %1984 = vmatprep.subr.mxu0 0.0
    %v1985 = vand.u32 %v121, 4294901760
    %1986 = vmatpush1.msra.mxu0 %v1985
    %1987 = vmatprep.subr.mxu0 0.0
    %v1988 = vand.u32 %v122, 4294901760
    %1989 = vmatpush1.msra.mxu0 %v1988
    %1990 = vmatprep.subr.mxu0 0.0
    %1991 = vmatpush1.msra.mxu0 0.0
    %1992 = vmatprep.subr.mxu0 0.0
    %1993 = vmatpush1.msra.mxu0 0.0
    %1994 = vmatprep.subr.mxu0 0.0
    %1995 = vmatpush1.msra.mxu0 0.0
    %1996 = vmatprep.subr.mxu0 0.0
    %1997 = vmatpush1.msra.mxu0 0.0
    %1998 = vmatprep.subr.mxu0 0.0
    %1999 = vmatpush1.msra.mxu0 0.0
    %2000 = vmatprep.subr.mxu0 0.0
    %2001 = vmatpush1.msra.mxu0 0.0
    %2002 = vmatprep.subr.mxu0 0.0
    %2003 = vmatpush1.msra.mxu0 0.0
    %2004 = vmatprep.subr.mxu0 0.0
    %2005 = vmatpush1.msra.mxu0 0.0
    %2006 = vmatprep.subr.mxu0 0.0
    %2007 = vmatpush1.msra.mxu0 0.0
    %2008 = vmatprep.subr.mxu0 0.0
    %2009 = vmatpush1.msra.mxu0 0.0
    %2010 = vmatprep.subr.mxu0 0.0
    %2011 = vmatpush1.msra.mxu0 0.0
    %2012 = vmatprep.subr.mxu0 0.0
    %2013 = vmatpush1.msra.mxu0 0.0
    %2014 = vmatprep.subr.mxu0 0.0
    %2015 = vmatpush1.msra.mxu0 0.0
    %2016 = vmatprep.subr.mxu0 0.0
    %2017 = vmatpush1.msra.mxu0 0.0
    %2018 = vmatprep.subr.mxu0 0.0
    %2019 = vmatpush1.msra.mxu0 0.0
    %2020 = vmatprep.subr.mxu0 0.0
    %2021 = vmatpush1.msra.mxu0 0.0
    %2022 = vmatprep.mubr.f32.mxu0 0.0
    %v2023 = vand.u32 %v99, 4294901760
    %2024 = vmatmul.mubr.f32.gmra.mrb[0].mxu0 %v2023
    %v2025 = vpop.f32.mrb[0].mxu0
    %v2026 = vadd.f32 %v1897, %v2025
    %v2027 = vpop.f32.mrb[0].mxu0
    %2028 = vmatprep.mubr.f32.mxu0 0.0
    %v2029 = vand.u32 %v100, 4294901760
    %2030 = vmatmul.mubr.f32.gmra.mrb[0].mxu0 %v2029
    %v2031 = vpop.f32.mrb[0].mxu0
    %v2032 = vadd.f32 %v1903, %v2031
    %v2033 = vpop.f32.mrb[0].mxu0
    %2034 = vmatprep.mubr.f32.mxu0 0.0
    %v2035 = vand.u32 %v101, 4294901760
    %2036 = vmatmul.mubr.f32.gmra.mrb[0].mxu0 %v2035
    %v2037 = vpop.f32.mrb[0].mxu0
    %v2038 = vadd.f32 %v1909, %v2037
    %v2039 = vpop.f32.mrb[0].mxu0
    %2040 = vmatprep.mubr.f32.mxu0 0.0
    %v2041 = vand.u32 %v102, 4294901760
    %2042 = vmatmul.mubr.f32.gmra.mrb[0].mxu0 %v2041
    %v2043 = vpop.f32.mrb[0].mxu0
    %v2044 = vadd.f32 %v1915, %v2043
    %v2045 = vpop.f32.mrb[0].mxu0
    %2046 = vmatprep.mubr.f32.mxu0 0.0
    %v2047 = vand.u32 %v103, 4294901760
    %2048 = vmatmul.mubr.f32.gmra.mrb[0].mxu0 %v2047
    %v2049 = vpop.f32.mrb[0].mxu0
    %v2050 = vadd.f32 %v1921, %v2049
    %v2051 = vpop.f32.mrb[0].mxu0
    %2052 = vmatprep.mubr.f32.mxu0 0.0
    %v2053 = vand.u32 %v104, 4294901760
    %2054 = vmatmul.mubr.f32.gmra.mrb[0].mxu0 %v2053
    %v2055 = vpop.f32.mrb[0].mxu0
    %v2056 = vadd.f32 %v1927, %v2055
    %v2057 = vpop.f32.mrb[0].mxu0
    %2058 = vmatprep.mubr.f32.mxu0 0.0
    %v2059 = vand.u32 %v105, 4294901760
    %2060 = vmatmul.mubr.f32.gmra.mrb[0].mxu0 %v2059
    %v2061 = vpop.f32.mrb[0].mxu0
    %v2062 = vadd.f32 %v1933, %v2061
    %v2063 = vpop.f32.mrb[0].mxu0
    %2064 = vmatprep.mubr.f32.mxu0 0.0
    %v2065 = vand.u32 %v106, 4294901760
    %2066 = vmatmul.mubr.f32.gmra.mrb[0].mxu0 %v2065
    %v2067 = vpop.f32.mrb[0].mxu0
    %v2068 = vadd.f32 %v1939, %v2067
    %v2069 = vpop.f32.mrb[0].mxu0
    %2070 = vdwg.mxu0
    %v2071 = vld [vmem:[%s2] sm:$0x1]
    %v2073 = vlaneseq
    %v2074 = vshrl.u32 %v2073, 7
    %v2075 = vsub.s32 0, %v2074
    %v2076 = vrot.slane %v2071, %v2075
    %v2078 = vadd.f32 %v2026, %v2076
    %v2079 = vadd.f32 %v2032, %v2076
    %v2080 = vadd.f32 %v2038, %v2076
    %v2081 = vadd.f32 %v2044, %v2076
    %v2082 = vadd.f32 %v2050, %v2076
    %v2083 = vadd.f32 %v2056, %v2076
    %v2084 = vadd.f32 %v2062, %v2076
    %v2085 = vadd.f32 %v2068, %v2076
    %v2086 = vmax.f32 %v2078, 0.0
    %v2087 = vmax.f32 %v2079, 0.0
    %v2088 = vmax.f32 %v2080, 0.0
    %v2089 = vmax.f32 %v2081, 0.0
    %v2090 = vmax.f32 %v2082, 0.0
    %v2091 = vmax.f32 %v2083, 0.0
    %v2092 = vmax.f32 %v2084, 0.0
    %v2093 = vmax.f32 %v2085, 0.0
    %v2094 = vld [vmem:[#allocation5] sm:$0xff]
    %v2095 = vld [vmem:[#allocation5 + $0x8] sm:$0xff]
    %v2096 = vld [vmem:[#allocation5 + $0x10] sm:$0xff]
    %v2097 = vld [vmem:[#allocation5 + $0x18] sm:$0xff]
    %v2098 = vld [vmem:[#allocation5 + $0x20] sm:$0xff]
    %v2099 = vld [vmem:[#allocation5 + $0x28] sm:$0xff]
    %v2100 = vld [vmem:[#allocation5 + $0x30] sm:$0xff]
    %v2101 = vld [vmem:[#allocation5 + $0x38] sm:$0xff]
    %v2102 = vld [vmem:[#allocation5 + $0x40] sm:$0xff]
    %v2103 = vld [vmem:[#allocation5 + $0x48] sm:$0xff]
    %v2104 = vld [vmem:[#allocation5 + $0x50] sm:$0xff]
    %v2105 = vld [vmem:[#allocation5 + $0x58] sm:$0xff]
    %v2106 = vld [vmem:[#allocation5 + $0x60] sm:$0xff]
    %v2107 = vld [vmem:[#allocation5 + $0x68] sm:$0xff]
    %v2108 = vld [vmem:[#allocation5 + $0x70] sm:$0xff]
    %v2109 = vld [vmem:[#allocation5 + $0x78] sm:$0xff]
    %v2110 = vld [vmem:[%s4] sm:$0x1]
    %v2112 = vlaneseq
    %v2113 = vshrl.u32 %v2112, 7
    %v2114 = vsub.s32 0, %v2113
    %v2115 = vrot.slane %v2110, %v2114
    %2117 = vmatprep.subr.mxu0 0.0
    %v2118 = vand.u32 %v2094, 4294901760
    %2119 = vmatpush1.msra.mxu0 %v2118
    %2120 = vmatprep.subr.mxu0 0.0
    %v2121 = vand.u32 %v2095, 4294901760
    %2122 = vmatpush1.msra.mxu0 %v2121
    %2123 = vmatprep.subr.mxu0 0.0
    %v2124 = vand.u32 %v2096, 4294901760
    %2125 = vmatpush1.msra.mxu0 %v2124
    %2126 = vmatprep.subr.mxu0 0.0
    %v2127 = vand.u32 %v2097, 4294901760
    %2128 = vmatpush1.msra.mxu0 %v2127
    %2129 = vmatprep.subr.mxu0 0.0
    %v2130 = vand.u32 %v2098, 4294901760
    %2131 = vmatpush1.msra.mxu0 %v2130
    %2132 = vmatprep.subr.mxu0 0.0
    %v2133 = vand.u32 %v2099, 4294901760
    %2134 = vmatpush1.msra.mxu0 %v2133
    %2135 = vmatprep.subr.mxu0 0.0
    %v2136 = vand.u32 %v2100, 4294901760
    %2137 = vmatpush1.msra.mxu0 %v2136
    %2138 = vmatprep.subr.mxu0 0.0
    %v2139 = vand.u32 %v2101, 4294901760
    %2140 = vmatpush1.msra.mxu0 %v2139
    %2141 = vmatprep.subr.mxu0 0.0
    %v2142 = vand.u32 %v2102, 4294901760
    %2143 = vmatpush1.msra.mxu0 %v2142
    %2144 = vmatprep.subr.mxu0 0.0
    %v2145 = vand.u32 %v2103, 4294901760
    %2146 = vmatpush1.msra.mxu0 %v2145
    %2147 = vmatprep.subr.mxu0 0.0
    %v2148 = vand.u32 %v2104, 4294901760
    %2149 = vmatpush1.msra.mxu0 %v2148
    %2150 = vmatprep.subr.mxu0 0.0
    %v2151 = vand.u32 %v2105, 4294901760
    %2152 = vmatpush1.msra.mxu0 %v2151
    %2153 = vmatprep.subr.mxu0 0.0
    %v2154 = vand.u32 %v2106, 4294901760
    %2155 = vmatpush1.msra.mxu0 %v2154
    %2156 = vmatprep.subr.mxu0 0.0
    %v2157 = vand.u32 %v2107, 4294901760
    %2158 = vmatpush1.msra.mxu0 %v2157
    %2159 = vmatprep.subr.mxu0 0.0
    %v2160 = vand.u32 %v2108, 4294901760
    %2161 = vmatpush1.msra.mxu0 %v2160
    %2162 = vmatprep.subr.mxu0 0.0
    %v2163 = vand.u32 %v2109, 4294901760
    %2164 = vmatpush1.msra.mxu0 %v2163
    %2165 = vmatprep.subr.mxu0 0.0
    %2166 = vmatpush1.msra.mxu0 0.0
    %2167 = vmatprep.subr.mxu0 0.0
    %2168 = vmatpush1.msra.mxu0 0.0
    %2169 = vmatprep.subr.mxu0 0.0
    %2170 = vmatpush1.msra.mxu0 0.0
    %2171 = vmatprep.subr.mxu0 0.0
    %2172 = vmatpush1.msra.mxu0 0.0
    %2173 = vmatprep.subr.mxu0 0.0
    %2174 = vmatpush1.msra.mxu0 0.0
    %2175 = vmatprep.subr.mxu0 0.0
    %2176 = vmatpush1.msra.mxu0 0.0
    %2177 = vmatprep.subr.mxu0 0.0
    %2178 = vmatpush1.msra.mxu0 0.0
    %2179 = vmatprep.subr.mxu0 0.0
    %2180 = vmatpush1.msra.mxu0 0.0
    %2181 = vmatprep.subr.mxu0 0.0
    %2182 = vmatpush1.msra.mxu0 0.0
    %2183 = vmatprep.subr.mxu0 0.0
    %2184 = vmatpush1.msra.mxu0 0.0
    %2185 = vmatprep.subr.mxu0 0.0
    %2186 = vmatpush1.msra.mxu0 0.0
    %2187 = vmatprep.subr.mxu0 0.0
    %2188 = vmatpush1.msra.mxu0 0.0
    %2189 = vmatprep.subr.mxu0 0.0
    %2190 = vmatpush1.msra.mxu0 0.0
    %2191 = vmatprep.subr.mxu0 0.0
    %2192 = vmatpush1.msra.mxu0 0.0
    %2193 = vmatprep.subr.mxu0 0.0
    %2194 = vmatpush1.msra.mxu0 0.0
    %2195 = vmatprep.subr.mxu0 0.0
    %2196 = vmatpush1.msra.mxu0 0.0
    %2197 = vmatprep.mubr.f32.mxu0 0.0
    %v2198 = vand.u32 %v2086, 4294901760
    %v2199 = vsub.f32 %v2086, %v2198
    %v2200 = vand.u32 %v2199, 4294901760
    %v2201 = vsub.f32 %v2199, %v2200
    %v2202 = vand.u32 %v2201, 4294901760
    %2203 = vmatmul.mubr.f32.gmra.mrb[0].mxu0 %v2202
    %v2204 = vpop.f32.mrb[0].mxu0
    %v2205 = vadd.f32 %v2115, %v2204
    %v2206 = vpop.f32.mrb[0].mxu0
    %2207 = vmatprep.mubr.f32.mxu0 0.0
    %v2208 = vand.u32 %v2087, 4294901760
    %v2209 = vsub.f32 %v2087, %v2208
    %v2210 = vand.u32 %v2209, 4294901760
    %v2211 = vsub.f32 %v2209, %v2210
    %v2212 = vand.u32 %v2211, 4294901760
    %2213 = vmatmul.mubr.f32.gmra.mrb[0].mxu0 %v2212
    %v2214 = vpop.f32.mrb[0].mxu0
    %v2215 = vadd.f32 %v2115, %v2214
    %v2216 = vpop.f32.mrb[0].mxu0
    %2217 = vmatprep.mubr.f32.mxu0 0.0
    %v2218 = vand.u32 %v2088, 4294901760
    %v2219 = vsub.f32 %v2088, %v2218
    %v2220 = vand.u32 %v2219, 4294901760
    %v2221 = vsub.f32 %v2219, %v2220
    %v2222 = vand.u32 %v2221, 4294901760
    %2223 = vmatmul.mubr.f32.gmra.mrb[0].mxu0 %v2222
    %v2224 = vpop.f32.mrb[0].mxu0
    %v2225 = vadd.f32 %v2115, %v2224
    %v2226 = vpop.f32.mrb[0].mxu0
    %2227 = vmatprep.mubr.f32.mxu0 0.0
    %v2228 = vand.u32 %v2089, 4294901760
    %v2229 = vsub.f32 %v2089, %v2228
    %v2230 = vand.u32 %v2229, 4294901760
    %v2231 = vsub.f32 %v2229, %v2230
    %v2232 = vand.u32 %v2231, 4294901760
    %2233 = vmatmul.mubr.f32.gmra.mrb[0].mxu0 %v2232
    %v2234 = vpop.f32.mrb[0].mxu0
    %v2235 = vadd.f32 %v2115, %v2234
    %v2236 = vpop.f32.mrb[0].mxu0
    %2237 = vmatprep.mubr.f32.mxu0 0.0
    %v2238 = vand.u32 %v2090, 4294901760
    %v2239 = vsub.f32 %v2090, %v2238
    %v2240 = vand.u32 %v2239, 4294901760
    %v2241 = vsub.f32 %v2239, %v2240
    %v2242 = vand.u32 %v2241, 4294901760
    %2243 = vmatmul.mubr.f32.gmra.mrb[0].mxu0 %v2242
    %v2244 = vpop.f32.mrb[0].mxu0
    %v2245 = vadd.f32 %v2115, %v2244
    %v2246 = vpop.f32.mrb[0].mxu0
    %2247 = vmatprep.mubr.f32.mxu0 0.0
    %v2248 = vand.u32 %v2091, 4294901760
    %v2249 = vsub.f32 %v2091, %v2248
    %v2250 = vand.u32 %v2249, 4294901760
    %v2251 = vsub.f32 %v2249, %v2250
    %v2252 = vand.u32 %v2251, 4294901760
    %2253 = vmatmul.mubr.f32.gmra.mrb[0].mxu0 %v2252
    %v2254 = vpop.f32.mrb[0].mxu0
    %v2255 = vadd.f32 %v2115, %v2254
    %v2256 = vpop.f32.mrb[0].mxu0
    %2257 = vmatprep.mubr.f32.mxu0 0.0
    %v2258 = vand.u32 %v2092, 4294901760
    %v2259 = vsub.f32 %v2092, %v2258
    %v2260 = vand.u32 %v2259, 4294901760
    %v2261 = vsub.f32 %v2259, %v2260
    %v2262 = vand.u32 %v2261, 4294901760
    %2263 = vmatmul.mubr.f32.gmra.mrb[0].mxu0 %v2262
    %v2264 = vpop.f32.mrb[0].mxu0
    %v2265 = vadd.f32 %v2115, %v2264
    %v2266 = vpop.f32.mrb[0].mxu0
    %2267 = vmatprep.mubr.f32.mxu0 0.0
    %v2268 = vand.u32 %v2093, 4294901760
    %v2269 = vsub.f32 %v2093, %v2268
    %v2270 = vand.u32 %v2269, 4294901760
    %v2271 = vsub.f32 %v2269, %v2270
    %v2272 = vand.u32 %v2271, 4294901760
    %2273 = vmatmul.mubr.f32.gmra.mrb[0].mxu0 %v2272
    %v2274 = vpop.f32.mrb[0].mxu0
    %v2275 = vadd.f32 %v2115, %v2274
    %v2276 = vpop.f32.mrb[0].mxu0
    %2277 = vdwg.mxu0
    %2278 = vmatprep.subr.mxu0 0.0
    %v2279 = vand.u32 %v2094, 4294901760
    %v2280 = vsub.f32 %v2094, %v2279
    %v2281 = vand.u32 %v2280, 4294901760
    %v2282 = vsub.f32 %v2280, %v2281
    %v2283 = vand.u32 %v2282, 4294901760
    %2284 = vmatpush1.msra.mxu0 %v2283
    %2285 = vmatprep.subr.mxu0 0.0
    %v2286 = vand.u32 %v2095, 4294901760
    %v2287 = vsub.f32 %v2095, %v2286
    %v2288 = vand.u32 %v2287, 4294901760
    %v2289 = vsub.f32 %v2287, %v2288
    %v2290 = vand.u32 %v2289, 4294901760
    %2291 = vmatpush1.msra.mxu0 %v2290
    %2292 = vmatprep.subr.mxu0 0.0
    %v2293 = vand.u32 %v2096, 4294901760
    %v2294 = vsub.f32 %v2096, %v2293
    %v2295 = vand.u32 %v2294, 4294901760
    %v2296 = vsub.f32 %v2294, %v2295
    %v2297 = vand.u32 %v2296, 4294901760
    %2298 = vmatpush1.msra.mxu0 %v2297
    %2299 = vmatprep.subr.mxu0 0.0
    %v2300 = vand.u32 %v2097, 4294901760
    %v2301 = vsub.f32 %v2097, %v2300
    %v2302 = vand.u32 %v2301, 4294901760
    %v2303 = vsub.f32 %v2301, %v2302
    %v2304 = vand.u32 %v2303, 4294901760
    %2305 = vmatpush1.msra.mxu0 %v2304
    %2306 = vmatprep.subr.mxu0 0.0
    %v2307 = vand.u32 %v2098, 4294901760
    %v2308 = vsub.f32 %v2098, %v2307
    %v2309 = vand.u32 %v2308, 4294901760
    %v2310 = vsub.f32 %v2308, %v2309
    %v2311 = vand.u32 %v2310, 4294901760
    %2312 = vmatpush1.msra.mxu0 %v2311
    %2313 = vmatprep.subr.mxu0 0.0
    %v2314 = vand.u32 %v2099, 4294901760
    %v2315 = vsub.f32 %v2099, %v2314
    %v2316 = vand.u32 %v2315, 4294901760
    %v2317 = vsub.f32 %v2315, %v2316
    %v2318 = vand.u32 %v2317, 4294901760
    %2319 = vmatpush1.msra.mxu0 %v2318
    %2320 = vmatprep.subr.mxu0 0.0
    %v2321 = vand.u32 %v2100, 4294901760
    %v2322 = vsub.f32 %v2100, %v2321
    %v2323 = vand.u32 %v2322, 4294901760
    %v2324 = vsub.f32 %v2322, %v2323
    %v2325 = vand.u32 %v2324, 4294901760
    %2326 = vmatpush1.msra.mxu0 %v2325
    %2327 = vmatprep.subr.mxu0 0.0
    %v2328 = vand.u32 %v2101, 4294901760
    %v2329 = vsub.f32 %v2101, %v2328
    %v2330 = vand.u32 %v2329, 4294901760
    %v2331 = vsub.f32 %v2329, %v2330
    %v2332 = vand.u32 %v2331, 4294901760
    %2333 = vmatpush1.msra.mxu0 %v2332
    %2334 = vmatprep.subr.mxu0 0.0
    %v2335 = vand.u32 %v2102, 4294901760
    %v2336 = vsub.f32 %v2102, %v2335
    %v2337 = vand.u32 %v2336, 4294901760
    %v2338 = vsub.f32 %v2336, %v2337
    %v2339 = vand.u32 %v2338, 4294901760
    %2340 = vmatpush1.msra.mxu0 %v2339
    %2341 = vmatprep.subr.mxu0 0.0
    %v2342 = vand.u32 %v2103, 4294901760
    %v2343 = vsub.f32 %v2103, %v2342
    %v2344 = vand.u32 %v2343, 4294901760
    %v2345 = vsub.f32 %v2343, %v2344
    %v2346 = vand.u32 %v2345, 4294901760
    %2347 = vmatpush1.msra.mxu0 %v2346
    %2348 = vmatprep.subr.mxu0 0.0
    %v2349 = vand.u32 %v2104, 4294901760
    %v2350 = vsub.f32 %v2104, %v2349
    %v2351 = vand.u32 %v2350, 4294901760
    %v2352 = vsub.f32 %v2350, %v2351
    %v2353 = vand.u32 %v2352, 4294901760
    %2354 = vmatpush1.msra.mxu0 %v2353
    %2355 = vmatprep.subr.mxu0 0.0
    %v2356 = vand.u32 %v2105, 4294901760
    %v2357 = vsub.f32 %v2105, %v2356
    %v2358 = vand.u32 %v2357, 4294901760
    %v2359 = vsub.f32 %v2357, %v2358
    %v2360 = vand.u32 %v2359, 4294901760
    %2361 = vmatpush1.msra.mxu0 %v2360
    %2362 = vmatprep.subr.mxu0 0.0
    %v2363 = vand.u32 %v2106, 4294901760
    %v2364 = vsub.f32 %v2106, %v2363
    %v2365 = vand.u32 %v2364, 4294901760
    %v2366 = vsub.f32 %v2364, %v2365
    %v2367 = vand.u32 %v2366, 4294901760
    %2368 = vmatpush1.msra.mxu0 %v2367
    %2369 = vmatprep.subr.mxu0 0.0
    %v2370 = vand.u32 %v2107, 4294901760
    %v2371 = vsub.f32 %v2107, %v2370
    %v2372 = vand.u32 %v2371, 4294901760
    %v2373 = vsub.f32 %v2371, %v2372
    %v2374 = vand.u32 %v2373, 4294901760
    %2375 = vmatpush1.msra.mxu0 %v2374
    %2376 = vmatprep.subr.mxu0 0.0
    %v2377 = vand.u32 %v2108, 4294901760
    %v2378 = vsub.f32 %v2108, %v2377
    %v2379 = vand.u32 %v2378, 4294901760
    %v2380 = vsub.f32 %v2378, %v2379
    %v2381 = vand.u32 %v2380, 4294901760
    %2382 = vmatpush1.msra.mxu0 %v2381
    %2383 = vmatprep.subr.mxu0 0.0
    %v2384 = vand.u32 %v2109, 4294901760
    %v2385 = vsub.f32 %v2109, %v2384
    %v2386 = vand.u32 %v2385, 4294901760
    %v2387 = vsub.f32 %v2385, %v2386
    %v2388 = vand.u32 %v2387, 4294901760
    %2389 = vmatpush1.msra.mxu0 %v2388
    %2390 = vmatprep.subr.mxu0 0.0
    %2391 = vmatpush1.msra.mxu0 0.0
    %2392 = vmatprep.subr.mxu0 0.0
    %2393 = vmatpush1.msra.mxu0 0.0
    %2394 = vmatprep.subr.mxu0 0.0
    %2395 = vmatpush1.msra.mxu0 0.0
    %2396 = vmatprep.subr.mxu0 0.0
    %2397 = vmatpush1.msra.mxu0 0.0
    %2398 = vmatprep.subr.mxu0 0.0
    %2399 = vmatpush1.msra.mxu0 0.0
    %2400 = vmatprep.subr.mxu0 0.0
    %2401 = vmatpush1.msra.mxu0 0.0
    %2402 = vmatprep.subr.mxu0 0.0
    %2403 = vmatpush1.msra.mxu0 0.0
    %2404 = vmatprep.subr.mxu0 0.0
    %2405 = vmatpush1.msra.mxu0 0.0
    %2406 = vmatprep.subr.mxu0 0.0
    %2407 = vmatpush1.msra.mxu0 0.0
    %2408 = vmatprep.subr.mxu0 0.0
    %2409 = vmatpush1.msra.mxu0 0.0
    %2410 = vmatprep.subr.mxu0 0.0
    %2411 = vmatpush1.msra.mxu0 0.0
    %2412 = vmatprep.subr.mxu0 0.0
    %2413 = vmatpush1.msra.mxu0 0.0
    %2414 = vmatprep.subr.mxu0 0.0
    %2415 = vmatpush1.msra.mxu0 0.0
    %2416 = vmatprep.subr.mxu0 0.0
    %2417 = vmatpush1.msra.mxu0 0.0
    %2418 = vmatprep.subr.mxu0 0.0
    %2419 = vmatpush1.msra.mxu0 0.0
    %2420 = vmatprep.subr.mxu0 0.0
    %2421 = vmatpush1.msra.mxu0 0.0
    %2422 = vmatprep.mubr.f32.mxu0 0.0
    %v2423 = vand.u32 %v2086, 4294901760
    %2424 = vmatmul.mubr.f32.gmra.mrb[0].mxu0 %v2423
    %v2425 = vpop.f32.mrb[0].mxu0
    %v2426 = vadd.f32 %v2205, %v2425
    %v2427 = vpop.f32.mrb[0].mxu0
    %2428 = vmatprep.mubr.f32.mxu0 0.0
    %v2429 = vand.u32 %v2087, 4294901760
    %2430 = vmatmul.mubr.f32.gmra.mrb[0].mxu0 %v2429
    %v2431 = vpop.f32.mrb[0].mxu0
    %v2432 = vadd.f32 %v2215, %v2431
    %v2433 = vpop.f32.mrb[0].mxu0
    %2434 = vmatprep.mubr.f32.mxu0 0.0
    %v2435 = vand.u32 %v2088, 4294901760
    %2436 = vmatmul.mubr.f32.gmra.mrb[0].mxu0 %v2435
    %v2437 = vpop.f32.mrb[0].mxu0
    %v2438 = vadd.f32 %v2225, %v2437
    %v2439 = vpop.f32.mrb[0].mxu0
    %2440 = vmatprep.mubr.f32.mxu0 0.0
    %v2441 = vand.u32 %v2089, 4294901760
    %2442 = vmatmul.mubr.f32.gmra.mrb[0].mxu0 %v2441
    %v2443 = vpop.f32.mrb[0].mxu0
    %v2444 = vadd.f32 %v2235, %v2443
    %v2445 = vpop.f32.mrb[0].mxu0
    %2446 = vmatprep.mubr.f32.mxu0 0.0
    %v2447 = vand.u32 %v2090, 4294901760
    %2448 = vmatmul.mubr.f32.gmra.mrb[0].mxu0 %v2447
    %v2449 = vpop.f32.mrb[0].mxu0
    %v2450 = vadd.f32 %v2245, %v2449
    %v2451 = vpop.f32.mrb[0].mxu0
    %2452 = vmatprep.mubr.f32.mxu0 0.0
    %v2453 = vand.u32 %v2091, 4294901760
    %2454 = vmatmul.mubr.f32.gmra.mrb[0].mxu0 %v2453
    %v2455 = vpop.f32.mrb[0].mxu0
    %v2456 = vadd.f32 %v2255, %v2455
    %v2457 = vpop.f32.mrb[0].mxu0
    %2458 = vmatprep.mubr.f32.mxu0 0.0
    %v2459 = vand.u32 %v2092, 4294901760
    %2460 = vmatmul.mubr.f32.gmra.mrb[0].mxu0 %v2459
    %v2461 = vpop.f32.mrb[0].mxu0
    %v2462 = vadd.f32 %v2265, %v2461
    %v2463 = vpop.f32.mrb[0].mxu0
    %2464 = vmatprep.mubr.f32.mxu0 0.0
    %v2465 = vand.u32 %v2093, 4294901760
    %2466 = vmatmul.mubr.f32.gmra.mrb[0].mxu0 %v2465
    %v2467 = vpop.f32.mrb[0].mxu0
    %v2468 = vadd.f32 %v2275, %v2467
    %v2469 = vpop.f32.mrb[0].mxu0
    %2470 = vdwg.mxu0
    %2471 = vmatprep.subr.mxu0 0.0
    %v2472 = vand.u32 %v2094, 4294901760
    %v2473 = vsub.f32 %v2094, %v2472
    %2474 = vmatpush1.msra.mxu0 %v2473
    %2475 = vmatprep.subr.mxu0 0.0
    %v2476 = vand.u32 %v2095, 4294901760
    %v2477 = vsub.f32 %v2095, %v2476
    %2478 = vmatpush1.msra.mxu0 %v2477
    %2479 = vmatprep.subr.mxu0 0.0
    %v2480 = vand.u32 %v2096, 4294901760
    %v2481 = vsub.f32 %v2096, %v2480
    %2482 = vmatpush1.msra.mxu0 %v2481
    %2483 = vmatprep.subr.mxu0 0.0
    %v2484 = vand.u32 %v2097, 4294901760
    %v2485 = vsub.f32 %v2097, %v2484
    %2486 = vmatpush1.msra.mxu0 %v2485
    %2487 = vmatprep.subr.mxu0 0.0
    %v2488 = vand.u32 %v2098, 4294901760
    %v2489 = vsub.f32 %v2098, %v2488
    %2490 = vmatpush1.msra.mxu0 %v2489
    %2491 = vmatprep.subr.mxu0 0.0
    %v2492 = vand.u32 %v2099, 4294901760
    %v2493 = vsub.f32 %v2099, %v2492
    %2494 = vmatpush1.msra.mxu0 %v2493
    %2495 = vmatprep.subr.mxu0 0.0
    %v2496 = vand.u32 %v2100, 4294901760
    %v2497 = vsub.f32 %v2100, %v2496
    %2498 = vmatpush1.msra.mxu0 %v2497
    %2499 = vmatprep.subr.mxu0 0.0
    %v2500 = vand.u32 %v2101, 4294901760
    %v2501 = vsub.f32 %v2101, %v2500
    %2502 = vmatpush1.msra.mxu0 %v2501
    %2503 = vmatprep.subr.mxu0 0.0
    %v2504 = vand.u32 %v2102, 4294901760
    %v2505 = vsub.f32 %v2102, %v2504
    %2506 = vmatpush1.msra.mxu0 %v2505
    %2507 = vmatprep.subr.mxu0 0.0
    %v2508 = vand.u32 %v2103, 4294901760
    %v2509 = vsub.f32 %v2103, %v2508
    %2510 = vmatpush1.msra.mxu0 %v2509
    %2511 = vmatprep.subr.mxu0 0.0
    %v2512 = vand.u32 %v2104, 4294901760
    %v2513 = vsub.f32 %v2104, %v2512
    %2514 = vmatpush1.msra.mxu0 %v2513
    %2515 = vmatprep.subr.mxu0 0.0
    %v2516 = vand.u32 %v2105, 4294901760
    %v2517 = vsub.f32 %v2105, %v2516
    %2518 = vmatpush1.msra.mxu0 %v2517
    %2519 = vmatprep.subr.mxu0 0.0
    %v2520 = vand.u32 %v2106, 4294901760
    %v2521 = vsub.f32 %v2106, %v2520
    %2522 = vmatpush1.msra.mxu0 %v2521
    %2523 = vmatprep.subr.mxu0 0.0
    %v2524 = vand.u32 %v2107, 4294901760
    %v2525 = vsub.f32 %v2107, %v2524
    %2526 = vmatpush1.msra.mxu0 %v2525
    %2527 = vmatprep.subr.mxu0 0.0
    %v2528 = vand.u32 %v2108, 4294901760
    %v2529 = vsub.f32 %v2108, %v2528
    %2530 = vmatpush1.msra.mxu0 %v2529
    %2531 = vmatprep.subr.mxu0 0.0
    %v2532 = vand.u32 %v2109, 4294901760
    %v2533 = vsub.f32 %v2109, %v2532
    %2534 = vmatpush1.msra.mxu0 %v2533
    %2535 = vmatprep.subr.mxu0 0.0
    %2536 = vmatpush1.msra.mxu0 0.0
    %2537 = vmatprep.subr.mxu0 0.0
    %2538 = vmatpush1.msra.mxu0 0.0
    %2539 = vmatprep.subr.mxu0 0.0
    %2540 = vmatpush1.msra.mxu0 0.0
    %2541 = vmatprep.subr.mxu0 0.0
    %2542 = vmatpush1.msra.mxu0 0.0
    %2543 = vmatprep.subr.mxu0 0.0
    %2544 = vmatpush1.msra.mxu0 0.0
    %2545 = vmatprep.subr.mxu0 0.0
    %2546 = vmatpush1.msra.mxu0 0.0
    %2547 = vmatprep.subr.mxu0 0.0
    %2548 = vmatpush1.msra.mxu0 0.0
    %2549 = vmatprep.subr.mxu0 0.0
    %2550 = vmatpush1.msra.mxu0 0.0
    %2551 = vmatprep.subr.mxu0 0.0
    %2552 = vmatpush1.msra.mxu0 0.0
    %2553 = vmatprep.subr.mxu0 0.0
    %2554 = vmatpush1.msra.mxu0 0.0
    %2555 = vmatprep.subr.mxu0 0.0
    %2556 = vmatpush1.msra.mxu0 0.0
    %2557 = vmatprep.subr.mxu0 0.0
    %2558 = vmatpush1.msra.mxu0 0.0
    %2559 = vmatprep.subr.mxu0 0.0
    %2560 = vmatpush1.msra.mxu0 0.0
    %2561 = vmatprep.subr.mxu0 0.0
    %2562 = vmatpush1.msra.mxu0 0.0
    %2563 = vmatprep.subr.mxu0 0.0
    %2564 = vmatpush1.msra.mxu0 0.0
    %2565 = vmatprep.subr.mxu0 0.0
    %2566 = vmatpush1.msra.mxu0 0.0
    %2567 = vmatprep.mubr.f32.mxu0 0.0
    %v2568 = vand.u32 %v2086, 4294901760
    %v2569 = vsub.f32 %v2086, %v2568
    %2570 = vmatmul.mubr.f32.gmra.mrb[0].mxu0 %v2569
    %v2571 = vpop.f32.mrb[0].mxu0
    %v2572 = vadd.f32 %v2426, %v2571
    %v2573 = vpop.f32.mrb[0].mxu0
    %2574 = vmatprep.mubr.f32.mxu0 0.0
    %v2575 = vand.u32 %v2087, 4294901760
    %v2576 = vsub.f32 %v2087, %v2575
    %2577 = vmatmul.mubr.f32.gmra.mrb[0].mxu0 %v2576
    %v2578 = vpop.f32.mrb[0].mxu0
    %v2579 = vadd.f32 %v2432, %v2578
    %v2580 = vpop.f32.mrb[0].mxu0
    %2581 = vmatprep.mubr.f32.mxu0 0.0
    %v2582 = vand.u32 %v2088, 4294901760
    %v2583 = vsub.f32 %v2088, %v2582
    %2584 = vmatmul.mubr.f32.gmra.mrb[0].mxu0 %v2583
    %v2585 = vpop.f32.mrb[0].mxu0
    %v2586 = vadd.f32 %v2438, %v2585
    %v2587 = vpop.f32.mrb[0].mxu0
    %2588 = vmatprep.mubr.f32.mxu0 0.0
    %v2589 = vand.u32 %v2089, 4294901760
    %v2590 = vsub.f32 %v2089, %v2589
    %2591 = vmatmul.mubr.f32.gmra.mrb[0].mxu0 %v2590
    %v2592 = vpop.f32.mrb[0].mxu0
    %v2593 = vadd.f32 %v2444, %v2592
    %v2594 = vpop.f32.mrb[0].mxu0
    %2595 = vmatprep.mubr.f32.mxu0 0.0
    %v2596 = vand.u32 %v2090, 4294901760
    %v2597 = vsub.f32 %v2090, %v2596
    %2598 = vmatmul.mubr.f32.gmra.mrb[0].mxu0 %v2597
    %v2599 = vpop.f32.mrb[0].mxu0
    %v2600 = vadd.f32 %v2450, %v2599
    %v2601 = vpop.f32.mrb[0].mxu0
    %2602 = vmatprep.mubr.f32.mxu0 0.0
    %v2603 = vand.u32 %v2091, 4294901760
    %v2604 = vsub.f32 %v2091, %v2603
    %2605 = vmatmul.mubr.f32.gmra.mrb[0].mxu0 %v2604
    %v2606 = vpop.f32.mrb[0].mxu0
    %v2607 = vadd.f32 %v2456, %v2606
    %v2608 = vpop.f32.mrb[0].mxu0
    %2609 = vmatprep.mubr.f32.mxu0 0.0
    %v2610 = vand.u32 %v2092, 4294901760
    %v2611 = vsub.f32 %v2092, %v2610
    %2612 = vmatmul.mubr.f32.gmra.mrb[0].mxu0 %v2611
    %v2613 = vpop.f32.mrb[0].mxu0
    %v2614 = vadd.f32 %v2462, %v2613
    %v2615 = vpop.f32.mrb[0].mxu0
    %2616 = vmatprep.mubr.f32.mxu0 0.0
    %v2617 = vand.u32 %v2093, 4294901760
    %v2618 = vsub.f32 %v2093, %v2617
    %2619 = vmatmul.mubr.f32.gmra.mrb[0].mxu0 %v2618
    %v2620 = vpop.f32.mrb[0].mxu0
    %v2621 = vadd.f32 %v2468, %v2620
    %v2622 = vpop.f32.mrb[0].mxu0
    %2623 = vdwg.mxu0
    %2624 = vmatprep.subr.mxu0 0.0
    %v2625 = vand.u32 %v2094, 4294901760
    %2626 = vmatpush1.msra.mxu0 %v2625
    %2627 = vmatprep.subr.mxu0 0.0
    %v2628 = vand.u32 %v2095, 4294901760
    %2629 = vmatpush1.msra.mxu0 %v2628
    %2630 = vmatprep.subr.mxu0 0.0
    %v2631 = vand.u32 %v2096, 4294901760
    %2632 = vmatpush1.msra.mxu0 %v2631
    %2633 = vmatprep.subr.mxu0 0.0
    %v2634 = vand.u32 %v2097, 4294901760
    %2635 = vmatpush1.msra.mxu0 %v2634
    %2636 = vmatprep.subr.mxu0 0.0
    %v2637 = vand.u32 %v2098, 4294901760
    %2638 = vmatpush1.msra.mxu0 %v2637
    %2639 = vmatprep.subr.mxu0 0.0
    %v2640 = vand.u32 %v2099, 4294901760
    %2641 = vmatpush1.msra.mxu0 %v2640
    %2642 = vmatprep.subr.mxu0 0.0
    %v2643 = vand.u32 %v2100, 4294901760
    %2644 = vmatpush1.msra.mxu0 %v2643
    %2645 = vmatprep.subr.mxu0 0.0
    %v2646 = vand.u32 %v2101, 4294901760
    %2647 = vmatpush1.msra.mxu0 %v2646
    %2648 = vmatprep.subr.mxu0 0.0
    %v2649 = vand.u32 %v2102, 4294901760
    %2650 = vmatpush1.msra.mxu0 %v2649
    %2651 = vmatprep.subr.mxu0 0.0
    %v2652 = vand.u32 %v2103, 4294901760
    %2653 = vmatpush1.msra.mxu0 %v2652
    %2654 = vmatprep.subr.mxu0 0.0
    %v2655 = vand.u32 %v2104, 4294901760
    %2656 = vmatpush1.msra.mxu0 %v2655
    %2657 = vmatprep.subr.mxu0 0.0
    %v2658 = vand.u32 %v2105, 4294901760
    %2659 = vmatpush1.msra.mxu0 %v2658
    %2660 = vmatprep.subr.mxu0 0.0
    %v2661 = vand.u32 %v2106, 4294901760
    %2662 = vmatpush1.msra.mxu0 %v2661
    %2663 = vmatprep.subr.mxu0 0.0
    %v2664 = vand.u32 %v2107, 4294901760
    %2665 = vmatpush1.msra.mxu0 %v2664
    %2666 = vmatprep.subr.mxu0 0.0
    %v2667 = vand.u32 %v2108, 4294901760
    %2668 = vmatpush1.msra.mxu0 %v2667
    %2669 = vmatprep.subr.mxu0 0.0
    %v2670 = vand.u32 %v2109, 4294901760
    %2671 = vmatpush1.msra.mxu0 %v2670
    %2672 = vmatprep.subr.mxu0 0.0
    %2673 = vmatpush1.msra.mxu0 0.0
    %2674 = vmatprep.subr.mxu0 0.0
    %2675 = vmatpush1.msra.mxu0 0.0
    %2676 = vmatprep.subr.mxu0 0.0
    %2677 = vmatpush1.msra.mxu0 0.0
    %2678 = vmatprep.subr.mxu0 0.0
    %2679 = vmatpush1.msra.mxu0 0.0
    %2680 = vmatprep.subr.mxu0 0.0
    %2681 = vmatpush1.msra.mxu0 0.0
    %2682 = vmatprep.subr.mxu0 0.0
    %2683 = vmatpush1.msra.mxu0 0.0
    %2684 = vmatprep.subr.mxu0 0.0
    %2685 = vmatpush1.msra.mxu0 0.0
    %2686 = vmatprep.subr.mxu0 0.0
    %2687 = vmatpush1.msra.mxu0 0.0
    %2688 = vmatprep.subr.mxu0 0.0
    %2689 = vmatpush1.msra.mxu0 0.0
    %2690 = vmatprep.subr.mxu0 0.0
    %2691 = vmatpush1.msra.mxu0 0.0
    %2692 = vmatprep.subr.mxu0 0.0
    %2693 = vmatpush1.msra.mxu0 0.0
    %2694 = vmatprep.subr.mxu0 0.0
    %2695 = vmatpush1.msra.mxu0 0.0
    %2696 = vmatprep.subr.mxu0 0.0
    %2697 = vmatpush1.msra.mxu0 0.0
    %2698 = vmatprep.subr.mxu0 0.0
    %2699 = vmatpush1.msra.mxu0 0.0
    %2700 = vmatprep.subr.mxu0 0.0
    %2701 = vmatpush1.msra.mxu0 0.0
    %2702 = vmatprep.subr.mxu0 0.0
    %2703 = vmatpush1.msra.mxu0 0.0
    %2704 = vmatprep.mubr.f32.mxu0 0.0
    %v2705 = vand.u32 %v2086, 4294901760
    %v2706 = vsub.f32 %v2086, %v2705
    %v2707 = vand.u32 %v2706, 4294901760
    %2708 = vmatmul.mubr.f32.gmra.mrb[0].mxu0 %v2707
    %v2709 = vpop.f32.mrb[0].mxu0
    %v2710 = vadd.f32 %v2572, %v2709
    %v2711 = vpop.f32.mrb[0].mxu0
    %2712 = vmatprep.mubr.f32.mxu0 0.0
    %v2713 = vand.u32 %v2087, 4294901760
    %v2714 = vsub.f32 %v2087, %v2713
    %v2715 = vand.u32 %v2714, 4294901760
    %2716 = vmatmul.mubr.f32.gmra.mrb[0].mxu0 %v2715
    %v2717 = vpop.f32.mrb[0].mxu0
    %v2718 = vadd.f32 %v2579, %v2717
    %v2719 = vpop.f32.mrb[0].mxu0
    %2720 = vmatprep.mubr.f32.mxu0 0.0
    %v2721 = vand.u32 %v2088, 4294901760
    %v2722 = vsub.f32 %v2088, %v2721
    %v2723 = vand.u32 %v2722, 4294901760
    %2724 = vmatmul.mubr.f32.gmra.mrb[0].mxu0 %v2723
    %v2725 = vpop.f32.mrb[0].mxu0
    %v2726 = vadd.f32 %v2586, %v2725
    %v2727 = vpop.f32.mrb[0].mxu0
    %2728 = vmatprep.mubr.f32.mxu0 0.0
    %v2729 = vand.u32 %v2089, 4294901760
    %v2730 = vsub.f32 %v2089, %v2729
    %v2731 = vand.u32 %v2730, 4294901760
    %2732 = vmatmul.mubr.f32.gmra.mrb[0].mxu0 %v2731
    %v2733 = vpop.f32.mrb[0].mxu0
    %v2734 = vadd.f32 %v2593, %v2733
    %v2735 = vpop.f32.mrb[0].mxu0
    %2736 = vmatprep.mubr.f32.mxu0 0.0
    %v2737 = vand.u32 %v2090, 4294901760
    %v2738 = vsub.f32 %v2090, %v2737
    %v2739 = vand.u32 %v2738, 4294901760
    %2740 = vmatmul.mubr.f32.gmra.mrb[0].mxu0 %v2739
    %v2741 = vpop.f32.mrb[0].mxu0
    %v2742 = vadd.f32 %v2600, %v2741
    %v2743 = vpop.f32.mrb[0].mxu0
    %2744 = vmatprep.mubr.f32.mxu0 0.0
    %v2745 = vand.u32 %v2091, 4294901760
    %v2746 = vsub.f32 %v2091, %v2745
    %v2747 = vand.u32 %v2746, 4294901760
    %2748 = vmatmul.mubr.f32.gmra.mrb[0].mxu0 %v2747
    %v2749 = vpop.f32.mrb[0].mxu0
    %v2750 = vadd.f32 %v2607, %v2749
    %v2751 = vpop.f32.mrb[0].mxu0
    %2752 = vmatprep.mubr.f32.mxu0 0.0
    %v2753 = vand.u32 %v2092, 4294901760
    %v2754 = vsub.f32 %v2092, %v2753
    %v2755 = vand.u32 %v2754, 4294901760
    %2756 = vmatmul.mubr.f32.gmra.mrb[0].mxu0 %v2755
    %v2757 = vpop.f32.mrb[0].mxu0
    %v2758 = vadd.f32 %v2614, %v2757
    %v2759 = vpop.f32.mrb[0].mxu0
    %2760 = vmatprep.mubr.f32.mxu0 0.0
    %v2761 = vand.u32 %v2093, 4294901760
    %v2762 = vsub.f32 %v2093, %v2761
    %v2763 = vand.u32 %v2762, 4294901760
    %2764 = vmatmul.mubr.f32.gmra.mrb[0].mxu0 %v2763
    %v2765 = vpop.f32.mrb[0].mxu0
    %v2766 = vadd.f32 %v2621, %v2765
    %v2767 = vpop.f32.mrb[0].mxu0
    %2768 = vdwg.mxu0
    %2769 = vmatprep.subr.mxu0 0.0
    %v2770 = vand.u32 %v2094, 4294901760
    %v2771 = vsub.f32 %v2094, %v2770
    %v2772 = vand.u32 %v2771, 4294901760
    %2773 = vmatpush1.msra.mxu0 %v2772
    %2774 = vmatprep.subr.mxu0 0.0
    %v2775 = vand.u32 %v2095, 4294901760
    %v2776 = vsub.f32 %v2095, %v2775
    %v2777 = vand.u32 %v2776, 4294901760
    %2778 = vmatpush1.msra.mxu0 %v2777
    %2779 = vmatprep.subr.mxu0 0.0
    %v2780 = vand.u32 %v2096, 4294901760
    %v2781 = vsub.f32 %v2096, %v2780
    %v2782 = vand.u32 %v2781, 4294901760
    %2783 = vmatpush1.msra.mxu0 %v2782
    %2784 = vmatprep.subr.mxu0 0.0
    %v2785 = vand.u32 %v2097, 4294901760
    %v2786 = vsub.f32 %v2097, %v2785
    %v2787 = vand.u32 %v2786, 4294901760
    %2788 = vmatpush1.msra.mxu0 %v2787
    %2789 = vmatprep.subr.mxu0 0.0
    %v2790 = vand.u32 %v2098, 4294901760
    %v2791 = vsub.f32 %v2098, %v2790
    %v2792 = vand.u32 %v2791, 4294901760
    %2793 = vmatpush1.msra.mxu0 %v2792
    %2794 = vmatprep.subr.mxu0 0.0
    %v2795 = vand.u32 %v2099, 4294901760
    %v2796 = vsub.f32 %v2099, %v2795
    %v2797 = vand.u32 %v2796, 4294901760
    %2798 = vmatpush1.msra.mxu0 %v2797
    %2799 = vmatprep.subr.mxu0 0.0
    %v2800 = vand.u32 %v2100, 4294901760
    %v2801 = vsub.f32 %v2100, %v2800
    %v2802 = vand.u32 %v2801, 4294901760
    %2803 = vmatpush1.msra.mxu0 %v2802
    %2804 = vmatprep.subr.mxu0 0.0
    %v2805 = vand.u32 %v2101, 4294901760
    %v2806 = vsub.f32 %v2101, %v2805
    %v2807 = vand.u32 %v2806, 4294901760
    %2808 = vmatpush1.msra.mxu0 %v2807
    %2809 = vmatprep.subr.mxu0 0.0
    %v2810 = vand.u32 %v2102, 4294901760
    %v2811 = vsub.f32 %v2102, %v2810
    %v2812 = vand.u32 %v2811, 4294901760
    %2813 = vmatpush1.msra.mxu0 %v2812
    %2814 = vmatprep.subr.mxu0 0.0
    %v2815 = vand.u32 %v2103, 4294901760
    %v2816 = vsub.f32 %v2103, %v2815
    %v2817 = vand.u32 %v2816, 4294901760
    %2818 = vmatpush1.msra.mxu0 %v2817
    %2819 = vmatprep.subr.mxu0 0.0
    %v2820 = vand.u32 %v2104, 4294901760
    %v2821 = vsub.f32 %v2104, %v2820
    %v2822 = vand.u32 %v2821, 4294901760
    %2823 = vmatpush1.msra.mxu0 %v2822
    %2824 = vmatprep.subr.mxu0 0.0
    %v2825 = vand.u32 %v2105, 4294901760
    %v2826 = vsub.f32 %v2105, %v2825
    %v2827 = vand.u32 %v2826, 4294901760
    %2828 = vmatpush1.msra.mxu0 %v2827
    %2829 = vmatprep.subr.mxu0 0.0
    %v2830 = vand.u32 %v2106, 4294901760
    %v2831 = vsub.f32 %v2106, %v2830
    %v2832 = vand.u32 %v2831, 4294901760
    %2833 = vmatpush1.msra.mxu0 %v2832
    %2834 = vmatprep.subr.mxu0 0.0
    %v2835 = vand.u32 %v2107, 4294901760
    %v2836 = vsub.f32 %v2107, %v2835
    %v2837 = vand.u32 %v2836, 4294901760
    %2838 = vmatpush1.msra.mxu0 %v2837
    %2839 = vmatprep.subr.mxu0 0.0
    %v2840 = vand.u32 %v2108, 4294901760
    %v2841 = vsub.f32 %v2108, %v2840
    %v2842 = vand.u32 %v2841, 4294901760
    %2843 = vmatpush1.msra.mxu0 %v2842
    %2844 = vmatprep.subr.mxu0 0.0
    %v2845 = vand.u32 %v2109, 4294901760
    %v2846 = vsub.f32 %v2109, %v2845
    %v2847 = vand.u32 %v2846, 4294901760
    %2848 = vmatpush1.msra.mxu0 %v2847
    %2849 = vmatprep.subr.mxu0 0.0
    %2850 = vmatpush1.msra.mxu0 0.0
    %2851 = vmatprep.subr.mxu0 0.0
    %2852 = vmatpush1.msra.mxu0 0.0
    %2853 = vmatprep.subr.mxu0 0.0
    %2854 = vmatpush1.msra.mxu0 0.0
    %2855 = vmatprep.subr.mxu0 0.0
    %2856 = vmatpush1.msra.mxu0 0.0
    %2857 = vmatprep.subr.mxu0 0.0
    %2858 = vmatpush1.msra.mxu0 0.0
    %2859 = vmatprep.subr.mxu0 0.0
    %2860 = vmatpush1.msra.mxu0 0.0
    %2861 = vmatprep.subr.mxu0 0.0
    %2862 = vmatpush1.msra.mxu0 0.0
    %2863 = vmatprep.subr.mxu0 0.0
    %2864 = vmatpush1.msra.mxu0 0.0
    %2865 = vmatprep.subr.mxu0 0.0
    %2866 = vmatpush1.msra.mxu0 0.0
    %2867 = vmatprep.subr.mxu0 0.0
    %2868 = vmatpush1.msra.mxu0 0.0
    %2869 = vmatprep.subr.mxu0 0.0
    %2870 = vmatpush1.msra.mxu0 0.0
    %2871 = vmatprep.subr.mxu0 0.0
    %2872 = vmatpush1.msra.mxu0 0.0
    %2873 = vmatprep.subr.mxu0 0.0
    %2874 = vmatpush1.msra.mxu0 0.0
    %2875 = vmatprep.subr.mxu0 0.0
    %2876 = vmatpush1.msra.mxu0 0.0
    %2877 = vmatprep.subr.mxu0 0.0
    %2878 = vmatpush1.msra.mxu0 0.0
    %2879 = vmatprep.subr.mxu0 0.0
    %2880 = vmatpush1.msra.mxu0 0.0
    %2881 = vmatprep.mubr.f32.mxu0 0.0
    %v2882 = vand.u32 %v2086, 4294901760
    %2883 = vmatmul.mubr.f32.gmra.mrb[0].mxu0 %v2882
    %v2884 = vpop.f32.mrb[0].mxu0
    %v2885 = vadd.f32 %v2710, %v2884
    %v2886 = vpop.f32.mrb[0].mxu0
    %2887 = vmatprep.mubr.f32.mxu0 0.0
    %v2888 = vand.u32 %v2087, 4294901760
    %2889 = vmatmul.mubr.f32.gmra.mrb[0].mxu0 %v2888
    %v2890 = vpop.f32.mrb[0].mxu0
    %v2891 = vadd.f32 %v2718, %v2890
    %v2892 = vpop.f32.mrb[0].mxu0
    %2893 = vmatprep.mubr.f32.mxu0 0.0
    %v2894 = vand.u32 %v2088, 4294901760
    %2895 = vmatmul.mubr.f32.gmra.mrb[0].mxu0 %v2894
    %v2896 = vpop.f32.mrb[0].mxu0
    %v2897 = vadd.f32 %v2726, %v2896
    %v2898 = vpop.f32.mrb[0].mxu0
    %2899 = vmatprep.mubr.f32.mxu0 0.0
    %v2900 = vand.u32 %v2089, 4294901760
    %2901 = vmatmul.mubr.f32.gmra.mrb[0].mxu0 %v2900
    %v2902 = vpop.f32.mrb[0].mxu0
    %v2903 = vadd.f32 %v2734, %v2902
    %v2904 = vpop.f32.mrb[0].mxu0
    %2905 = vmatprep.mubr.f32.mxu0 0.0
    %v2906 = vand.u32 %v2090, 4294901760
    %2907 = vmatmul.mubr.f32.gmra.mrb[0].mxu0 %v2906
    %v2908 = vpop.f32.mrb[0].mxu0
    %v2909 = vadd.f32 %v2742, %v2908
    %v2910 = vpop.f32.mrb[0].mxu0
    %2911 = vmatprep.mubr.f32.mxu0 0.0
    %v2912 = vand.u32 %v2091, 4294901760
    %2913 = vmatmul.mubr.f32.gmra.mrb[0].mxu0 %v2912
    %v2914 = vpop.f32.mrb[0].mxu0
    %v2915 = vadd.f32 %v2750, %v2914
    %v2916 = vpop.f32.mrb[0].mxu0
    %2917 = vmatprep.mubr.f32.mxu0 0.0
    %v2918 = vand.u32 %v2092, 4294901760
    %2919 = vmatmul.mubr.f32.gmra.mrb[0].mxu0 %v2918
    %v2920 = vpop.f32.mrb[0].mxu0
    %v2921 = vadd.f32 %v2758, %v2920
    %v2922 = vpop.f32.mrb[0].mxu0
    %2923 = vmatprep.mubr.f32.mxu0 0.0
    %v2924 = vand.u32 %v2093, 4294901760
    %2925 = vmatmul.mubr.f32.gmra.mrb[0].mxu0 %v2924
    %v2926 = vpop.f32.mrb[0].mxu0
    %v2927 = vadd.f32 %v2766, %v2926
    %v2928 = vpop.f32.mrb[0].mxu0
    %2929 = vdwg.mxu0
    %2930 = vmatprep.subr.mxu0 0.0
    %v2931 = vand.u32 %v2094, 4294901760
    %2932 = vmatpush1.msra.mxu0 %v2931
    %2933 = vmatprep.subr.mxu0 0.0
    %v2934 = vand.u32 %v2095, 4294901760
    %2935 = vmatpush1.msra.mxu0 %v2934
    %2936 = vmatprep.subr.mxu0 0.0
    %v2937 = vand.u32 %v2096, 4294901760
    %2938 = vmatpush1.msra.mxu0 %v2937
    %2939 = vmatprep.subr.mxu0 0.0
    %v2940 = vand.u32 %v2097, 4294901760
    %2941 = vmatpush1.msra.mxu0 %v2940
    %2942 = vmatprep.subr.mxu0 0.0
    %v2943 = vand.u32 %v2098, 4294901760
    %2944 = vmatpush1.msra.mxu0 %v2943
    %2945 = vmatprep.subr.mxu0 0.0
    %v2946 = vand.u32 %v2099, 4294901760
    %2947 = vmatpush1.msra.mxu0 %v2946
    %2948 = vmatprep.subr.mxu0 0.0
    %v2949 = vand.u32 %v2100, 4294901760
    %2950 = vmatpush1.msra.mxu0 %v2949
    %2951 = vmatprep.subr.mxu0 0.0
    %v2952 = vand.u32 %v2101, 4294901760
    %2953 = vmatpush1.msra.mxu0 %v2952
    %2954 = vmatprep.subr.mxu0 0.0
    %v2955 = vand.u32 %v2102, 4294901760
    %2956 = vmatpush1.msra.mxu0 %v2955
    %2957 = vmatprep.subr.mxu0 0.0
    %v2958 = vand.u32 %v2103, 4294901760
    %2959 = vmatpush1.msra.mxu0 %v2958
    %2960 = vmatprep.subr.mxu0 0.0
    %v2961 = vand.u32 %v2104, 4294901760
    %2962 = vmatpush1.msra.mxu0 %v2961
    %2963 = vmatprep.subr.mxu0 0.0
    %v2964 = vand.u32 %v2105, 4294901760
    %2965 = vmatpush1.msra.mxu0 %v2964
    %2966 = vmatprep.subr.mxu0 0.0
    %v2967 = vand.u32 %v2106, 4294901760
    %2968 = vmatpush1.msra.mxu0 %v2967
    %2969 = vmatprep.subr.mxu0 0.0
    %v2970 = vand.u32 %v2107, 4294901760
    %2971 = vmatpush1.msra.mxu0 %v2970
    %2972 = vmatprep.subr.mxu0 0.0
    %v2973 = vand.u32 %v2108, 4294901760
    %2974 = vmatpush1.msra.mxu0 %v2973
    %2975 = vmatprep.subr.mxu0 0.0
    %v2976 = vand.u32 %v2109, 4294901760
    %2977 = vmatpush1.msra.mxu0 %v2976
    %2978 = vmatprep.subr.mxu0 0.0
    %2979 = vmatpush1.msra.mxu0 0.0
    %2980 = vmatprep.subr.mxu0 0.0
    %2981 = vmatpush1.msra.mxu0 0.0
    %2982 = vmatprep.subr.mxu0 0.0
    %2983 = vmatpush1.msra.mxu0 0.0
    %2984 = vmatprep.subr.mxu0 0.0
    %2985 = vmatpush1.msra.mxu0 0.0
    %2986 = vmatprep.subr.mxu0 0.0
    %2987 = vmatpush1.msra.mxu0 0.0
    %2988 = vmatprep.subr.mxu0 0.0
    %2989 = vmatpush1.msra.mxu0 0.0
    %2990 = vmatprep.subr.mxu0 0.0
    %2991 = vmatpush1.msra.mxu0 0.0
    %2992 = vmatprep.subr.mxu0 0.0
    %2993 = vmatpush1.msra.mxu0 0.0
    %2994 = vmatprep.subr.mxu0 0.0
    %2995 = vmatpush1.msra.mxu0 0.0
    %2996 = vmatprep.subr.mxu0 0.0
    %2997 = vmatpush1.msra.mxu0 0.0
    %2998 = vmatprep.subr.mxu0 0.0
    %2999 = vmatpush1.msra.mxu0 0.0
    %3000 = vmatprep.subr.mxu0 0.0
    %3001 = vmatpush1.msra.mxu0 0.0
    %3002 = vmatprep.subr.mxu0 0.0
    %3003 = vmatpush1.msra.mxu0 0.0
    %3004 = vmatprep.subr.mxu0 0.0
    %3005 = vmatpush1.msra.mxu0 0.0
    %3006 = vmatprep.subr.mxu0 0.0
    %3007 = vmatpush1.msra.mxu0 0.0
    %3008 = vmatprep.subr.mxu0 0.0
    %3009 = vmatpush1.msra.mxu0 0.0
    %3010 = vmatprep.mubr.f32.mxu0 0.0
    %v3011 = vand.u32 %v2086, 4294901760
    %3012 = vmatmul.mubr.f32.gmra.mrb[0].mxu0 %v3011
    %v3013 = vpop.f32.mrb[0].mxu0
    %v3014 = vadd.f32 %v2885, %v3013
    %v3015 = vpop.f32.mrb[0].mxu0
    %3016 = vmatprep.mubr.f32.mxu0 0.0
    %v3017 = vand.u32 %v2087, 4294901760
    %3018 = vmatmul.mubr.f32.gmra.mrb[0].mxu0 %v3017
    %v3019 = vpop.f32.mrb[0].mxu0
    %v3020 = vadd.f32 %v2891, %v3019
    %v3021 = vpop.f32.mrb[0].mxu0
    %3022 = vmatprep.mubr.f32.mxu0 0.0
    %v3023 = vand.u32 %v2088, 4294901760
    %3024 = vmatmul.mubr.f32.gmra.mrb[0].mxu0 %v3023
    %v3025 = vpop.f32.mrb[0].mxu0
    %v3026 = vadd.f32 %v2897, %v3025
    %v3027 = vpop.f32.mrb[0].mxu0
    %3028 = vmatprep.mubr.f32.mxu0 0.0
    %v3029 = vand.u32 %v2089, 4294901760
    %3030 = vmatmul.mubr.f32.gmra.mrb[0].mxu0 %v3029
    %v3031 = vpop.f32.mrb[0].mxu0
    %v3032 = vadd.f32 %v2903, %v3031
    %v3033 = vpop.f32.mrb[0].mxu0
    %3034 = vmatprep.mubr.f32.mxu0 0.0
    %v3035 = vand.u32 %v2090, 4294901760
    %3036 = vmatmul.mubr.f32.gmra.mrb[0].mxu0 %v3035
    %v3037 = vpop.f32.mrb[0].mxu0
    %v3038 = vadd.f32 %v2909, %v3037
    %v3039 = vpop.f32.mrb[0].mxu0
    %3040 = vmatprep.mubr.f32.mxu0 0.0
    %v3041 = vand.u32 %v2091, 4294901760
    %3042 = vmatmul.mubr.f32.gmra.mrb[0].mxu0 %v3041
    %v3043 = vpop.f32.mrb[0].mxu0
    %v3044 = vadd.f32 %v2915, %v3043
    %v3045 = vpop.f32.mrb[0].mxu0
    %3046 = vmatprep.mubr.f32.mxu0 0.0
    %v3047 = vand.u32 %v2092, 4294901760
    %3048 = vmatmul.mubr.f32.gmra.mrb[0].mxu0 %v3047
    %v3049 = vpop.f32.mrb[0].mxu0
    %v3050 = vadd.f32 %v2921, %v3049
    %v3051 = vpop.f32.mrb[0].mxu0
    %3052 = vmatprep.mubr.f32.mxu0 0.0
    %v3053 = vand.u32 %v2093, 4294901760
    %3054 = vmatmul.mubr.f32.gmra.mrb[0].mxu0 %v3053
    %v3055 = vpop.f32.mrb[0].mxu0
    %v3056 = vadd.f32 %v2927, %v3055
    %v3057 = vpop.f32.mrb[0].mxu0
    %3058 = vdwg.mxu0
    %3059 = vmax.xlane.f32.xlu0 %v3014
    %v3060 = vpop.xlane.xlu0 %3059
    %3061 = vmax.xlane.f32.xlu0 %v3020
    %v3062 = vpop.xlane.xlu0 %3061
    %3063 = vmax.xlane.f32.xlu0 %v3026
    %v3064 = vpop.xlane.xlu0 %3063
    %3065 = vmax.xlane.f32.xlu0 %v3032
    %v3066 = vpop.xlane.xlu0 %3065
    %3067 = vmax.xlane.f32.xlu0 %v3038
    %v3068 = vpop.xlane.xlu0 %3067
    %3069 = vmax.xlane.f32.xlu0 %v3044
    %v3070 = vpop.xlane.xlu0 %3069
    %3071 = vmax.xlane.f32.xlu0 %v3050
    %v3072 = vpop.xlane.xlu0 %3071
    %3073 = vmax.xlane.f32.xlu0 %v3056
    %v3074 = vpop.xlane.xlu0 %3073
    %v3075 = vsub.f32 %v3014, %v3060
    %v3076 = vsub.f32 %v3020, %v3062
    %v3077 = vsub.f32 %v3026, %v3064
    %v3078 = vsub.f32 %v3032, %v3066
    %v3079 = vsub.f32 %v3038, %v3068
    %v3080 = vsub.f32 %v3044, %v3070
    %v3081 = vsub.f32 %v3050, %v3072
    %v3082 = vsub.f32 %v3056, %v3074
    %v3083 = vmul.f32 %v3075, 1.442695
    %v3084 = vpow.pop %v3083
    %v3085 = vmul.f32 %v3076, 1.442695
    %v3086 = vpow.pop %v3085
    %v3087 = vmul.f32 %v3077, 1.442695
    %v3088 = vpow.pop %v3087
    %v3089 = vmul.f32 %v3078, 1.442695
    %v3090 = vpow.pop %v3089
    %v3091 = vmul.f32 %v3079, 1.442695
    %v3092 = vpow.pop %v3091
    %v3093 = vmul.f32 %v3080, 1.442695
    %v3094 = vpow.pop %v3093
    %v3095 = vmul.f32 %v3081, 1.442695
    %v3096 = vpow.pop %v3095
    %v3097 = vmul.f32 %v3082, 1.442695
    %v3098 = vpow.pop %v3097
    %3099 = vadd.xlane.f32.xlu0 %v3084
    %v3100 = vpop.xlane.xlu0 %3099
    %3101 = vadd.xlane.f32.xlu0 %v3086
    %v3102 = vpop.xlane.xlu0 %3101
    %3103 = vadd.xlane.f32.xlu0 %v3088
    %v3104 = vpop.xlane.xlu0 %3103
    %3105 = vadd.xlane.f32.xlu0 %v3090
    %v3106 = vpop.xlane.xlu0 %3105
    %3107 = vadd.xlane.f32.xlu0 %v3092
    %v3108 = vpop.xlane.xlu0 %3107
    %3109 = vadd.xlane.f32.xlu0 %v3094
    %v3110 = vpop.xlane.xlu0 %3109
    %3111 = vadd.xlane.f32.xlu0 %v3096
    %v3112 = vpop.xlane.xlu0 %3111
    %3113 = vadd.xlane.f32.xlu0 %v3098
    %v3114 = vpop.xlane.xlu0 %3113
    %v3115 = vlog2.pop %v3100
    %v3116 = vmul.f32 %v3115, 0.6931472
    %v3117 = vlog2.pop %v3102
    %v3118 = vmul.f32 %v3117, 0.6931472
    %v3119 = vlog2.pop %v3104
    %v3120 = vmul.f32 %v3119, 0.6931472
    %v3121 = vlog2.pop %v3106
    %v3122 = vmul.f32 %v3121, 0.6931472
    %v3123 = vlog2.pop %v3108
    %v3124 = vmul.f32 %v3123, 0.6931472
    %v3125 = vlog2.pop %v3110
    %v3126 = vmul.f32 %v3125, 0.6931472
    %v3127 = vlog2.pop %v3112
    %v3128 = vmul.f32 %v3127, 0.6931472
    %v3129 = vlog2.pop %v3114
    %v3130 = vmul.f32 %v3129, 0.6931472
    %v3131 = vsub.f32 %v3075, %v3116
    %v3132 = vsub.f32 %v3076, %v3118
    %v3133 = vsub.f32 %v3077, %v3120
    %v3134 = vsub.f32 %v3078, %v3122
    %v3135 = vsub.f32 %v3079, %v3124
    %v3136 = vsub.f32 %v3080, %v3126
    %v3137 = vsub.f32 %v3081, %v3128
    %v3138 = vsub.f32 %v3082, %v3130
    %3139 = vst [vmem:[#allocation7] sm:$0xff] %v3131
    %3140 = vst [vmem:[#allocation7 + $0x8] sm:$0xff] %v3132
    %3141 = vst [vmem:[#allocation7 + $0x10] sm:$0xff] %v3133
    %3142 = vst [vmem:[#allocation7 + $0x18] sm:$0xff] %v3134
    %3143 = vst [vmem:[#allocation7 + $0x20] sm:$0xff] %v3135
    %3144 = vst [vmem:[#allocation7 + $0x28] sm:$0xff] %v3136
    %3145 = vst [vmem:[#allocation7 + $0x30] sm:$0xff] %v3137
    %3146 = vst [vmem:[#allocation7 + $0x38] sm:$0xff] %v3138
    // Predicated region
    $region30: #{tpu_custom_call.1} parent=1 // pred_check
      _
    $region31: #{tpu_custom_call.1} parent=1 // pred_check_branch
      %3148 = sbr.rel (0) target = $region33
    $region32: #{tpu_custom_call.1} parent=1 // pred_region
      %s3150 = ssub.s32 1024, 1024
      %3151 = vsyncadd [#allocation4], %s3150
      %s3152 = sshll.u32 [#allocation7], 4
      %s3153 = int_to_ptr.vmem [resolvable:$true] %s3152
      %3158 = dma.vmem_to_hbm [thread:$0]  %s3153, 1024, %s5, [#allocation4], 128, 128, 8
    $region33: #{tpu_custom_call.1} parent=1 // pred_fallthru
      _
    // Predicated region
    $region34: #{tpu_custom_call.1} parent=1 // pred_check
      _
    $region35: #{tpu_custom_call.1} parent=1 // pred_check_branch
      %3160 = sbr.rel (0) target = $region37
    $region36: #{tpu_custom_call.1} parent=1 // pred_region
      %3161 = dma.done [#allocation4], 1024
    $region37: #{tpu_custom_call.1} parent=1 // pred_fallthru
      _
    %3162 = vsyncpa [#allocation3], 1
    %3163 = vsyncpa [#allocation6], 1
    %3164 = vsyncpa [#allocation4], 1

</llo_original>
